<compile_context>
chip_gen: v6e
topology: v6e:2x2x1
jax: 0.10.0
libtpu: 0.0.40
codegen_flags: <defaults>
</compile_context>

<pallas_src>
import numpy as np
from functools import partial

import jax
import jax.numpy as jnp
from jax.experimental import pallas as pl
from jax.experimental.pallas import tpu as pltpu

N_NODES = 81          # sudoku cells
C_IN    = 10          # input features per cell
H1, H2  = 32, 64
C_OUT   = 10
NPAD    = 88          # node dim padded to a sublane multiple (8)
CPAD    = 128         # channel dim padded to lane width
NB      = 4           # puzzles per grid step
NEG_BIG = -1e30       # "minus infinity" for padded output channels


# ----------------------------------------------------------------------------
# Pallas kernel: full forward for NB puzzles per grid step.
#   adj_ref : (NPAD, NPAD)        normalized adjacency   (VMEM resident)
#   w_ref   : (3, CPAD, CPAD)     packed W1/W2/W3        (VMEM resident)
#   b_ref   : (8, CPAD)           rows 0/1/2 = b1/b2/b3  (b3 pad cols = -1e30)
#   x_ref   : (NB*NPAD, CPAD)     node-flattened puzzle features for this step
#   out_ref : (NB*NPAD, CPAD)     log-probs (valid region per puzzle [:81,:10])
#   h_ref   : (NB*NPAD, CPAD) f32 scratch for intermediates
# ----------------------------------------------------------------------------
def gcn_forward_kernel(adj_ref, w_ref, b_ref, x_ref, out_ref, h_ref, *, nb):
    adj = adj_ref[...]
    b1 = b_ref[0:1, :]
    b2 = b_ref[1:2, :]
    b3 = b_ref[2:3, :]

    def propagate(hw, bias, relu):
        # Adjacency propagation is block-diagonal over the batch -> per puzzle.
        for i in range(nb):
            blk = hw[i * NPAD:(i + 1) * NPAD, :]
            h = jnp.dot(adj, blk, preferred_element_type=jnp.float32) + bias
            if relu:
                h = jnp.maximum(h, 0.0)
            h_ref[i * NPAD:(i + 1) * NPAD, :] = h

    # layer 1: relu( Â (X W1) + b1 )  -- X W1 batched over all NB puzzles
    propagate(jnp.dot(x_ref[...], w_ref[0], preferred_element_type=jnp.float32),
              b1, relu=True)
    # layer 2: relu( Â (H W2) + b2 )
    propagate(jnp.dot(h_ref[...], w_ref[1], preferred_element_type=jnp.float32),
              b2, relu=True)
    # layer 3: Â (H W3) + b3   (padded channels of b3 are -1e30)
    propagate(jnp.dot(h_ref[...], w_ref[2], preferred_element_type=jnp.float32),
              b3, relu=False)

    # log_softmax over channels for all NB puzzles at once; padded channels are
    # ~-1e30 so exp() underflows to 0 and they drop out of the max/sum.
    h3 = h_ref[...]
    m = jnp.max(h3, axis=1, keepdims=True)
    lse = jnp.log(jnp.sum(jnp.exp(h3 - m), axis=1, keepdims=True)) + m
    out_ref[...] = h3 - lse


# ----------------------------------------------------------------------------
# One-time setup: sudoku constraint graph, normalized adjacency, padded consts
# ----------------------------------------------------------------------------
def build_sudoku_edge_index_np():
    src, dst = [], []
    for i in range(N_NODES):
        ri, ci = divmod(i, 9)
        for j in range(N_NODES):
            if i == j:
                continue
            rj, cj = divmod(j, 9)
            same_box = (ri // 3 == rj // 3) and (ci // 3 == cj // 3)
            if ri == rj or ci == cj or same_box:
                src.append(i)
                dst.append(j)
    return np.stack([src, dst]).astype(np.int32)          # [2, 1620]


def normalized_adjacency_np(edge_index):
    a = np.zeros((N_NODES, N_NODES), np.float32)
    a[edge_index[0], edge_index[1]] = 1.0
    a = a + np.eye(N_NODES, dtype=np.float32)              # self-loops
    dinv = 1.0 / np.sqrt(a.sum(axis=1))
    return (dinv[:, None] * a * dinv[None, :]).astype(np.float32)


def prepare_padded_constants(params, adj_hat_np):
    """Pad Â and pack weights/biases once; returns device constants."""
    adj_p = np.zeros((NPAD, NPAD), np.float32)
    adj_p[:N_NODES, :N_NODES] = adj_hat_np

    w_p = np.zeros((3, CPAD, CPAD), np.float32)
    w_p[0, :C_IN, :H1]   = np.asarray(params["w1"])
    w_p[1, :H1,  :H2]    = np.asarray(params["w2"])
    w_p[2, :H2,  :C_OUT] = np.asarray(params["w3"])

    b_p = np.zeros((8, CPAD), np.float32)
    b_p[0, :H1] = np.asarray(params["b1"])
    b_p[1, :H2] = np.asarray(params["b2"])
    b_p[2, :] = NEG_BIG                                     # mask pad channels
    b_p[2, :C_OUT] = np.asarray(params["b3"])

    return jnp.asarray(adj_p), jnp.asarray(w_p), jnp.asarray(b_p)


# ----------------------------------------------------------------------------
# Batched forward: one pallas_call, grid over groups of NB puzzles
# ----------------------------------------------------------------------------
def sudoku_gcn_forward(x_batch, adj_p, w_p, b_p, *, nb=NB):
    """x_batch: [B, 81, 10] float32  ->  log-probs [B, 81, 10]."""
    B = x_batch.shape[0]
    Bp = ((B + nb - 1) // nb) * nb                          # pad batch to NB

    x_p = jnp.zeros((Bp, NPAD, CPAD), jnp.float32)
    x_p = x_p.at[:B, :N_NODES, :C_IN].set(x_batch.astype(jnp.float32))
    x_flat = x_p.reshape(Bp * NPAD, CPAD)                   # node-flattened

    out_flat = pl.pallas_call(
        partial(gcn_forward_kernel, nb=nb),
        out_shape=jax.ShapeDtypeStruct((Bp * NPAD, CPAD), jnp.float32),
        grid=(Bp // nb,),
        in_specs=[
            pl.BlockSpec((NPAD, NPAD), lambda g: (0, 0)),          # Â (resident)
            pl.BlockSpec((3, CPAD, CPAD), lambda g: (0, 0, 0)),    # W (resident)
            pl.BlockSpec((8, CPAD), lambda g: (0, 0)),             # b (resident)
            pl.BlockSpec((nb * NPAD, CPAD), lambda g: (g, 0)),     # x (per step)
        ],
        out_specs=pl.BlockSpec((nb * NPAD, CPAD), lambda g: (g, 0)),
        scratch_shapes=[pltpu.VMEM((nb * NPAD, CPAD), jnp.float32)],
        compiler_params=pltpu.CompilerParams(
            dimension_semantics=("parallel",)),                    # megacore on v7x
    )(adj_p, w_p, b_p, x_flat)

    out = out_flat.reshape(Bp, NPAD, CPAD)
    return out[:B, :N_NODES, :C_OUT]


# ----------------------------------------------------------------------------
# Params + pure-JAX reference
# ----------------------------------------------------------------------------
def glorot(key, fan_in, fan_out):
    limit = float(np.sqrt(6.0 / (fan_in + fan_out)))
    return jax.random.uniform(key, (fan_in, fan_out), jnp.float32,
                              minval=-limit, maxval=limit)


def init_params(key):
    k1, k2, k3 = jax.random.split(key, 3)
    return {
        "w1": glorot(k1, C_IN, H1),  "b1": jnp.zeros((H1,), jnp.float32),
        "w2": glorot(k2, H1, H2),    "b2": jnp.zeros((H2,), jnp.float32),
        "w3": glorot(k3, H2, C_OUT), "b3": jnp.zeros((C_OUT,), jnp.float32),
    }


def reference_forward(x_batch, adj_hat, params):
    """Pure-JAX reference of GCNConv x3 + relu + log_softmax (batched)."""
    def prop(h, w, b):
        return jnp.einsum("ij,bjk->bik", adj_hat, h @ w) + b
    h = jnp.maximum(prop(x_batch, params["w1"], params["b1"]), 0.0)
    h = jnp.maximum(prop(h, params["w2"], params["b2"]), 0.0)
    h = prop(h, params["w3"], params["b3"])
    return jax.nn.log_softmax(h, axis=-1)


if __name__ == "__main__":
    key = jax.random.PRNGKey(0)
    kx, kp = jax.random.split(key)

    B = 8                                               # batch of puzzles
    x = jax.random.normal(kx, (B, N_NODES, C_IN), jnp.float32)
    params = init_params(kp)

    # one-time precompute (static graph + padded/packed params)
    edge_index = build_sudoku_edge_index_np()           # [2, 1620]
    adj_hat_np = normalized_adjacency_np(edge_index)
    adj_p, w_p, b_p = prepare_padded_constants(params, adj_hat_np)

    out = sudoku_gcn_forward(x, adj_p, w_p, b_p)
    out = jax.block_until_ready(out)

    ref = reference_forward(x, jnp.asarray(adj_hat_np), params)
    np.testing.assert_allclose(np.asarray(out), np.asarray(ref),
                               rtol=1e-4, atol=1e-4)

    print("KERNEL_OK")
</pallas_src>

<mosaic_0001>
module attributes {stable_mosaic.version = 11 : i64} {
  func.func @gcn_forward_kernel(%arg0: i32, %arg1: memref<88x88xf32, #tpu.memory_space<vmem>>, %arg2: memref<3x128x128xf32, #tpu.memory_space<vmem>>, %arg3: memref<8x128xf32, #tpu.memory_space<vmem>>, %arg4: memref<352x128xf32, #tpu.memory_space<vmem>>, %arg5: memref<352x128xf32, #tpu.memory_space<vmem>>, %arg6: memref<352x128xf32, #tpu.memory_space<vmem>>) attributes {dimension_semantics = [#tpu.dimension_semantics<parallel>], iteration_bounds = array<i64: 2>, scalar_prefetch = 0 : i64, scratch_operands = 1 : i64, tpu.core_type = #tpu.core_type<tc>, window_params = [{pipeline_mode = #tpu.pipeline_mode<synchronous>, transform_indices = @transform_0, window_bounds = array<i64: 88, 88>}, {pipeline_mode = #tpu.pipeline_mode<synchronous>, transform_indices = @transform_1, window_bounds = array<i64: 3, 128, 128>}, {pipeline_mode = #tpu.pipeline_mode<synchronous>, transform_indices = @transform_2, window_bounds = array<i64: 8, 128>}, {transform_indices = @transform_3, window_bounds = array<i64: 352, 128>}, {transform_indices = @transform_4, window_bounds = array<i64: 352, 128>}]} {
    %c0 = arith.constant 0 : index
    %c0_0 = arith.constant 0 : index
    %0 = vector.load %arg1[%c0, %c0_0] : memref<88x88xf32, #tpu.memory_space<vmem>>, vector<88x88xf32>
    %c0_1 = arith.constant 0 : index
    %c0_2 = arith.constant 0 : index
    %1 = vector.load %arg3[%c0_1, %c0_2] : memref<8x128xf32, #tpu.memory_space<vmem>>, vector<1x128xf32>
    %c1 = arith.constant 1 : index
    %c0_3 = arith.constant 0 : index
    %2 = vector.load %arg3[%c1, %c0_3] : memref<8x128xf32, #tpu.memory_space<vmem>>, vector<1x128xf32>
    %c2 = arith.constant 2 : index
    %c0_4 = arith.constant 0 : index
    %3 = vector.load %arg3[%c2, %c0_4] : memref<8x128xf32, #tpu.memory_space<vmem>>, vector<1x128xf32>
    %c0_5 = arith.constant 0 : index
    %c0_6 = arith.constant 0 : index
    %4 = vector.load %arg4[%c0_5, %c0_6] : memref<352x128xf32, #tpu.memory_space<vmem>>, vector<352x128xf32>
    %c0_7 = arith.constant 0 : index
    %c0_8 = arith.constant 0 : index
    %c0_9 = arith.constant 0 : index
    %5 = vector.load %arg2[%c0_7, %c0_8, %c0_9] : memref<3x128x128xf32, #tpu.memory_space<vmem>>, vector<1x128x128xf32>
    %6 = vector.shape_cast %5 : vector<1x128x128xf32> to vector<128x128xf32>
    %cst = arith.constant dense<0.000000e+00> : vector<352x128xf32>
    %7 = tpu.matmul %4, %6, %cst {dimension_numbers = #tpu.dot_dimension_numbers<[1], [0], [0], [1], [0, 0, 1, 1], [], []>} : vector<352x128xf32>, vector<128x128xf32>, vector<352x128xf32> -> vector<352x128xf32>
    %8 = vector.extract_strided_slice %7 {offsets = [0, 0], sizes = [88, 128], strides = [1, 1]} : vector<352x128xf32> to vector<88x128xf32>
    %cst_10 = arith.constant dense<0.000000e+00> : vector<88x128xf32>
    %9 = tpu.matmul %0, %8, %cst_10 {dimension_numbers = #tpu.dot_dimension_numbers<[1], [0], [0], [1], [0, 0, 1, 1], [], []>} : vector<88x88xf32>, vector<88x128xf32>, vector<88x128xf32> -> vector<88x128xf32>
    %10 = vector.broadcast %1 : vector<1x128xf32> to vector<88x128xf32>
    %11 = arith.addf %9, %10 : vector<88x128xf32>
    %cst_11 = arith.constant 0.000000e+00 : f32
    %12 = vector.broadcast %cst_11 : f32 to vector<88x128xf32>
    %13 = arith.maximumf %11, %12 : vector<88x128xf32>
    %c0_12 = arith.constant 0 : index
    %c0_13 = arith.constant 0 : index
    %14 = vector.load %arg6[%c0_12, %c0_13] : memref<352x128xf32, #tpu.memory_space<vmem>>, vector<88x128xf32>
    tpu.vector_store %arg6[%c0_12, %c0_13], %13 {strides = array<i32>} : memref<352x128xf32, #tpu.memory_space<vmem>>, vector<88x128xf32>,
    %15 = vector.extract_strided_slice %7 {offsets = [88, 0], sizes = [88, 128], strides = [1, 1]} : vector<352x128xf32> to vector<88x128xf32>
    %cst_14 = arith.constant dense<0.000000e+00> : vector<88x128xf32>
    %16 = tpu.matmul %0, %15, %cst_14 {dimension_numbers = #tpu.dot_dimension_numbers<[1], [0], [0], [1], [0, 0, 1, 1], [], []>} : vector<88x88xf32>, vector<88x128xf32>, vector<88x128xf32> -> vector<88x128xf32>
    %17 = vector.broadcast %1 : vector<1x128xf32> to vector<88x128xf32>
    %18 = arith.addf %16, %17 : vector<88x128xf32>
    %cst_15 = arith.constant 0.000000e+00 : f32
    %19 = vector.broadcast %cst_15 : f32 to vector<88x128xf32>
    %20 = arith.maximumf %18, %19 : vector<88x128xf32>
    %c88 = arith.constant 88 : index
    %c0_16 = arith.constant 0 : index
    %21 = vector.load %arg6[%c88, %c0_16] : memref<352x128xf32, #tpu.memory_space<vmem>>, vector<88x128xf32>
    tpu.vector_store %arg6[%c88, %c0_16], %20 {strides = array<i32>} : memref<352x128xf32, #tpu.memory_space<vmem>>, vector<88x128xf32>,
    %22 = vector.extract_strided_slice %7 {offsets = [176, 0], sizes = [88, 128], strides = [1, 1]} : vector<352x128xf32> to vector<88x128xf32>
    %cst_17 = arith.constant dense<0.000000e+00> : vector<88x128xf32>
    %23 = tpu.matmul %0, %22, %cst_17 {dimension_numbers = #tpu.dot_dimension_numbers<[1], [0], [0], [1], [0, 0, 1, 1], [], []>} : vector<88x88xf32>, vector<88x128xf32>, vector<88x128xf32> -> vector<88x128xf32>
    %24 = vector.broadcast %1 : vector<1x128xf32> to vector<88x128xf32>
    %25 = arith.addf %23, %24 : vector<88x128xf32>
    %cst_18 = arith.constant 0.000000e+00 : f32
    %26 = vector.broadcast %cst_18 : f32 to vector<88x128xf32>
    %27 = arith.maximumf %25, %26 : vector<88x128xf32>
    %c176 = arith.constant 176 : index
    %c0_19 = arith.constant 0 : index
    %28 = vector.load %arg6[%c176, %c0_19] : memref<352x128xf32, #tpu.memory_space<vmem>>, vector<88x128xf32>
    tpu.vector_store %arg6[%c176, %c0_19], %27 {strides = array<i32>} : memref<352x128xf32, #tpu.memory_space<vmem>>, vector<88x128xf32>,
    %29 = vector.extract_strided_slice %7 {offsets = [264, 0], sizes = [88, 128], strides = [1, 1]} : vector<352x128xf32> to vector<88x128xf32>
    %cst_20 = arith.constant dense<0.000000e+00> : vector<88x128xf32>
    %30 = tpu.matmul %0, %29, %cst_20 {dimension_numbers = #tpu.dot_dimension_numbers<[1], [0], [0], [1], [0, 0, 1, 1], [], []>} : vector<88x88xf32>, vector<88x128xf32>, vector<88x128xf32> -> vector<88x128xf32>
    %31 = vector.broadcast %1 : vector<1x128xf32> to vector<88x128xf32>
    %32 = arith.addf %30, %31 : vector<88x128xf32>
    %cst_21 = arith.constant 0.000000e+00 : f32
    %33 = vector.broadcast %cst_21 : f32 to vector<88x128xf32>
    %34 = arith.maximumf %32, %33 : vector<88x128xf32>
    %c264 = arith.constant 264 : index
    %c0_22 = arith.constant 0 : index
    %35 = vector.load %arg6[%c264, %c0_22] : memref<352x128xf32, #tpu.memory_space<vmem>>, vector<88x128xf32>
    tpu.vector_store %arg6[%c264, %c0_22], %34 {strides = array<i32>} : memref<352x128xf32, #tpu.memory_space<vmem>>, vector<88x128xf32>,
    %c0_23 = arith.constant 0 : index
    %c0_24 = arith.constant 0 : index
    %36 = vector.load %arg6[%c0_23, %c0_24] : memref<352x128xf32, #tpu.memory_space<vmem>>, vector<352x128xf32>
    %c1_25 = arith.constant 1 : index
    %c0_26 = arith.constant 0 : index
    %c0_27 = arith.constant 0 : index
    %37 = vector.load %arg2[%c1_25, %c0_26, %c0_27] : memref<3x128x128xf32, #tpu.memory_space<vmem>>, vector<1x128x128xf32>
    %38 = vector.shape_cast %37 : vector<1x128x128xf32> to vector<128x128xf32>
    %cst_28 = arith.constant dense<0.000000e+00> : vector<352x128xf32>
    %39 = tpu.matmul %36, %38, %cst_28 {dimension_numbers = #tpu.dot_dimension_numbers<[1], [0], [0], [1], [0, 0, 1, 1], [], []>} : vector<352x128xf32>, vector<128x128xf32>, vector<352x128xf32> -> vector<352x128xf32>
    %40 = vector.extract_strided_slice %39 {offsets = [0, 0], sizes = [88, 128], strides = [1, 1]} : vector<352x128xf32> to vector<88x128xf32>
    %cst_29 = arith.constant dense<0.000000e+00> : vector<88x128xf32>
    %41 = tpu.matmul %0, %40, %cst_29 {dimension_numbers = #tpu.dot_dimension_numbers<[1], [0], [0], [1], [0, 0, 1, 1], [], []>} : vector<88x88xf32>, vector<88x128xf32>, vector<88x128xf32> -> vector<88x128xf32>
    %42 = vector.broadcast %2 : vector<1x128xf32> to vector<88x128xf32>
    %43 = arith.addf %41, %42 : vector<88x128xf32>
    %cst_30 = arith.constant 0.000000e+00 : f32
    %44 = vector.broadcast %cst_30 : f32 to vector<88x128xf32>
    %45 = arith.maximumf %43, %44 : vector<88x128xf32>
    %c0_31 = arith.constant 0 : index
    %c0_32 = arith.constant 0 : index
    %46 = vector.load %arg6[%c0_31, %c0_32] : memref<352x128xf32, #tpu.memory_space<vmem>>, vector<88x128xf32>
    tpu.vector_store %arg6[%c0_31, %c0_32], %45 {strides = array<i32>} : memref<352x128xf32, #tpu.memory_space<vmem>>, vector<88x128xf32>,
    %47 = vector.extract_strided_slice %39 {offsets = [88, 0], sizes = [88, 128], strides = [1, 1]} : vector<352x128xf32> to vector<88x128xf32>
    %cst_33 = arith.constant dense<0.000000e+00> : vector<88x128xf32>
    %48 = tpu.matmul %0, %47, %cst_33 {dimension_numbers = #tpu.dot_dimension_numbers<[1], [0], [0], [1], [0, 0, 1, 1], [], []>} : vector<88x88xf32>, vector<88x128xf32>, vector<88x128xf32> -> vector<88x128xf32>
    %49 = vector.broadcast %2 : vector<1x128xf32> to vector<88x128xf32>
    %50 = arith.addf %48, %49 : vector<88x128xf32>
    %cst_34 = arith.constant 0.000000e+00 : f32
    %51 = vector.broadcast %cst_34 : f32 to vector<88x128xf32>
    %52 = arith.maximumf %50, %51 : vector<88x128xf32>
    %c88_35 = arith.constant 88 : index
    %c0_36 = arith.constant 0 : index
    %53 = vector.load %arg6[%c88_35, %c0_36] : memref<352x128xf32, #tpu.memory_space<vmem>>, vector<88x128xf32>
    tpu.vector_store %arg6[%c88_35, %c0_36], %52 {strides = array<i32>} : memref<352x128xf32, #tpu.memory_space<vmem>>, vector<88x128xf32>,
    %54 = vector.extract_strided_slice %39 {offsets = [176, 0], sizes = [88, 128], strides = [1, 1]} : vector<352x128xf32> to vector<88x128xf32>
    %cst_37 = arith.constant dense<0.000000e+00> : vector<88x128xf32>
    %55 = tpu.matmul %0, %54, %cst_37 {dimension_numbers = #tpu.dot_dimension_numbers<[1], [0], [0], [1], [0, 0, 1, 1], [], []>} : vector<88x88xf32>, vector<88x128xf32>, vector<88x128xf32> -> vector<88x128xf32>
    %56 = vector.broadcast %2 : vector<1x128xf32> to vector<88x128xf32>
    %57 = arith.addf %55, %56 : vector<88x128xf32>
    %cst_38 = arith.constant 0.000000e+00 : f32
    %58 = vector.broadcast %cst_38 : f32 to vector<88x128xf32>
    %59 = arith.maximumf %57, %58 : vector<88x128xf32>
    %c176_39 = arith.constant 176 : index
    %c0_40 = arith.constant 0 : index
    %60 = vector.load %arg6[%c176_39, %c0_40] : memref<352x128xf32, #tpu.memory_space<vmem>>, vector<88x128xf32>
    tpu.vector_store %arg6[%c176_39, %c0_40], %59 {strides = array<i32>} : memref<352x128xf32, #tpu.memory_space<vmem>>, vector<88x128xf32>,
    %61 = vector.extract_strided_slice %39 {offsets = [264, 0], sizes = [88, 128], strides = [1, 1]} : vector<352x128xf32> to vector<88x128xf32>
    %cst_41 = arith.constant dense<0.000000e+00> : vector<88x128xf32>
    %62 = tpu.matmul %0, %61, %cst_41 {dimension_numbers = #tpu.dot_dimension_numbers<[1], [0], [0], [1], [0, 0, 1, 1], [], []>} : vector<88x88xf32>, vector<88x128xf32>, vector<88x128xf32> -> vector<88x128xf32>
    %63 = vector.broadcast %2 : vector<1x128xf32> to vector<88x128xf32>
    %64 = arith.addf %62, %63 : vector<88x128xf32>
    %cst_42 = arith.constant 0.000000e+00 : f32
    %65 = vector.broadcast %cst_42 : f32 to vector<88x128xf32>
    %66 = arith.maximumf %64, %65 : vector<88x128xf32>
    %c264_43 = arith.constant 264 : index
    %c0_44 = arith.constant 0 : index
    %67 = vector.load %arg6[%c264_43, %c0_44] : memref<352x128xf32, #tpu.memory_space<vmem>>, vector<88x128xf32>
    tpu.vector_store %arg6[%c264_43, %c0_44], %66 {strides = array<i32>} : memref<352x128xf32, #tpu.memory_space<vmem>>, vector<88x128xf32>,
    %c0_45 = arith.constant 0 : index
    %c0_46 = arith.constant 0 : index
    %68 = vector.load %arg6[%c0_45, %c0_46] : memref<352x128xf32, #tpu.memory_space<vmem>>, vector<352x128xf32>
    %c2_47 = arith.constant 2 : index
    %c0_48 = arith.constant 0 : index
    %c0_49 = arith.constant 0 : index
    %69 = vector.load %arg2[%c2_47, %c0_48, %c0_49] : memref<3x128x128xf32, #tpu.memory_space<vmem>>, vector<1x128x128xf32>
    %70 = vector.shape_cast %69 : vector<1x128x128xf32> to vector<128x128xf32>
    %cst_50 = arith.constant dense<0.000000e+00> : vector<352x128xf32>
    %71 = tpu.matmul %68, %70, %cst_50 {dimension_numbers = #tpu.dot_dimension_numbers<[1], [0], [0], [1], [0, 0, 1, 1], [], []>} : vector<352x128xf32>, vector<128x128xf32>, vector<352x128xf32> -> vector<352x128xf32>
    %72 = vector.extract_strided_slice %71 {offsets = [0, 0], sizes = [88, 128], strides = [1, 1]} : vector<352x128xf32> to vector<88x128xf32>
    %cst_51 = arith.constant dense<0.000000e+00> : vector<88x128xf32>
    %73 = tpu.matmul %0, %72, %cst_51 {dimension_numbers = #tpu.dot_dimension_numbers<[1], [0], [0], [1], [0, 0, 1, 1], [], []>} : vector<88x88xf32>, vector<88x128xf32>, vector<88x128xf32> -> vector<88x128xf32>
    %74 = vector.broadcast %3 : vector<1x128xf32> to vector<88x128xf32>
    %75 = arith.addf %73, %74 : vector<88x128xf32>
    %c0_52 = arith.constant 0 : index
    %c0_53 = arith.constant 0 : index
    %76 = vector.load %arg6[%c0_52, %c0_53] : memref<352x128xf32, #tpu.memory_space<vmem>>, vector<88x128xf32>
    tpu.vector_store %arg6[%c0_52, %c0_53], %75 {strides = array<i32>} : memref<352x128xf32, #tpu.memory_space<vmem>>, vector<88x128xf32>,
    %77 = vector.extract_strided_slice %71 {offsets = [88, 0], sizes = [88, 128], strides = [1, 1]} : vector<352x128xf32> to vector<88x128xf32>
    %cst_54 = arith.constant dense<0.000000e+00> : vector<88x128xf32>
    %78 = tpu.matmul %0, %77, %cst_54 {dimension_numbers = #tpu.dot_dimension_numbers<[1], [0], [0], [1], [0, 0, 1, 1], [], []>} : vector<88x88xf32>, vector<88x128xf32>, vector<88x128xf32> -> vector<88x128xf32>
    %79 = vector.broadcast %3 : vector<1x128xf32> to vector<88x128xf32>
    %80 = arith.addf %78, %79 : vector<88x128xf32>
    %c88_55 = arith.constant 88 : index
    %c0_56 = arith.constant 0 : index
    %81 = vector.load %arg6[%c88_55, %c0_56] : memref<352x128xf32, #tpu.memory_space<vmem>>, vector<88x128xf32>
    tpu.vector_store %arg6[%c88_55, %c0_56], %80 {strides = array<i32>} : memref<352x128xf32, #tpu.memory_space<vmem>>, vector<88x128xf32>,
    %82 = vector.extract_strided_slice %71 {offsets = [176, 0], sizes = [88, 128], strides = [1, 1]} : vector<352x128xf32> to vector<88x128xf32>
    %cst_57 = arith.constant dense<0.000000e+00> : vector<88x128xf32>
    %83 = tpu.matmul %0, %82, %cst_57 {dimension_numbers = #tpu.dot_dimension_numbers<[1], [0], [0], [1], [0, 0, 1, 1], [], []>} : vector<88x88xf32>, vector<88x128xf32>, vector<88x128xf32> -> vector<88x128xf32>
    %84 = vector.broadcast %3 : vector<1x128xf32> to vector<88x128xf32>
    %85 = arith.addf %83, %84 : vector<88x128xf32>
    %c176_58 = arith.constant 176 : index
    %c0_59 = arith.constant 0 : index
    %86 = vector.load %arg6[%c176_58, %c0_59] : memref<352x128xf32, #tpu.memory_space<vmem>>, vector<88x128xf32>
    tpu.vector_store %arg6[%c176_58, %c0_59], %85 {strides = array<i32>} : memref<352x128xf32, #tpu.memory_space<vmem>>, vector<88x128xf32>,
    %87 = vector.extract_strided_slice %71 {offsets = [264, 0], sizes = [88, 128], strides = [1, 1]} : vector<352x128xf32> to vector<88x128xf32>
    %cst_60 = arith.constant dense<0.000000e+00> : vector<88x128xf32>
    %88 = tpu.matmul %0, %87, %cst_60 {dimension_numbers = #tpu.dot_dimension_numbers<[1], [0], [0], [1], [0, 0, 1, 1], [], []>} : vector<88x88xf32>, vector<88x128xf32>, vector<88x128xf32> -> vector<88x128xf32>
    %89 = vector.broadcast %3 : vector<1x128xf32> to vector<88x128xf32>
    %90 = arith.addf %88, %89 : vector<88x128xf32>
    %c264_61 = arith.constant 264 : index
    %c0_62 = arith.constant 0 : index
    %91 = vector.load %arg6[%c264_61, %c0_62] : memref<352x128xf32, #tpu.memory_space<vmem>>, vector<88x128xf32>
    tpu.vector_store %arg6[%c264_61, %c0_62], %90 {strides = array<i32>} : memref<352x128xf32, #tpu.memory_space<vmem>>, vector<88x128xf32>,
    %c0_63 = arith.constant 0 : index
    %c0_64 = arith.constant 0 : index
    %92 = vector.load %arg6[%c0_63, %c0_64] : memref<352x128xf32, #tpu.memory_space<vmem>>, vector<352x128xf32>
    %cst_65 = arith.constant dense<0xFF800000> : vector<352xf32>
    %93 = vector.multi_reduction <maximumf>, %92, %cst_65 [1] : vector<352x128xf32> to vector<352xf32>
    %94 = vector.shape_cast %93 : vector<352xf32> to vector<352x1xf32>
    %95 = vector.broadcast %94 : vector<352x1xf32> to vector<352x128xf32>
    %96 = arith.subf %92, %95 : vector<352x128xf32>
    %97 = math.exp %96 : vector<352x128xf32>
    %cst_66 = arith.constant dense<0.000000e+00> : vector<352xf32>
    %98 = vector.multi_reduction <add>, %97, %cst_66 [1] : vector<352x128xf32> to vector<352xf32>
    %99 = vector.shape_cast %98 : vector<352xf32> to vector<352x1xf32>
    %100 = math.log %99 : vector<352x1xf32>
    %101 = arith.addf %100, %94 : vector<352x1xf32>
    %102 = vector.broadcast %101 : vector<352x1xf32> to vector<352x128xf32>
    %103 = arith.subf %92, %102 : vector<352x128xf32>
    %c0_67 = arith.constant 0 : index
    %c0_68 = arith.constant 0 : index
    %104 = vector.load %arg5[%c0_67, %c0_68] : memref<352x128xf32, #tpu.memory_space<vmem>>, vector<352x128xf32>
    tpu.vector_store %arg5[%c0_67, %c0_68], %103 {strides = array<i32>} : memref<352x128xf32, #tpu.memory_space<vmem>>, vector<352x128xf32>,
    return
  }
  func.func @transform_0(%arg0: i32) -> (i32, i32) {
    %c0_i32 = arith.constant 0 : i32
    %c0_i32_0 = arith.constant 0 : i32
    %c0_i32_1 = arith.constant 0 : i32
    return %c0_i32, %c0_i32_0 : i32, i32
  }
  func.func @transform_1(%arg0: i32) -> (i32, i32, i32) {
    %c0_i32 = arith.constant 0 : i32
    %c0_i32_0 = arith.constant 0 : i32
    %c0_i32_1 = arith.constant 0 : i32
    %c0_i32_2 = arith.constant 0 : i32
    return %c0_i32, %c0_i32_0, %c0_i32_1 : i32, i32, i32
  }
  func.func @transform_2(%arg0: i32) -> (i32, i32) {
    %c0_i32 = arith.constant 0 : i32
    %c0_i32_0 = arith.constant 0 : i32
    %c0_i32_1 = arith.constant 0 : i32
    return %c0_i32, %c0_i32_0 : i32, i32
  }
  func.func @transform_3(%arg0: i32) -> (i32, i32) {
    %c0_i32 = arith.constant 0 : i32
    %c0_i32_0 = arith.constant 0 : i32
    return %arg0, %c0_i32 : i32, i32
  }
  func.func @transform_4(%arg0: i32) -> (i32, i32) {
    %c0_i32 = arith.constant 0 : i32
    %c0_i32_0 = arith.constant 0 : i32
    return %arg0, %c0_i32 : i32, i32
  }
}

</mosaic_0001>

<llo_original>
// kernel: tpu_custom_call.1
$region0: #{tpu_custom_call.1}
  #allocation0 [shape = 'u32[]', space=smem, size = 0x4, offset = 0x4, fixed_abs, tag = 'smem constant byte address 0x4 - core index']
  #allocation1 [shape = 'u32[144,128]{1,0:T(1,128)}', space=vmem, size = 0x12000, scoped, tag = 'internal scratch']
  #allocation2 [shape = 'f32[352,128]{1,0:T(8,128)}', space=vmem, size = 0x2c000, scoped, tag = 'scratch operand']
  %s0 = inlined_call_operand.hbm [shape: f32[88,88], index: 0, kind: input, shape index: {}]
  %s1 = inlined_call_operand.hbm [shape: f32[3,128,128], index: 1, kind: input, shape index: {}]
  %s2 = inlined_call_operand.hbm [shape: f32[8,128], index: 2, kind: input, shape index: {}]
  %s3 = inlined_call_operand.hbm [shape: f32[704,128], index: 3, kind: input, shape index: {}]
  %s4 = inlined_call_operand.hbm [shape: f32[704,128], index: 4, kind: output, shape index: {}]
  %s5 = sld [smem:[#allocation0]]
  $region65: #{tpu_custom_call.1} parent=0
    _
  %s7 = ssub.s32 1, %s5
  %s8 = scalar_select 0, %s7, %s5
  $region1: #{tpu_custom_call.1} parent=0
    #allocation3 [shape = 'u8[45056]{0}', space=vmem, size = 0xb000, scoped, tag = 'input window, operand 0, single buffered']
    #allocation4 [shape = 's32[2]{0}', space=sflag, size = 0x8, scoped, tag = 'scoped memory for tpu_custom_call.1']
    #allocation5 [shape = 's32[2]{0}', space=sflag, size = 0x8, scoped, tag = 'scoped memory for tpu_custom_call.1']
    #allocation6 [shape = 'u8[196608]{0}', space=vmem, size = 0x30000, scoped, tag = 'input window, operand 1, single buffered']
    #allocation7 [shape = 's32[1]{0}', space=sflag, size = 0x4, scoped, tag = 'scoped memory for tpu_custom_call.1']
    #allocation8 [shape = 'u8[4096]{0}', space=vmem, size = 0x1000, scoped, tag = 'input window, operand 2, single buffered']
    #allocation9 [shape = 'u8[360448]{0}', space=vmem, size = 0x58000, scoped, tag = 'input window, operand 3']
    #allocation10 [shape = 's32[2]{0}', space=sflag, size = 0x8, scoped, tag = 'scoped memory for tpu_custom_call.1']
    #allocation11 [shape = 'u8[360448]{0}', space=vmem, size = 0x58000, scoped, tag = 'output window, operand 0']
    %9 = vsyncpa [#allocation4], 0
    %10 = vsyncpa [#allocation7], 0
    %11 = vsyncpa [#allocation10], 0
    %s12 = scalar_lea.sflag [#allocation10], 1
    %13 = vsyncpa %s12, 0
    %14 = vsyncpa [#allocation5], 0
    %s15 = scalar_lea.sflag [#allocation5], 1
    %16 = vsyncpa %s15, 0
    loop: start=0, step=1, limit=4
    $region2: #{tpu_custom_call.1} parent=1 // loop_pre_header
      _
    $region3: #{tpu_custom_call.1} parent=1 // loop_header
      %s18 = sphi 0, %s22
      %p19 = scmp.ge.s32.totalorder %s18, 4
      %s26 = sphi 0, %s26
      %s28 = sphi 0, %s26
      %s29 = sphi 0, %s28
      %s43 = sphi 0, %s29
      %s47 = sphi 0, %s47
      %s49 = sphi 0, %s47
      %s50 = sphi 0, %s49
      %s64 = sphi 0, %s50
      %s68 = sphi 0, %s68
      %s70 = sphi 0, %s68
      %s71 = sphi 0, %s70
      %s85 = sphi 0, %s71
      %s91 = sphi 0, %s93
      %s94 = sphi 0, %s91
      %s95 = sphi 0, %s94
      %s111 = sphi 0, %s95
      %s117 = sphi 0, %s119
      %s120 = sphi 0, %s117
      %s121 = sphi 0, %s120
      %s137 = sphi 0, %s121
    $region4: #{tpu_custom_call.1} parent=1 // loop_header_branch
      %21 = sbr.rel (%p19) target = $region8
    $region5: #{tpu_custom_call.1} parent=1 // loop_body
      %s23 = ssub.s32 %s18, 1
      %s24 = ssub.s32 %s18, 2
      %s25 = sadd.s32 %s18, 1
      %s27 = sadd.s32 %s26, 1
      %p30 = scmp.eq.s32.totalorder %s18, 1
      %p31 = scmp.ne.s32.totalorder %s26, %s28
      %p32 = scmp.eq.s32.totalorder %s18, 0
      %p33 = por %p31, %p32
      %p34 = scmp.ne.s32.totalorder %s26, %s28
      %p35 = scmp.eq.s32.totalorder %s23, 1
      %p36 = por %p34, %p35
      %p37 = scmp.ne.s32.totalorder %s28, %s29
      %p38 = scmp.eq.s32.totalorder %s23, 0
      %p39 = por %p37, %p38
      %p40 = scmp.ne.s32.totalorder %s28, %s29
      %p41 = scmp.eq.s32.totalorder %s24, 1
      %p42 = por %p40, %p41
      %p44 = scmp.ne.s32.totalorder %s29, %s43
      %p45 = scmp.eq.s32.totalorder %s24, 0
      %p46 = por %p44, %p45
      %s48 = sadd.s32 %s47, 1
      %p51 = scmp.eq.s32.totalorder %s18, 1
      %p52 = scmp.ne.s32.totalorder %s47, %s49
      %p53 = scmp.eq.s32.totalorder %s18, 0
      %p54 = por %p52, %p53
      %p55 = scmp.ne.s32.totalorder %s47, %s49
      %p56 = scmp.eq.s32.totalorder %s23, 1
      %p57 = por %p55, %p56
      %p58 = scmp.ne.s32.totalorder %s49, %s50
      %p59 = scmp.eq.s32.totalorder %s23, 0
      %p60 = por %p58, %p59
      %p61 = scmp.ne.s32.totalorder %s49, %s50
      %p62 = scmp.eq.s32.totalorder %s24, 1
      %p63 = por %p61, %p62
      %p65 = scmp.ne.s32.totalorder %s50, %s64
      %p66 = scmp.eq.s32.totalorder %s24, 0
      %p67 = por %p65, %p66
      %s69 = sadd.s32 %s68, 1
      %p72 = scmp.eq.s32.totalorder %s18, 1
      %p73 = scmp.ne.s32.totalorder %s68, %s70
      %p74 = scmp.eq.s32.totalorder %s18, 0
      %p75 = por %p73, %p74
      %p76 = scmp.ne.s32.totalorder %s68, %s70
      %p77 = scmp.eq.s32.totalorder %s23, 1
      %p78 = por %p76, %p77
      %p79 = scmp.ne.s32.totalorder %s70, %s71
      %p80 = scmp.eq.s32.totalorder %s23, 0
      %p81 = por %p79, %p80
      %p82 = scmp.ne.s32.totalorder %s70, %s71
      %p83 = scmp.eq.s32.totalorder %s24, 1
      %p84 = por %p82, %p83
      %p86 = scmp.ne.s32.totalorder %s71, %s85
      %p87 = scmp.eq.s32.totalorder %s24, 0
      %p88 = por %p86, %p87
      %s89 = ssub.s32 %s18, %s25
      %p90 = scmp.eq.s32.totalorder %s89, 0
      %s92 = sadd.s32 %s91, 1
      %s93 = scalar_select %p90, %s91, %s92
      %p96 = pneg %p90
      %p97 = scmp.eq.s32.totalorder %s18, 1
      %p98 = por %p96, %p97
      %p99 = scmp.ne.s32.totalorder %s91, %s94
      %p100 = scmp.eq.s32.totalorder %s18, 0
      %p101 = por %p99, %p100
      %p102 = scmp.ne.s32.totalorder %s91, %s94
      %p103 = scmp.eq.s32.totalorder %s23, 1
      %p104 = por %p102, %p103
      %p105 = scmp.ne.s32.totalorder %s94, %s95
      %p106 = scmp.eq.s32.totalorder %s23, 0
      %p107 = por %p105, %p106
      %p108 = scmp.ne.s32.totalorder %s94, %s95
      %p109 = scmp.eq.s32.totalorder %s24, 1
      %p110 = por %p108, %p109
      %p112 = scmp.ne.s32.totalorder %s95, %s111
      %p113 = scmp.eq.s32.totalorder %s24, 0
      %p114 = por %p112, %p113
      %s115 = ssub.s32 %s18, %s25
      %p116 = scmp.eq.s32.totalorder %s115, 0
      %s118 = sadd.s32 %s117, 1
      %s119 = scalar_select %p116, %s117, %s118
      %p122 = pneg %p116
      %p123 = scmp.eq.s32.totalorder %s18, 1
      %p124 = por %p122, %p123
      %p125 = scmp.ne.s32.totalorder %s117, %s120
      %p126 = scmp.eq.s32.totalorder %s18, 0
      %p127 = por %p125, %p126
      %p128 = scmp.ne.s32.totalorder %s117, %s120
      %p129 = scmp.eq.s32.totalorder %s23, 1
      %p130 = por %p128, %p129
      %p131 = scmp.ne.s32.totalorder %s120, %s121
      %p132 = scmp.eq.s32.totalorder %s23, 0
      %p133 = por %p131, %p132
      %p134 = scmp.ne.s32.totalorder %s120, %s121
      %p135 = scmp.eq.s32.totalorder %s24, 1
      %p136 = por %p134, %p135
      %p138 = scmp.ne.s32.totalorder %s121, %s137
      %p139 = scmp.eq.s32.totalorder %s24, 0
      %p140 = por %p138, %p139
      %p141 = scmp.le.s32.totalorder 1, %s18
      %p142 = scmp.lt.s32.totalorder %s18, 3
      %p143 = pnand %p141, %p142
      %p144 = pneg %p143
      // Predicated region
      $region9: #{tpu_custom_call.1} parent=5 // pred_check
        _
      $region10: #{tpu_custom_call.1} parent=5 // pred_check_branch
        %146 = sbr.rel (%p143) target = $region12
      $region11: #{tpu_custom_call.1} parent=5 // pred_region
        %s147 = ssub.s32 %s18, 1
        // Predicated region
        $region13: #{tpu_custom_call.1} parent=11 // pred_check
          %p148 = pneg %p39
        $region14: #{tpu_custom_call.1} parent=11 // pred_check_branch
          %150 = sbr.rel (%p148) target = $region16
        $region15: #{tpu_custom_call.1} parent=11 // pred_region
          %s152 = ssub.s32 1408, 1408
          %153 = vsyncadd [#allocation4], %s152
          %s154 = sshll.u32 [#allocation3], 4
          %s155 = int_to_ptr.vmem [resolvable:$true] %s154
          %160 = dma.hbm_to_vmem [thread:$0]  %s0, 1408, %s155, [#allocation4], 128, 128, 8
        $region16: #{tpu_custom_call.1} parent=11 // pred_fallthru
          _
        // Predicated region
        $region17: #{tpu_custom_call.1} parent=11 // pred_check
          %p161 = pneg %p60
        $region18: #{tpu_custom_call.1} parent=11 // pred_check_branch
          %163 = sbr.rel (%p161) target = $region20
        $region19: #{tpu_custom_call.1} parent=11 // pred_region
          %s165 = ssub.s32 6144, 6144
          %166 = vsyncadd [#allocation7], %s165
          %s167 = sshll.u32 [#allocation6], 4
          %s168 = int_to_ptr.vmem [resolvable:$true] %s167
          %173 = dma.hbm_to_vmem [thread:$0]  %s1, 6144, %s168, [#allocation7], 128, 128, 8
        $region20: #{tpu_custom_call.1} parent=11 // pred_fallthru
          _
        // Predicated region
        $region21: #{tpu_custom_call.1} parent=11 // pred_check
          %p174 = pneg %p81
        $region22: #{tpu_custom_call.1} parent=11 // pred_check_branch
          %176 = sbr.rel (%p174) target = $region24
        $region23: #{tpu_custom_call.1} parent=11 // pred_region
          %s178 = ssub.s32 128, 128
          %179 = vsyncadd [#allocation7], %s178
          %s181 = sshll.u32 [#allocation8], 4
          %s182 = int_to_ptr.vmem [resolvable:$true] %s181
          %184 = dma.hbm_to_vmem [thread:$0]  %s2, 128, %s182, [#allocation7]
        $region24: #{tpu_custom_call.1} parent=11 // pred_fallthru
          _
      $region12: #{tpu_custom_call.1} parent=5 // pred_fallthru
        _
      %p185 = scmp.lt.s32.totalorder %s18, 2
      // Predicated region
      $region25: #{tpu_custom_call.1} parent=5 // pred_check
        %p186 = pneg %p185
      $region26: #{tpu_custom_call.1} parent=5 // pred_check_branch
        %188 = sbr.rel (%p186) target = $region28
      $region27: #{tpu_custom_call.1} parent=5 // pred_region
        // Predicated region
        $region29: #{tpu_custom_call.1} parent=27 // pred_check
          %p189 = pneg %p101
        $region30: #{tpu_custom_call.1} parent=27 // pred_check_branch
          %191 = sbr.rel (%p189) target = $region32
        $region31: #{tpu_custom_call.1} parent=27 // pred_region
          %s192 = sand.u32 %s91, 1
          %s193 = scalar_lea.sflag [#allocation10], %s192
          %s194 = sand.u32 %s91, 1
          %s195 = smul.addr %s194, 352
          %s196 = scalar_lea.vmem [#allocation9], %s195
          %s197 = smul.u32 44, %s18
          %s199 = ssub.s32 5632, 5632
          %200 = vsyncadd %s193, %s199
          %s201 = smul.addr %s197, 128
          %s202 = scalar_lea.hbm %s3, %s201
          %s203 = sshll.u32 %s196, 4
          %s204 = int_to_ptr.vmem [resolvable:$true] %s203
          %209 = dma.hbm_to_vmem [thread:$0]  %s202, 5632, %s204, %s193, 128, 128, 8
        $region32: #{tpu_custom_call.1} parent=27 // pred_fallthru
          _
      $region28: #{tpu_custom_call.1} parent=5 // pred_fallthru
        _
      %p210 = scmp.le.s32.totalorder 1, %s18
      %p211 = scmp.lt.s32.totalorder %s18, 3
      %p212 = pnand %p210, %p211
      %p213 = pneg %p212
      // Predicated region
      $region33: #{tpu_custom_call.1} parent=5 // pred_check
        _
      $region34: #{tpu_custom_call.1} parent=5 // pred_check_branch
        %215 = sbr.rel (%p212) target = $region36
      $region35: #{tpu_custom_call.1} parent=5 // pred_region
        %s216 = ssub.s32 %s18, 1
        // Predicated region
        $region37: #{tpu_custom_call.1} parent=35 // pred_check
          %p217 = pneg %p39
        $region38: #{tpu_custom_call.1} parent=35 // pred_check_branch
          %219 = sbr.rel (%p217) target = $region40
        $region39: #{tpu_custom_call.1} parent=35 // pred_region
          %220 = dma.done [#allocation4], 1408
        $region40: #{tpu_custom_call.1} parent=35 // pred_fallthru
          _
        // Predicated region
        $region41: #{tpu_custom_call.1} parent=35 // pred_check
          %p221 = pneg %p60
        $region42: #{tpu_custom_call.1} parent=35 // pred_check_branch
          %223 = sbr.rel (%p221) target = $region44
        $region43: #{tpu_custom_call.1} parent=35 // pred_region
          %224 = dma.done [#allocation7], 6144
        $region44: #{tpu_custom_call.1} parent=35 // pred_fallthru
          _
        // Predicated region
        $region45: #{tpu_custom_call.1} parent=35 // pred_check
          %p225 = pneg %p81
        $region46: #{tpu_custom_call.1} parent=35 // pred_check_branch
          %227 = sbr.rel (%p225) target = $region48
        $region47: #{tpu_custom_call.1} parent=35 // pred_region
          %228 = dma.done [#allocation7], 128
        $region48: #{tpu_custom_call.1} parent=35 // pred_fallthru
          _
        %s229 = sand.u32 %s94, 1
        %s230 = scalar_lea.sflag [#allocation10], %s229
        %s231 = sand.u32 %s94, 1
        %s232 = smul.addr %s231, 352
        %s233 = scalar_lea.vmem [#allocation9], %s232
        // Predicated region
        $region49: #{tpu_custom_call.1} parent=35 // pred_check
          %p234 = pneg %p107
        $region50: #{tpu_custom_call.1} parent=35 // pred_check_branch
          %236 = sbr.rel (%p234) target = $region52
        $region51: #{tpu_custom_call.1} parent=35 // pred_region
          %237 = dma.done %s230, 5632
        $region52: #{tpu_custom_call.1} parent=35 // pred_fallthru
          _
        %p238 = pneg %p39
        %p239 = pneg %p36
        %p240 = pneg %p60
        %p241 = pneg %p57
        %p242 = pneg %p81
        %p243 = pneg %p78
        %s244 = sand.u32 %s94, 1
        %s245 = scalar_lea.sflag [#allocation10], %s244
        %s246 = sand.u32 %s94, 1
        %s247 = smul.addr %s246, 352
        %s248 = scalar_lea.vmem [#allocation9], %s247
        %p249 = pneg %p107
        %p250 = pneg %p104
        %p251 = pneg %p133
        %p252 = pneg %p130
        %s253 = sand.u32 %s120, 1
        %s254 = scalar_lea.sflag [#allocation5], %s253
        %s255 = sand.u32 %s120, 1
        %s256 = smul.addr %s255, 352
        %s257 = scalar_lea.vmem [#allocation11], %s256
        %s258 = smul.u32 44, %s23
        %s259 = smul.u32 44, %s23
        %v260 = vld [vmem:[#allocation3] sm:$0xff]
        %v261 = vld [vmem:[#allocation3 + $0x8] sm:$0xff]
        %v262 = vld [vmem:[#allocation3 + $0x10] sm:$0xff]
        %v263 = vld [vmem:[#allocation3 + $0x18] sm:$0xff]
        %v264 = vld [vmem:[#allocation3 + $0x20] sm:$0xff]
        %v265 = vld [vmem:[#allocation3 + $0x28] sm:$0xff]
        %v266 = vld [vmem:[#allocation3 + $0x30] sm:$0xff]
        %v267 = vld [vmem:[#allocation3 + $0x38] sm:$0xff]
        %v268 = vld [vmem:[#allocation3 + $0x40] sm:$0xff]
        %v269 = vld [vmem:[#allocation3 + $0x48] sm:$0xff]
        %v270 = vld [vmem:[#allocation3 + $0x50] sm:$0xff]
        %v271 = vld [vmem:[#allocation8] sm:$0x1]
        %v272 = vld [vmem:[#allocation8 + $0x1] sm:$0x1]
        %v273 = vld [vmem:[#allocation8 + $0x2] sm:$0x1]
        %v274 = vld [vmem:[%s233] sm:$0xff]
        %v275 = vld [vmem:[%s233 + $0x8] sm:$0xff]
        %v276 = vld [vmem:[%s233 + $0x10] sm:$0xff]
        %v277 = vld [vmem:[%s233 + $0x18] sm:$0xff]
        %v278 = vld [vmem:[%s233 + $0x20] sm:$0xff]
        %v279 = vld [vmem:[%s233 + $0x28] sm:$0xff]
        %v280 = vld [vmem:[%s233 + $0x30] sm:$0xff]
        %v281 = vld [vmem:[%s233 + $0x38] sm:$0xff]
        %v282 = vld [vmem:[%s233 + $0x40] sm:$0xff]
        %v283 = vld [vmem:[%s233 + $0x48] sm:$0xff]
        %v284 = vld [vmem:[%s233 + $0x50] sm:$0xff]
        %v285 = vld [vmem:[%s233 + $0x58] sm:$0xff]
        %v286 = vld [vmem:[%s233 + $0x60] sm:$0xff]
        %v287 = vld [vmem:[%s233 + $0x68] sm:$0xff]
        %v288 = vld [vmem:[%s233 + $0x70] sm:$0xff]
        %v289 = vld [vmem:[%s233 + $0x78] sm:$0xff]
        %v290 = vld [vmem:[%s233 + $0x80] sm:$0xff]
        %v291 = vld [vmem:[%s233 + $0x88] sm:$0xff]
        %v292 = vld [vmem:[%s233 + $0x90] sm:$0xff]
        %v293 = vld [vmem:[%s233 + $0x98] sm:$0xff]
        %v294 = vld [vmem:[%s233 + $0xa0] sm:$0xff]
        %v295 = vld [vmem:[%s233 + $0xa8] sm:$0xff]
        %v296 = vld [vmem:[%s233 + $0xb0] sm:$0xff]
        %v297 = vld [vmem:[%s233 + $0xb8] sm:$0xff]
        %v298 = vld [vmem:[%s233 + $0xc0] sm:$0xff]
        %v299 = vld [vmem:[%s233 + $0xc8] sm:$0xff]
        %v300 = vld [vmem:[%s233 + $0xd0] sm:$0xff]
        %v301 = vld [vmem:[%s233 + $0xd8] sm:$0xff]
        %v302 = vld [vmem:[%s233 + $0xe0] sm:$0xff]
        %v303 = vld [vmem:[%s233 + $0xe8] sm:$0xff]
        %v304 = vld [vmem:[%s233 + $0xf0] sm:$0xff]
        %v305 = vld [vmem:[%s233 + $0xf8] sm:$0xff]
        %v306 = vld [vmem:[%s233 + $0x100] sm:$0xff]
        %v307 = vld [vmem:[%s233 + $0x108] sm:$0xff]
        %v308 = vld [vmem:[%s233 + $0x110] sm:$0xff]
        %v309 = vld [vmem:[%s233 + $0x118] sm:$0xff]
        %v310 = vld [vmem:[%s233 + $0x120] sm:$0xff]
        %v311 = vld [vmem:[%s233 + $0x128] sm:$0xff]
        %v312 = vld [vmem:[%s233 + $0x130] sm:$0xff]
        %v313 = vld [vmem:[%s233 + $0x138] sm:$0xff]
        %v314 = vld [vmem:[%s233 + $0x140] sm:$0xff]
        %v315 = vld [vmem:[%s233 + $0x148] sm:$0xff]
        %v316 = vld [vmem:[%s233 + $0x150] sm:$0xff]
        %v317 = vld [vmem:[%s233 + $0x158] sm:$0xff]
        %v318 = vld [vmem:[#allocation6] sm:$0xff]
        %v319 = vld [vmem:[#allocation6 + $0x8] sm:$0xff]
        %v320 = vld [vmem:[#allocation6 + $0x10] sm:$0xff]
        %v321 = vld [vmem:[#allocation6 + $0x18] sm:$0xff]
        %v322 = vld [vmem:[#allocation6 + $0x20] sm:$0xff]
        %v323 = vld [vmem:[#allocation6 + $0x28] sm:$0xff]
        %v324 = vld [vmem:[#allocation6 + $0x30] sm:$0xff]
        %v325 = vld [vmem:[#allocation6 + $0x38] sm:$0xff]
        %v326 = vld [vmem:[#allocation6 + $0x40] sm:$0xff]
        %v327 = vld [vmem:[#allocation6 + $0x48] sm:$0xff]
        %v328 = vld [vmem:[#allocation6 + $0x50] sm:$0xff]
        %v329 = vld [vmem:[#allocation6 + $0x58] sm:$0xff]
        %v330 = vld [vmem:[#allocation6 + $0x60] sm:$0xff]
        %v331 = vld [vmem:[#allocation6 + $0x68] sm:$0xff]
        %v332 = vld [vmem:[#allocation6 + $0x70] sm:$0xff]
        %v333 = vld [vmem:[#allocation6 + $0x78] sm:$0xff]
        %334 = vmatprep.subr.mxu0 0.0
        %335 = vmatpush1.msra.mxu0 %v333
        %336 = vmatprep.subr.mxu0 0.0
        %337 = vmatpush1.msra.mxu0 %v332
        %338 = vmatprep.subr.mxu0 0.0
        %339 = vmatpush1.msra.mxu0 %v331
        %340 = vmatprep.subr.mxu0 0.0
        %341 = vmatpush1.msra.mxu0 %v330
        %342 = vmatprep.subr.mxu0 0.0
        %343 = vmatpush1.msra.mxu0 %v329
        %344 = vmatprep.subr.mxu0 0.0
        %345 = vmatpush1.msra.mxu0 %v328
        %346 = vmatprep.subr.mxu0 0.0
        %347 = vmatpush1.msra.mxu0 %v327
        %348 = vmatprep.subr.mxu0 0.0
        %349 = vmatpush1.msra.mxu0 %v326
        %350 = vmatprep.subr.mxu0 0.0
        %351 = vmatpush1.msra.mxu0 %v325
        %352 = vmatprep.subr.mxu0 0.0
        %353 = vmatpush1.msra.mxu0 %v324
        %354 = vmatprep.subr.mxu0 0.0
        %355 = vmatpush1.msra.mxu0 %v323
        %356 = vmatprep.subr.mxu0 0.0
        %357 = vmatpush1.msra.mxu0 %v322
        %358 = vmatprep.subr.mxu0 0.0
        %359 = vmatpush1.msra.mxu0 %v321
        %360 = vmatprep.subr.mxu0 0.0
        %361 = vmatpush1.msra.mxu0 %v320
        %362 = vmatprep.subr.mxu0 0.0
        %363 = vmatpush1.msra.mxu0 %v319
        %364 = vmatprep.subr.mxu0 0.0
        %365 = vmatpush1.msra.mxu0 %v318
        %366 = vmatprep.subr.mxu0 0.0
        %367 = vmatpush2.msra.mxu0 0.0
        %368 = vmatprep.subr.mxu0 0.0
        %369 = vmatpush2.msra.mxu0 0.0
        %370 = vmatprep.subr.mxu0 0.0
        %371 = vmatpush2.msra.mxu0 0.0
        %372 = vmatprep.subr.mxu0 0.0
        %373 = vmatpush2.msra.mxu0 0.0
        %374 = vmatprep.subr.mxu0 0.0
        %375 = vmatpush2.msra.mxu0 0.0
        %376 = vmatprep.subr.mxu0 0.0
        %377 = vmatpush2.msra.mxu0 0.0
        %378 = vmatprep.subr.mxu0 0.0
        %379 = vmatpush2.msra.mxu0 0.0
        %380 = vmatprep.subr.mxu0 0.0
        %381 = vmatpush2.msra.mxu0 0.0
        %382 = vmatprep.subr.mxu0 0.0
        %383 = vmatpush2.msra.mxu0 0.0
        %384 = vmatprep.subr.mxu0 0.0
        %385 = vmatpush2.msra.mxu0 0.0
        %386 = vmatprep.subr.mxu0 0.0
        %387 = vmatpush2.msra.mxu0 0.0
        %388 = vmatprep.subr.mxu0 0.0
        %389 = vmatpush2.msra.mxu0 0.0
        %390 = vmatprep.subr.mxu0 0.0
        %391 = vmatpush2.msra.mxu0 0.0
        %392 = vmatprep.subr.mxu0 0.0
        %393 = vmatpush2.msra.mxu0 0.0
        %394 = vmatprep.subr.mxu0 0.0
        %395 = vmatpush2.msra.mxu0 0.0
        %396 = vmatprep.subr.mxu0 0.0
        %397 = vmatpush2.msra.mxu0 0.0
        %398 = vmatprep.mubr.f32.mxu0 0.0
        %399 = vmatmul.mubr.f32.gmra.mxu0 %v274
        %v400 = vpop.f32.mrf.mxu0
        %v401 = vadd.f32 0.0, %v400
        %v402 = vpop.f32.mrf.mxu0
        %403 = vmatprep.mubr.f32.mxu0 0.0
        %404 = vmatmul.mubr.f32.gmra.mxu0 %v275
        %v405 = vpop.f32.mrf.mxu0
        %v406 = vadd.f32 0.0, %v405
        %v407 = vpop.f32.mrf.mxu0
        %408 = vmatprep.mubr.f32.mxu0 0.0
        %409 = vmatmul.mubr.f32.gmra.mxu0 %v276
        %v410 = vpop.f32.mrf.mxu0
        %v411 = vadd.f32 0.0, %v410
        %v412 = vpop.f32.mrf.mxu0
        %413 = vmatprep.mubr.f32.mxu0 0.0
        %414 = vmatmul.mubr.f32.gmra.mxu0 %v277
        %v415 = vpop.f32.mrf.mxu0
        %v416 = vadd.f32 0.0, %v415
        %v417 = vpop.f32.mrf.mxu0
        %418 = vmatprep.mubr.f32.mxu0 0.0
        %419 = vmatmul.mubr.f32.gmra.mxu0 %v278
        %v420 = vpop.f32.mrf.mxu0
        %v421 = vadd.f32 0.0, %v420
        %v422 = vpop.f32.mrf.mxu0
        %423 = vmatprep.mubr.f32.mxu0 0.0
        %424 = vmatmul.mubr.f32.gmra.mxu0 %v279
        %v425 = vpop.f32.mrf.mxu0
        %v426 = vadd.f32 0.0, %v425
        %v427 = vpop.f32.mrf.mxu0
        %428 = vmatprep.mubr.f32.mxu0 0.0
        %429 = vmatmul.mubr.f32.gmra.mxu0 %v280
        %v430 = vpop.f32.mrf.mxu0
        %v431 = vadd.f32 0.0, %v430
        %v432 = vpop.f32.mrf.mxu0
        %433 = vmatprep.mubr.f32.mxu0 0.0
        %434 = vmatmul.mubr.f32.gmra.mxu0 %v281
        %v435 = vpop.f32.mrf.mxu0
        %v436 = vadd.f32 0.0, %v435
        %v437 = vpop.f32.mrf.mxu0
        %438 = vmatprep.mubr.f32.mxu0 0.0
        %439 = vmatmul.mubr.f32.gmra.mxu0 %v282
        %v440 = vpop.f32.mrf.mxu0
        %v441 = vadd.f32 0.0, %v440
        %v442 = vpop.f32.mrf.mxu0
        %443 = vmatprep.mubr.f32.mxu0 0.0
        %444 = vmatmul.mubr.f32.gmra.mxu0 %v283
        %v445 = vpop.f32.mrf.mxu0
        %v446 = vadd.f32 0.0, %v445
        %v447 = vpop.f32.mrf.mxu0
        %448 = vmatprep.mubr.f32.mxu0 0.0
        %449 = vmatmul.mubr.f32.gmra.mxu0 %v284
        %v450 = vpop.f32.mrf.mxu0
        %v451 = vadd.f32 0.0, %v450
        %v452 = vpop.f32.mrf.mxu0
        %453 = vmatprep.mubr.f32.mxu0 0.0
        %454 = vmatmul.mubr.f32.gmra.mxu0 %v285
        %v455 = vpop.f32.mrf.mxu0
        %v456 = vadd.f32 0.0, %v455
        %v457 = vpop.f32.mrf.mxu0
        %458 = vmatprep.mubr.f32.mxu0 0.0
        %459 = vmatmul.mubr.f32.gmra.mxu0 %v286
        %v460 = vpop.f32.mrf.mxu0
        %v461 = vadd.f32 0.0, %v460
        %v462 = vpop.f32.mrf.mxu0
        %463 = vmatprep.mubr.f32.mxu0 0.0
        %464 = vmatmul.mubr.f32.gmra.mxu0 %v287
        %v465 = vpop.f32.mrf.mxu0
        %v466 = vadd.f32 0.0, %v465
        %v467 = vpop.f32.mrf.mxu0
        %468 = vmatprep.mubr.f32.mxu0 0.0
        %469 = vmatmul.mubr.f32.gmra.mxu0 %v288
        %v470 = vpop.f32.mrf.mxu0
        %v471 = vadd.f32 0.0, %v470
        %v472 = vpop.f32.mrf.mxu0
        %473 = vmatprep.mubr.f32.mxu0 0.0
        %474 = vmatmul.mubr.f32.gmra.mxu0 %v289
        %v475 = vpop.f32.mrf.mxu0
        %v476 = vadd.f32 0.0, %v475
        %v477 = vpop.f32.mrf.mxu0
        %478 = vmatprep.mubr.f32.mxu0 0.0
        %479 = vmatmul.mubr.f32.gmra.mxu0 %v290
        %v480 = vpop.f32.mrf.mxu0
        %v481 = vadd.f32 0.0, %v480
        %v482 = vpop.f32.mrf.mxu0
        %483 = vmatprep.mubr.f32.mxu0 0.0
        %484 = vmatmul.mubr.f32.gmra.mxu0 %v291
        %v485 = vpop.f32.mrf.mxu0
        %v486 = vadd.f32 0.0, %v485
        %v487 = vpop.f32.mrf.mxu0
        %488 = vmatprep.mubr.f32.mxu0 0.0
        %489 = vmatmul.mubr.f32.gmra.mxu0 %v292
        %v490 = vpop.f32.mrf.mxu0
        %v491 = vadd.f32 0.0, %v490
        %v492 = vpop.f32.mrf.mxu0
        %493 = vmatprep.mubr.f32.mxu0 0.0
        %494 = vmatmul.mubr.f32.gmra.mxu0 %v293
        %v495 = vpop.f32.mrf.mxu0
        %v496 = vadd.f32 0.0, %v495
        %v497 = vpop.f32.mrf.mxu0
        %498 = vmatprep.mubr.f32.mxu0 0.0
        %499 = vmatmul.mubr.f32.gmra.mxu0 %v294
        %v500 = vpop.f32.mrf.mxu0
        %v501 = vadd.f32 0.0, %v500
        %v502 = vpop.f32.mrf.mxu0
        %503 = vmatprep.mubr.f32.mxu0 0.0
        %504 = vmatmul.mubr.f32.gmra.mxu0 %v295
        %v505 = vpop.f32.mrf.mxu0
        %v506 = vadd.f32 0.0, %v505
        %v507 = vpop.f32.mrf.mxu0
        %508 = vmatprep.mubr.f32.mxu0 0.0
        %509 = vmatmul.mubr.f32.gmra.mxu0 %v296
        %v510 = vpop.f32.mrf.mxu0
        %v511 = vadd.f32 0.0, %v510
        %v512 = vpop.f32.mrf.mxu0
        %513 = vmatprep.mubr.f32.mxu0 0.0
        %514 = vmatmul.mubr.f32.gmra.mxu0 %v297
        %v515 = vpop.f32.mrf.mxu0
        %v516 = vadd.f32 0.0, %v515
        %v517 = vpop.f32.mrf.mxu0
        %518 = vmatprep.mubr.f32.mxu0 0.0
        %519 = vmatmul.mubr.f32.gmra.mxu0 %v298
        %v520 = vpop.f32.mrf.mxu0
        %v521 = vadd.f32 0.0, %v520
        %v522 = vpop.f32.mrf.mxu0
        %523 = vmatprep.mubr.f32.mxu0 0.0
        %524 = vmatmul.mubr.f32.gmra.mxu0 %v299
        %v525 = vpop.f32.mrf.mxu0
        %v526 = vadd.f32 0.0, %v525
        %v527 = vpop.f32.mrf.mxu0
        %528 = vmatprep.mubr.f32.mxu0 0.0
        %529 = vmatmul.mubr.f32.gmra.mxu0 %v300
        %v530 = vpop.f32.mrf.mxu0
        %v531 = vadd.f32 0.0, %v530
        %v532 = vpop.f32.mrf.mxu0
        %533 = vmatprep.mubr.f32.mxu0 0.0
        %534 = vmatmul.mubr.f32.gmra.mxu0 %v301
        %v535 = vpop.f32.mrf.mxu0
        %v536 = vadd.f32 0.0, %v535
        %v537 = vpop.f32.mrf.mxu0
        %538 = vmatprep.mubr.f32.mxu0 0.0
        %539 = vmatmul.mubr.f32.gmra.mxu0 %v302
        %v540 = vpop.f32.mrf.mxu0
        %v541 = vadd.f32 0.0, %v540
        %v542 = vpop.f32.mrf.mxu0
        %543 = vmatprep.mubr.f32.mxu0 0.0
        %544 = vmatmul.mubr.f32.gmra.mxu0 %v303
        %v545 = vpop.f32.mrf.mxu0
        %v546 = vadd.f32 0.0, %v545
        %v547 = vpop.f32.mrf.mxu0
        %548 = vmatprep.mubr.f32.mxu0 0.0
        %549 = vmatmul.mubr.f32.gmra.mxu0 %v304
        %v550 = vpop.f32.mrf.mxu0
        %v551 = vadd.f32 0.0, %v550
        %v552 = vpop.f32.mrf.mxu0
        %553 = vmatprep.mubr.f32.mxu0 0.0
        %554 = vmatmul.mubr.f32.gmra.mxu0 %v305
        %v555 = vpop.f32.mrf.mxu0
        %v556 = vadd.f32 0.0, %v555
        %v557 = vpop.f32.mrf.mxu0
        %558 = vmatprep.mubr.f32.mxu0 0.0
        %559 = vmatmul.mubr.f32.gmra.mxu0 %v306
        %v560 = vpop.f32.mrf.mxu0
        %v561 = vadd.f32 0.0, %v560
        %v562 = vpop.f32.mrf.mxu0
        %563 = vmatprep.mubr.f32.mxu0 0.0
        %564 = vmatmul.mubr.f32.gmra.mxu0 %v307
        %v565 = vpop.f32.mrf.mxu0
        %v566 = vadd.f32 0.0, %v565
        %v567 = vpop.f32.mrf.mxu0
        %568 = vmatprep.mubr.f32.mxu0 0.0
        %569 = vmatmul.mubr.f32.gmra.mxu0 %v308
        %v570 = vpop.f32.mrf.mxu0
        %v571 = vadd.f32 0.0, %v570
        %v572 = vpop.f32.mrf.mxu0
        %573 = vmatprep.mubr.f32.mxu0 0.0
        %574 = vmatmul.mubr.f32.gmra.mxu0 %v309
        %v575 = vpop.f32.mrf.mxu0
        %v576 = vadd.f32 0.0, %v575
        %v577 = vpop.f32.mrf.mxu0
        %578 = vmatprep.mubr.f32.mxu0 0.0
        %579 = vmatmul.mubr.f32.gmra.mxu0 %v310
        %v580 = vpop.f32.mrf.mxu0
        %v581 = vadd.f32 0.0, %v580
        %v582 = vpop.f32.mrf.mxu0
        %583 = vmatprep.mubr.f32.mxu0 0.0
        %584 = vmatmul.mubr.f32.gmra.mxu0 %v311
        %v585 = vpop.f32.mrf.mxu0
        %v586 = vadd.f32 0.0, %v585
        %v587 = vpop.f32.mrf.mxu0
        %588 = vmatprep.mubr.f32.mxu0 0.0
        %589 = vmatmul.mubr.f32.gmra.mxu0 %v312
        %v590 = vpop.f32.mrf.mxu0
        %v591 = vadd.f32 0.0, %v590
        %v592 = vpop.f32.mrf.mxu0
        %593 = vmatprep.mubr.f32.mxu0 0.0
        %594 = vmatmul.mubr.f32.gmra.mxu0 %v313
        %v595 = vpop.f32.mrf.mxu0
        %v596 = vadd.f32 0.0, %v595
        %v597 = vpop.f32.mrf.mxu0
        %598 = vmatprep.mubr.f32.mxu0 0.0
        %599 = vmatmul.mubr.f32.gmra.mxu0 %v314
        %v600 = vpop.f32.mrf.mxu0
        %v601 = vadd.f32 0.0, %v600
        %v602 = vpop.f32.mrf.mxu0
        %603 = vmatprep.mubr.f32.mxu0 0.0
        %604 = vmatmul.mubr.f32.gmra.mxu0 %v315
        %v605 = vpop.f32.mrf.mxu0
        %v606 = vadd.f32 0.0, %v605
        %v607 = vpop.f32.mrf.mxu0
        %608 = vmatprep.mubr.f32.mxu0 0.0
        %609 = vmatmul.mubr.f32.gmra.mxu0 %v316
        %v610 = vpop.f32.mrf.mxu0
        %v611 = vadd.f32 0.0, %v610
        %v612 = vpop.f32.mrf.mxu0
        %613 = vmatprep.mubr.f32.mxu0 0.0
        %614 = vmatmul.mubr.f32.gmra.mxu0 %v317
        %v615 = vpop.f32.mrf.mxu0
        %v616 = vadd.f32 0.0, %v615
        %v617 = vpop.f32.mrf.mxu0
        %618 = vdwg.mxu0
        %v619 = vlaneseq
        %v620 = vshrl.u32 %v619, 7
        %v621 = vsub.s32 0, %v620
        %v622 = vrot.slane %v271, %v621
        %vm623 = vcmask 719872
        %v625 = vsel %vm623, %v260, 0
        %v628 = vsel %vm623, %v261, 0
        %v631 = vsel %vm623, %v262, 0
        %v634 = vsel %vm623, %v263, 0
        %v637 = vsel %vm623, %v264, 0
        %v640 = vsel %vm623, %v265, 0
        %v643 = vsel %vm623, %v266, 0
        %v646 = vsel %vm623, %v267, 0
        %v649 = vsel %vm623, %v268, 0
        %v652 = vsel %vm623, %v269, 0
        %v655 = vsel %vm623, %v270, 0
        %657 = vmatprep.subr.mxu0 0.0
        %658 = vmatpush1.msra.mxu0 0.0
        %659 = vmatprep.subr.mxu0 0.0
        %660 = vmatpush1.msra.mxu0 0.0
        %661 = vmatprep.subr.mxu0 0.0
        %662 = vmatpush1.msra.mxu0 0.0
        %663 = vmatprep.subr.mxu0 0.0
        %664 = vmatpush1.msra.mxu0 0.0
        %665 = vmatprep.subr.mxu0 0.0
        %666 = vmatpush1.msra.mxu0 0.0
        %667 = vmatprep.subr.mxu0 0.0
        %668 = vmatpush1.msra.mxu0 %v451
        %669 = vmatprep.subr.mxu0 0.0
        %670 = vmatpush1.msra.mxu0 %v446
        %671 = vmatprep.subr.mxu0 0.0
        %672 = vmatpush1.msra.mxu0 %v441
        %673 = vmatprep.subr.mxu0 0.0
        %674 = vmatpush1.msra.mxu0 %v436
        %675 = vmatprep.subr.mxu0 0.0
        %676 = vmatpush1.msra.mxu0 %v431
        %677 = vmatprep.subr.mxu0 0.0
        %678 = vmatpush1.msra.mxu0 %v426
        %679 = vmatprep.subr.mxu0 0.0
        %680 = vmatpush1.msra.mxu0 %v421
        %681 = vmatprep.subr.mxu0 0.0
        %682 = vmatpush1.msra.mxu0 %v416
        %683 = vmatprep.subr.mxu0 0.0
        %684 = vmatpush1.msra.mxu0 %v411
        %685 = vmatprep.subr.mxu0 0.0
        %686 = vmatpush1.msra.mxu0 %v406
        %687 = vmatprep.subr.mxu0 0.0
        %688 = vmatpush1.msra.mxu0 %v401
        %689 = vmatprep.subr.mxu0 0.0
        %690 = vmatpush2.msra.mxu0 0.0
        %691 = vmatprep.subr.mxu0 0.0
        %692 = vmatpush2.msra.mxu0 0.0
        %693 = vmatprep.subr.mxu0 0.0
        %694 = vmatpush2.msra.mxu0 0.0
        %695 = vmatprep.subr.mxu0 0.0
        %696 = vmatpush2.msra.mxu0 0.0
        %697 = vmatprep.subr.mxu0 0.0
        %698 = vmatpush2.msra.mxu0 0.0
        %699 = vmatprep.subr.mxu0 0.0
        %700 = vmatpush2.msra.mxu0 0.0
        %701 = vmatprep.subr.mxu0 0.0
        %702 = vmatpush2.msra.mxu0 0.0
        %703 = vmatprep.subr.mxu0 0.0
        %704 = vmatpush2.msra.mxu0 0.0
        %705 = vmatprep.subr.mxu0 0.0
        %706 = vmatpush2.msra.mxu0 0.0
        %707 = vmatprep.subr.mxu0 0.0
        %708 = vmatpush2.msra.mxu0 0.0
        %709 = vmatprep.subr.mxu0 0.0
        %710 = vmatpush2.msra.mxu0 0.0
        %711 = vmatprep.subr.mxu0 0.0
        %712 = vmatpush2.msra.mxu0 0.0
        %713 = vmatprep.subr.mxu0 0.0
        %714 = vmatpush2.msra.mxu0 0.0
        %715 = vmatprep.subr.mxu0 0.0
        %716 = vmatpush2.msra.mxu0 0.0
        %717 = vmatprep.subr.mxu0 0.0
        %718 = vmatpush2.msra.mxu0 0.0
        %719 = vmatprep.subr.mxu0 0.0
        %720 = vmatpush2.msra.mxu0 0.0
        %721 = vmatprep.mubr.f32.mxu0 0.0
        %722 = vmatmul.mubr.f32.gmra.mxu0 %v625
        %v723 = vpop.f32.mrf.mxu0
        %v724 = vadd.f32 %v622, %v723
        %v725 = vpop.f32.mrf.mxu0
        %726 = vmatprep.mubr.f32.mxu0 0.0
        %727 = vmatmul.mubr.f32.gmra.mxu0 %v628
        %v728 = vpop.f32.mrf.mxu0
        %v729 = vadd.f32 %v622, %v728
        %v730 = vpop.f32.mrf.mxu0
        %731 = vmatprep.mubr.f32.mxu0 0.0
        %732 = vmatmul.mubr.f32.gmra.mxu0 %v631
        %v733 = vpop.f32.mrf.mxu0
        %v734 = vadd.f32 %v622, %v733
        %v735 = vpop.f32.mrf.mxu0
        %736 = vmatprep.mubr.f32.mxu0 0.0
        %737 = vmatmul.mubr.f32.gmra.mxu0 %v634
        %v738 = vpop.f32.mrf.mxu0
        %v739 = vadd.f32 %v622, %v738
        %v740 = vpop.f32.mrf.mxu0
        %741 = vmatprep.mubr.f32.mxu0 0.0
        %742 = vmatmul.mubr.f32.gmra.mxu0 %v637
        %v743 = vpop.f32.mrf.mxu0
        %v744 = vadd.f32 %v622, %v743
        %v745 = vpop.f32.mrf.mxu0
        %746 = vmatprep.mubr.f32.mxu0 0.0
        %747 = vmatmul.mubr.f32.gmra.mxu0 %v640
        %v748 = vpop.f32.mrf.mxu0
        %v749 = vadd.f32 %v622, %v748
        %v750 = vpop.f32.mrf.mxu0
        %751 = vmatprep.mubr.f32.mxu0 0.0
        %752 = vmatmul.mubr.f32.gmra.mxu0 %v643
        %v753 = vpop.f32.mrf.mxu0
        %v754 = vadd.f32 %v622, %v753
        %v755 = vpop.f32.mrf.mxu0
        %756 = vmatprep.mubr.f32.mxu0 0.0
        %757 = vmatmul.mubr.f32.gmra.mxu0 %v646
        %v758 = vpop.f32.mrf.mxu0
        %v759 = vadd.f32 %v622, %v758
        %v760 = vpop.f32.mrf.mxu0
        %761 = vmatprep.mubr.f32.mxu0 0.0
        %762 = vmatmul.mubr.f32.gmra.mxu0 %v649
        %v763 = vpop.f32.mrf.mxu0
        %v764 = vadd.f32 %v622, %v763
        %v765 = vpop.f32.mrf.mxu0
        %766 = vmatprep.mubr.f32.mxu0 0.0
        %767 = vmatmul.mubr.f32.gmra.mxu0 %v652
        %v768 = vpop.f32.mrf.mxu0
        %v769 = vadd.f32 %v622, %v768
        %v770 = vpop.f32.mrf.mxu0
        %771 = vmatprep.mubr.f32.mxu0 0.0
        %772 = vmatmul.mubr.f32.gmra.mxu0 %v655
        %v773 = vpop.f32.mrf.mxu0
        %v774 = vadd.f32 %v622, %v773
        %v775 = vpop.f32.mrf.mxu0
        %776 = vdwg.mxu0
        %v777 = vmax.f32 %v724, 0.0
        %v778 = vmax.f32 %v729, 0.0
        %v779 = vmax.f32 %v734, 0.0
        %v780 = vmax.f32 %v739, 0.0
        %v781 = vmax.f32 %v744, 0.0
        %v782 = vmax.f32 %v749, 0.0
        %v783 = vmax.f32 %v754, 0.0
        %v784 = vmax.f32 %v759, 0.0
        %v785 = vmax.f32 %v764, 0.0
        %v786 = vmax.f32 %v769, 0.0
        %v787 = vmax.f32 %v774, 0.0
        %788 = vst [vmem:[#allocation2] sm:$0xff] %v777
        %789 = vst [vmem:[#allocation2 + $0x8] sm:$0xff] %v778
        %790 = vst [vmem:[#allocation2 + $0x10] sm:$0xff] %v779
        %791 = vst [vmem:[#allocation2 + $0x18] sm:$0xff] %v780
        %792 = vst [vmem:[#allocation2 + $0x20] sm:$0xff] %v781
        %793 = vst [vmem:[#allocation2 + $0x28] sm:$0xff] %v782
        %794 = vst [vmem:[#allocation2 + $0x30] sm:$0xff] %v783
        %795 = vst [vmem:[#allocation2 + $0x38] sm:$0xff] %v784
        %796 = vst [vmem:[#allocation2 + $0x40] sm:$0xff] %v785
        %797 = vst [vmem:[#allocation2 + $0x48] sm:$0xff] %v786
        %798 = vst [vmem:[#allocation2 + $0x50] sm:$0xff] %v787
        %799 = vmatprep.subr.mxu0 0.0
        %800 = vmatpush1.msra.mxu0 0.0
        %801 = vmatprep.subr.mxu0 0.0
        %802 = vmatpush1.msra.mxu0 0.0
        %803 = vmatprep.subr.mxu0 0.0
        %804 = vmatpush1.msra.mxu0 0.0
        %805 = vmatprep.subr.mxu0 0.0
        %806 = vmatpush1.msra.mxu0 0.0
        %807 = vmatprep.subr.mxu0 0.0
        %808 = vmatpush1.msra.mxu0 0.0
        %809 = vmatprep.subr.mxu0 0.0
        %810 = vmatpush1.msra.mxu0 %v506
        %811 = vmatprep.subr.mxu0 0.0
        %812 = vmatpush1.msra.mxu0 %v501
        %813 = vmatprep.subr.mxu0 0.0
        %814 = vmatpush1.msra.mxu0 %v496
        %815 = vmatprep.subr.mxu0 0.0
        %816 = vmatpush1.msra.mxu0 %v491
        %817 = vmatprep.subr.mxu0 0.0
        %818 = vmatpush1.msra.mxu0 %v486
        %819 = vmatprep.subr.mxu0 0.0
        %820 = vmatpush1.msra.mxu0 %v481
        %821 = vmatprep.subr.mxu0 0.0
        %822 = vmatpush1.msra.mxu0 %v476
        %823 = vmatprep.subr.mxu0 0.0
        %824 = vmatpush1.msra.mxu0 %v471
        %825 = vmatprep.subr.mxu0 0.0
        %826 = vmatpush1.msra.mxu0 %v466
        %827 = vmatprep.subr.mxu0 0.0
        %828 = vmatpush1.msra.mxu0 %v461
        %829 = vmatprep.subr.mxu0 0.0
        %830 = vmatpush1.msra.mxu0 %v456
        %831 = vmatprep.subr.mxu0 0.0
        %832 = vmatpush2.msra.mxu0 0.0
        %833 = vmatprep.subr.mxu0 0.0
        %834 = vmatpush2.msra.mxu0 0.0
        %835 = vmatprep.subr.mxu0 0.0
        %836 = vmatpush2.msra.mxu0 0.0
        %837 = vmatprep.subr.mxu0 0.0
        %838 = vmatpush2.msra.mxu0 0.0
        %839 = vmatprep.subr.mxu0 0.0
        %840 = vmatpush2.msra.mxu0 0.0
        %841 = vmatprep.subr.mxu0 0.0
        %842 = vmatpush2.msra.mxu0 0.0
        %843 = vmatprep.subr.mxu0 0.0
        %844 = vmatpush2.msra.mxu0 0.0
        %845 = vmatprep.subr.mxu0 0.0
        %846 = vmatpush2.msra.mxu0 0.0
        %847 = vmatprep.subr.mxu0 0.0
        %848 = vmatpush2.msra.mxu0 0.0
        %849 = vmatprep.subr.mxu0 0.0
        %850 = vmatpush2.msra.mxu0 0.0
        %851 = vmatprep.subr.mxu0 0.0
        %852 = vmatpush2.msra.mxu0 0.0
        %853 = vmatprep.subr.mxu0 0.0
        %854 = vmatpush2.msra.mxu0 0.0
        %855 = vmatprep.subr.mxu0 0.0
        %856 = vmatpush2.msra.mxu0 0.0
        %857 = vmatprep.subr.mxu0 0.0
        %858 = vmatpush2.msra.mxu0 0.0
        %859 = vmatprep.subr.mxu0 0.0
        %860 = vmatpush2.msra.mxu0 0.0
        %861 = vmatprep.subr.mxu0 0.0
        %862 = vmatpush2.msra.mxu0 0.0
        %863 = vmatprep.mubr.f32.mxu0 0.0
        %864 = vmatmul.mubr.f32.gmra.mxu0 %v625
        %v865 = vpop.f32.mrf.mxu0
        %v866 = vadd.f32 %v622, %v865
        %v867 = vpop.f32.mrf.mxu0
        %868 = vmatprep.mubr.f32.mxu0 0.0
        %869 = vmatmul.mubr.f32.gmra.mxu0 %v628
        %v870 = vpop.f32.mrf.mxu0
        %v871 = vadd.f32 %v622, %v870
        %v872 = vpop.f32.mrf.mxu0
        %873 = vmatprep.mubr.f32.mxu0 0.0
        %874 = vmatmul.mubr.f32.gmra.mxu0 %v631
        %v875 = vpop.f32.mrf.mxu0
        %v876 = vadd.f32 %v622, %v875
        %v877 = vpop.f32.mrf.mxu0
        %878 = vmatprep.mubr.f32.mxu0 0.0
        %879 = vmatmul.mubr.f32.gmra.mxu0 %v634
        %v880 = vpop.f32.mrf.mxu0
        %v881 = vadd.f32 %v622, %v880
        %v882 = vpop.f32.mrf.mxu0
        %883 = vmatprep.mubr.f32.mxu0 0.0
        %884 = vmatmul.mubr.f32.gmra.mxu0 %v637
        %v885 = vpop.f32.mrf.mxu0
        %v886 = vadd.f32 %v622, %v885
        %v887 = vpop.f32.mrf.mxu0
        %888 = vmatprep.mubr.f32.mxu0 0.0
        %889 = vmatmul.mubr.f32.gmra.mxu0 %v640
        %v890 = vpop.f32.mrf.mxu0
        %v891 = vadd.f32 %v622, %v890
        %v892 = vpop.f32.mrf.mxu0
        %893 = vmatprep.mubr.f32.mxu0 0.0
        %894 = vmatmul.mubr.f32.gmra.mxu0 %v643
        %v895 = vpop.f32.mrf.mxu0
        %v896 = vadd.f32 %v622, %v895
        %v897 = vpop.f32.mrf.mxu0
        %898 = vmatprep.mubr.f32.mxu0 0.0
        %899 = vmatmul.mubr.f32.gmra.mxu0 %v646
        %v900 = vpop.f32.mrf.mxu0
        %v901 = vadd.f32 %v622, %v900
        %v902 = vpop.f32.mrf.mxu0
        %903 = vmatprep.mubr.f32.mxu0 0.0
        %904 = vmatmul.mubr.f32.gmra.mxu0 %v649
        %v905 = vpop.f32.mrf.mxu0
        %v906 = vadd.f32 %v622, %v905
        %v907 = vpop.f32.mrf.mxu0
        %908 = vmatprep.mubr.f32.mxu0 0.0
        %909 = vmatmul.mubr.f32.gmra.mxu0 %v652
        %v910 = vpop.f32.mrf.mxu0
        %v911 = vadd.f32 %v622, %v910
        %v912 = vpop.f32.mrf.mxu0
        %913 = vmatprep.mubr.f32.mxu0 0.0
        %914 = vmatmul.mubr.f32.gmra.mxu0 %v655
        %v915 = vpop.f32.mrf.mxu0
        %v916 = vadd.f32 %v622, %v915
        %v917 = vpop.f32.mrf.mxu0
        %918 = vdwg.mxu0
        %v919 = vmax.f32 %v866, 0.0
        %v920 = vmax.f32 %v871, 0.0
        %v921 = vmax.f32 %v876, 0.0
        %v922 = vmax.f32 %v881, 0.0
        %v923 = vmax.f32 %v886, 0.0
        %v924 = vmax.f32 %v891, 0.0
        %v925 = vmax.f32 %v896, 0.0
        %v926 = vmax.f32 %v901, 0.0
        %v927 = vmax.f32 %v906, 0.0
        %v928 = vmax.f32 %v911, 0.0
        %v929 = vmax.f32 %v916, 0.0
        %930 = vst [vmem:[#allocation2 + $0x58] sm:$0xff] %v919
        %931 = vst [vmem:[#allocation2 + $0x60] sm:$0xff] %v920
        %932 = vst [vmem:[#allocation2 + $0x68] sm:$0xff] %v921
        %933 = vst [vmem:[#allocation2 + $0x70] sm:$0xff] %v922
        %934 = vst [vmem:[#allocation2 + $0x78] sm:$0xff] %v923
        %935 = vst [vmem:[#allocation2 + $0x80] sm:$0xff] %v924
        %936 = vst [vmem:[#allocation2 + $0x88] sm:$0xff] %v925
        %937 = vst [vmem:[#allocation2 + $0x90] sm:$0xff] %v926
        %938 = vst [vmem:[#allocation2 + $0x98] sm:$0xff] %v927
        %939 = vst [vmem:[#allocation2 + $0xa0] sm:$0xff] %v928
        %940 = vst [vmem:[#allocation2 + $0xa8] sm:$0xff] %v929
        %941 = vmatprep.subr.mxu0 0.0
        %942 = vmatpush1.msra.mxu0 0.0
        %943 = vmatprep.subr.mxu0 0.0
        %944 = vmatpush1.msra.mxu0 0.0
        %945 = vmatprep.subr.mxu0 0.0
        %946 = vmatpush1.msra.mxu0 0.0
        %947 = vmatprep.subr.mxu0 0.0
        %948 = vmatpush1.msra.mxu0 0.0
        %949 = vmatprep.subr.mxu0 0.0
        %950 = vmatpush1.msra.mxu0 0.0
        %951 = vmatprep.subr.mxu0 0.0
        %952 = vmatpush1.msra.mxu0 %v561
        %953 = vmatprep.subr.mxu0 0.0
        %954 = vmatpush1.msra.mxu0 %v556
        %955 = vmatprep.subr.mxu0 0.0
        %956 = vmatpush1.msra.mxu0 %v551
        %957 = vmatprep.subr.mxu0 0.0
        %958 = vmatpush1.msra.mxu0 %v546
        %959 = vmatprep.subr.mxu0 0.0
        %960 = vmatpush1.msra.mxu0 %v541
        %961 = vmatprep.subr.mxu0 0.0
        %962 = vmatpush1.msra.mxu0 %v536
        %963 = vmatprep.subr.mxu0 0.0
        %964 = vmatpush1.msra.mxu0 %v531
        %965 = vmatprep.subr.mxu0 0.0
        %966 = vmatpush1.msra.mxu0 %v526
        %967 = vmatprep.subr.mxu0 0.0
        %968 = vmatpush1.msra.mxu0 %v521
        %969 = vmatprep.subr.mxu0 0.0
        %970 = vmatpush1.msra.mxu0 %v516
        %971 = vmatprep.subr.mxu0 0.0
        %972 = vmatpush1.msra.mxu0 %v511
        %973 = vmatprep.subr.mxu0 0.0
        %974 = vmatpush2.msra.mxu0 0.0
        %975 = vmatprep.subr.mxu0 0.0
        %976 = vmatpush2.msra.mxu0 0.0
        %977 = vmatprep.subr.mxu0 0.0
        %978 = vmatpush2.msra.mxu0 0.0
        %979 = vmatprep.subr.mxu0 0.0
        %980 = vmatpush2.msra.mxu0 0.0
        %981 = vmatprep.subr.mxu0 0.0
        %982 = vmatpush2.msra.mxu0 0.0
        %983 = vmatprep.subr.mxu0 0.0
        %984 = vmatpush2.msra.mxu0 0.0
        %985 = vmatprep.subr.mxu0 0.0
        %986 = vmatpush2.msra.mxu0 0.0
        %987 = vmatprep.subr.mxu0 0.0
        %988 = vmatpush2.msra.mxu0 0.0
        %989 = vmatprep.subr.mxu0 0.0
        %990 = vmatpush2.msra.mxu0 0.0
        %991 = vmatprep.subr.mxu0 0.0
        %992 = vmatpush2.msra.mxu0 0.0
        %993 = vmatprep.subr.mxu0 0.0
        %994 = vmatpush2.msra.mxu0 0.0
        %995 = vmatprep.subr.mxu0 0.0
        %996 = vmatpush2.msra.mxu0 0.0
        %997 = vmatprep.subr.mxu0 0.0
        %998 = vmatpush2.msra.mxu0 0.0
        %999 = vmatprep.subr.mxu0 0.0
        %1000 = vmatpush2.msra.mxu0 0.0
        %1001 = vmatprep.subr.mxu0 0.0
        %1002 = vmatpush2.msra.mxu0 0.0
        %1003 = vmatprep.subr.mxu0 0.0
        %1004 = vmatpush2.msra.mxu0 0.0
        %1005 = vmatprep.mubr.f32.mxu0 0.0
        %1006 = vmatmul.mubr.f32.gmra.mxu0 %v625
        %v1007 = vpop.f32.mrf.mxu0
        %v1008 = vadd.f32 %v622, %v1007
        %v1009 = vpop.f32.mrf.mxu0
        %1010 = vmatprep.mubr.f32.mxu0 0.0
        %1011 = vmatmul.mubr.f32.gmra.mxu0 %v628
        %v1012 = vpop.f32.mrf.mxu0
        %v1013 = vadd.f32 %v622, %v1012
        %v1014 = vpop.f32.mrf.mxu0
        %1015 = vmatprep.mubr.f32.mxu0 0.0
        %1016 = vmatmul.mubr.f32.gmra.mxu0 %v631
        %v1017 = vpop.f32.mrf.mxu0
        %v1018 = vadd.f32 %v622, %v1017
        %v1019 = vpop.f32.mrf.mxu0
        %1020 = vmatprep.mubr.f32.mxu0 0.0
        %1021 = vmatmul.mubr.f32.gmra.mxu0 %v634
        %v1022 = vpop.f32.mrf.mxu0
        %v1023 = vadd.f32 %v622, %v1022
        %v1024 = vpop.f32.mrf.mxu0
        %1025 = vmatprep.mubr.f32.mxu0 0.0
        %1026 = vmatmul.mubr.f32.gmra.mxu0 %v637
        %v1027 = vpop.f32.mrf.mxu0
        %v1028 = vadd.f32 %v622, %v1027
        %v1029 = vpop.f32.mrf.mxu0
        %1030 = vmatprep.mubr.f32.mxu0 0.0
        %1031 = vmatmul.mubr.f32.gmra.mxu0 %v640
        %v1032 = vpop.f32.mrf.mxu0
        %v1033 = vadd.f32 %v622, %v1032
        %v1034 = vpop.f32.mrf.mxu0
        %1035 = vmatprep.mubr.f32.mxu0 0.0
        %1036 = vmatmul.mubr.f32.gmra.mxu0 %v643
        %v1037 = vpop.f32.mrf.mxu0
        %v1038 = vadd.f32 %v622, %v1037
        %v1039 = vpop.f32.mrf.mxu0
        %1040 = vmatprep.mubr.f32.mxu0 0.0
        %1041 = vmatmul.mubr.f32.gmra.mxu0 %v646
        %v1042 = vpop.f32.mrf.mxu0
        %v1043 = vadd.f32 %v622, %v1042
        %v1044 = vpop.f32.mrf.mxu0
        %1045 = vmatprep.mubr.f32.mxu0 0.0
        %1046 = vmatmul.mubr.f32.gmra.mxu0 %v649
        %v1047 = vpop.f32.mrf.mxu0
        %v1048 = vadd.f32 %v622, %v1047
        %v1049 = vpop.f32.mrf.mxu0
        %1050 = vmatprep.mubr.f32.mxu0 0.0
        %1051 = vmatmul.mubr.f32.gmra.mxu0 %v652
        %v1052 = vpop.f32.mrf.mxu0
        %v1053 = vadd.f32 %v622, %v1052
        %v1054 = vpop.f32.mrf.mxu0
        %1055 = vmatprep.mubr.f32.mxu0 0.0
        %1056 = vmatmul.mubr.f32.gmra.mxu0 %v655
        %v1057 = vpop.f32.mrf.mxu0
        %v1058 = vadd.f32 %v622, %v1057
        %v1059 = vpop.f32.mrf.mxu0
        %1060 = vdwg.mxu0
        %v1061 = vmax.f32 %v1008, 0.0
        %v1062 = vmax.f32 %v1013, 0.0
        %v1063 = vmax.f32 %v1018, 0.0
        %v1064 = vmax.f32 %v1023, 0.0
        %v1065 = vmax.f32 %v1028, 0.0
        %v1066 = vmax.f32 %v1033, 0.0
        %v1067 = vmax.f32 %v1038, 0.0
        %v1068 = vmax.f32 %v1043, 0.0
        %v1069 = vmax.f32 %v1048, 0.0
        %v1070 = vmax.f32 %v1053, 0.0
        %v1071 = vmax.f32 %v1058, 0.0
        %1072 = vst [vmem:[#allocation2 + $0xb0] sm:$0xff] %v1061
        %1073 = vst [vmem:[#allocation2 + $0xb8] sm:$0xff] %v1062
        %1074 = vst [vmem:[#allocation2 + $0xc0] sm:$0xff] %v1063
        %1075 = vst [vmem:[#allocation2 + $0xc8] sm:$0xff] %v1064
        %1076 = vst [vmem:[#allocation2 + $0xd0] sm:$0xff] %v1065
        %1077 = vst [vmem:[#allocation2 + $0xd8] sm:$0xff] %v1066
        %1078 = vst [vmem:[#allocation2 + $0xe0] sm:$0xff] %v1067
        %1079 = vst [vmem:[#allocation2 + $0xe8] sm:$0xff] %v1068
        %1080 = vst [vmem:[#allocation2 + $0xf0] sm:$0xff] %v1069
        %1081 = vst [vmem:[#allocation2 + $0xf8] sm:$0xff] %v1070
        %1082 = vst [vmem:[#allocation2 + $0x100] sm:$0xff] %v1071
        %1083 = vmatprep.subr.mxu0 0.0
        %1084 = vmatpush1.msra.mxu0 0.0
        %1085 = vmatprep.subr.mxu0 0.0
        %1086 = vmatpush1.msra.mxu0 0.0
        %1087 = vmatprep.subr.mxu0 0.0
        %1088 = vmatpush1.msra.mxu0 0.0
        %1089 = vmatprep.subr.mxu0 0.0
        %1090 = vmatpush1.msra.mxu0 0.0
        %1091 = vmatprep.subr.mxu0 0.0
        %1092 = vmatpush1.msra.mxu0 0.0
        %1093 = vmatprep.subr.mxu0 0.0
        %1094 = vmatpush1.msra.mxu0 %v616
        %1095 = vmatprep.subr.mxu0 0.0
        %1096 = vmatpush1.msra.mxu0 %v611
        %1097 = vmatprep.subr.mxu0 0.0
        %1098 = vmatpush1.msra.mxu0 %v606
        %1099 = vmatprep.subr.mxu0 0.0
        %1100 = vmatpush1.msra.mxu0 %v601
        %1101 = vmatprep.subr.mxu0 0.0
        %1102 = vmatpush1.msra.mxu0 %v596
        %1103 = vmatprep.subr.mxu0 0.0
        %1104 = vmatpush1.msra.mxu0 %v591
        %1105 = vmatprep.subr.mxu0 0.0
        %1106 = vmatpush1.msra.mxu0 %v586
        %1107 = vmatprep.subr.mxu0 0.0
        %1108 = vmatpush1.msra.mxu0 %v581
        %1109 = vmatprep.subr.mxu0 0.0
        %1110 = vmatpush1.msra.mxu0 %v576
        %1111 = vmatprep.subr.mxu0 0.0
        %1112 = vmatpush1.msra.mxu0 %v571
        %1113 = vmatprep.subr.mxu0 0.0
        %1114 = vmatpush1.msra.mxu0 %v566
        %1115 = vmatprep.subr.mxu0 0.0
        %1116 = vmatpush2.msra.mxu0 0.0
        %1117 = vmatprep.subr.mxu0 0.0
        %1118 = vmatpush2.msra.mxu0 0.0
        %1119 = vmatprep.subr.mxu0 0.0
        %1120 = vmatpush2.msra.mxu0 0.0
        %1121 = vmatprep.subr.mxu0 0.0
        %1122 = vmatpush2.msra.mxu0 0.0
        %1123 = vmatprep.subr.mxu0 0.0
        %1124 = vmatpush2.msra.mxu0 0.0
        %1125 = vmatprep.subr.mxu0 0.0
        %1126 = vmatpush2.msra.mxu0 0.0
        %1127 = vmatprep.subr.mxu0 0.0
        %1128 = vmatpush2.msra.mxu0 0.0
        %1129 = vmatprep.subr.mxu0 0.0
        %1130 = vmatpush2.msra.mxu0 0.0
        %1131 = vmatprep.subr.mxu0 0.0
        %1132 = vmatpush2.msra.mxu0 0.0
        %1133 = vmatprep.subr.mxu0 0.0
        %1134 = vmatpush2.msra.mxu0 0.0
        %1135 = vmatprep.subr.mxu0 0.0
        %1136 = vmatpush2.msra.mxu0 0.0
        %1137 = vmatprep.subr.mxu0 0.0
        %1138 = vmatpush2.msra.mxu0 0.0
        %1139 = vmatprep.subr.mxu0 0.0
        %1140 = vmatpush2.msra.mxu0 0.0
        %1141 = vmatprep.subr.mxu0 0.0
        %1142 = vmatpush2.msra.mxu0 0.0
        %1143 = vmatprep.subr.mxu0 0.0
        %1144 = vmatpush2.msra.mxu0 0.0
        %1145 = vmatprep.subr.mxu0 0.0
        %1146 = vmatpush2.msra.mxu0 0.0
        %1147 = vmatprep.mubr.f32.mxu0 0.0
        %1148 = vmatmul.mubr.f32.gmra.mxu0 %v625
        %v1149 = vpop.f32.mrf.mxu0
        %v1150 = vadd.f32 %v622, %v1149
        %v1151 = vpop.f32.mrf.mxu0
        %1152 = vmatprep.mubr.f32.mxu0 0.0
        %1153 = vmatmul.mubr.f32.gmra.mxu0 %v628
        %v1154 = vpop.f32.mrf.mxu0
        %v1155 = vadd.f32 %v622, %v1154
        %v1156 = vpop.f32.mrf.mxu0
        %1157 = vmatprep.mubr.f32.mxu0 0.0
        %1158 = vmatmul.mubr.f32.gmra.mxu0 %v631
        %v1159 = vpop.f32.mrf.mxu0
        %v1160 = vadd.f32 %v622, %v1159
        %v1161 = vpop.f32.mrf.mxu0
        %1162 = vmatprep.mubr.f32.mxu0 0.0
        %1163 = vmatmul.mubr.f32.gmra.mxu0 %v634
        %v1164 = vpop.f32.mrf.mxu0
        %v1165 = vadd.f32 %v622, %v1164
        %v1166 = vpop.f32.mrf.mxu0
        %1167 = vmatprep.mubr.f32.mxu0 0.0
        %1168 = vmatmul.mubr.f32.gmra.mxu0 %v637
        %v1169 = vpop.f32.mrf.mxu0
        %v1170 = vadd.f32 %v622, %v1169
        %v1171 = vpop.f32.mrf.mxu0
        %1172 = vmatprep.mubr.f32.mxu0 0.0
        %1173 = vmatmul.mubr.f32.gmra.mxu0 %v640
        %v1174 = vpop.f32.mrf.mxu0
        %v1175 = vadd.f32 %v622, %v1174
        %v1176 = vpop.f32.mrf.mxu0
        %1177 = vmatprep.mubr.f32.mxu0 0.0
        %1178 = vmatmul.mubr.f32.gmra.mxu0 %v643
        %v1179 = vpop.f32.mrf.mxu0
        %v1180 = vadd.f32 %v622, %v1179
        %v1181 = vpop.f32.mrf.mxu0
        %1182 = vmatprep.mubr.f32.mxu0 0.0
        %1183 = vmatmul.mubr.f32.gmra.mxu0 %v646
        %v1184 = vpop.f32.mrf.mxu0
        %v1185 = vadd.f32 %v622, %v1184
        %v1186 = vpop.f32.mrf.mxu0
        %1187 = vmatprep.mubr.f32.mxu0 0.0
        %1188 = vmatmul.mubr.f32.gmra.mxu0 %v649
        %v1189 = vpop.f32.mrf.mxu0
        %v1190 = vadd.f32 %v622, %v1189
        %v1191 = vpop.f32.mrf.mxu0
        %1192 = vmatprep.mubr.f32.mxu0 0.0
        %1193 = vmatmul.mubr.f32.gmra.mxu0 %v652
        %v1194 = vpop.f32.mrf.mxu0
        %v1195 = vadd.f32 %v622, %v1194
        %v1196 = vpop.f32.mrf.mxu0
        %1197 = vmatprep.mubr.f32.mxu0 0.0
        %1198 = vmatmul.mubr.f32.gmra.mxu0 %v655
        %v1199 = vpop.f32.mrf.mxu0
        %v1200 = vadd.f32 %v622, %v1199
        %v1201 = vpop.f32.mrf.mxu0
        %1202 = vdwg.mxu0
        %v1203 = vmax.f32 %v1150, 0.0
        %v1204 = vmax.f32 %v1155, 0.0
        %v1205 = vmax.f32 %v1160, 0.0
        %v1206 = vmax.f32 %v1165, 0.0
        %v1207 = vmax.f32 %v1170, 0.0
        %v1208 = vmax.f32 %v1175, 0.0
        %v1209 = vmax.f32 %v1180, 0.0
        %v1210 = vmax.f32 %v1185, 0.0
        %v1211 = vmax.f32 %v1190, 0.0
        %v1212 = vmax.f32 %v1195, 0.0
        %v1213 = vmax.f32 %v1200, 0.0
        %1214 = vst [vmem:[#allocation2 + $0x108] sm:$0xff] %v1203
        %1215 = vst [vmem:[#allocation2 + $0x110] sm:$0xff] %v1204
        %1216 = vst [vmem:[#allocation2 + $0x118] sm:$0xff] %v1205
        %1217 = vst [vmem:[#allocation2 + $0x120] sm:$0xff] %v1206
        %1218 = vst [vmem:[#allocation2 + $0x128] sm:$0xff] %v1207
        %1219 = vst [vmem:[#allocation2 + $0x130] sm:$0xff] %v1208
        %1220 = vst [vmem:[#allocation2 + $0x138] sm:$0xff] %v1209
        %1221 = vst [vmem:[#allocation2 + $0x140] sm:$0xff] %v1210
        %1222 = vst [vmem:[#allocation2 + $0x148] sm:$0xff] %v1211
        %1223 = vst [vmem:[#allocation2 + $0x150] sm:$0xff] %v1212
        %1224 = vst [vmem:[#allocation2 + $0x158] sm:$0xff] %v1213
        %v1225 = vld [vmem:[#allocation2] sm:$0xff]
        %v1226 = vld [vmem:[#allocation2 + $0x8] sm:$0xff]
        %v1227 = vld [vmem:[#allocation2 + $0x10] sm:$0xff]
        %v1228 = vld [vmem:[#allocation2 + $0x18] sm:$0xff]
        %v1229 = vld [vmem:[#allocation2 + $0x20] sm:$0xff]
        %v1230 = vld [vmem:[#allocation2 + $0x28] sm:$0xff]
        %v1231 = vld [vmem:[#allocation2 + $0x30] sm:$0xff]
        %v1232 = vld [vmem:[#allocation2 + $0x38] sm:$0xff]
        %v1233 = vld [vmem:[#allocation2 + $0x40] sm:$0xff]
        %v1234 = vld [vmem:[#allocation2 + $0x48] sm:$0xff]
        %v1235 = vld [vmem:[#allocation2 + $0x50] sm:$0xff]
        %v1236 = vld [vmem:[#allocation2 + $0x58] sm:$0xff]
        %v1237 = vld [vmem:[#allocation2 + $0x60] sm:$0xff]
        %v1238 = vld [vmem:[#allocation2 + $0x68] sm:$0xff]
        %v1239 = vld [vmem:[#allocation2 + $0x70] sm:$0xff]
        %v1240 = vld [vmem:[#allocation2 + $0x78] sm:$0xff]
        %v1241 = vld [vmem:[#allocation2 + $0x80] sm:$0xff]
        %v1242 = vld [vmem:[#allocation2 + $0x88] sm:$0xff]
        %v1243 = vld [vmem:[#allocation2 + $0x90] sm:$0xff]
        %v1244 = vld [vmem:[#allocation2 + $0x98] sm:$0xff]
        %v1245 = vld [vmem:[#allocation2 + $0xa0] sm:$0xff]
        %v1246 = vld [vmem:[#allocation2 + $0xa8] sm:$0xff]
        %v1247 = vld [vmem:[#allocation2 + $0xb0] sm:$0xff]
        %v1248 = vld [vmem:[#allocation2 + $0xb8] sm:$0xff]
        %v1249 = vld [vmem:[#allocation2 + $0xc0] sm:$0xff]
        %v1250 = vld [vmem:[#allocation2 + $0xc8] sm:$0xff]
        %v1251 = vld [vmem:[#allocation2 + $0xd0] sm:$0xff]
        %v1252 = vld [vmem:[#allocation2 + $0xd8] sm:$0xff]
        %v1253 = vld [vmem:[#allocation2 + $0xe0] sm:$0xff]
        %v1254 = vld [vmem:[#allocation2 + $0xe8] sm:$0xff]
        %v1255 = vld [vmem:[#allocation2 + $0xf0] sm:$0xff]
        %v1256 = vld [vmem:[#allocation2 + $0xf8] sm:$0xff]
        %v1257 = vld [vmem:[#allocation2 + $0x100] sm:$0xff]
        %v1258 = vld [vmem:[#allocation2 + $0x108] sm:$0xff]
        %v1259 = vld [vmem:[#allocation2 + $0x110] sm:$0xff]
        %v1260 = vld [vmem:[#allocation2 + $0x118] sm:$0xff]
        %v1261 = vld [vmem:[#allocation2 + $0x120] sm:$0xff]
        %v1262 = vld [vmem:[#allocation2 + $0x128] sm:$0xff]
        %v1263 = vld [vmem:[#allocation2 + $0x130] sm:$0xff]
        %v1264 = vld [vmem:[#allocation2 + $0x138] sm:$0xff]
        %v1265 = vld [vmem:[#allocation2 + $0x140] sm:$0xff]
        %v1266 = vld [vmem:[#allocation2 + $0x148] sm:$0xff]
        %v1267 = vld [vmem:[#allocation2 + $0x150] sm:$0xff]
        %v1268 = vld [vmem:[#allocation2 + $0x158] sm:$0xff]
        %s1269 = scalar_lea.vmem [#allocation6], 128
        %v1270 = vld [vmem:[%s1269] sm:$0xff]
        %v1271 = vld [vmem:[%s1269 + $0x8] sm:$0xff]
        %v1272 = vld [vmem:[%s1269 + $0x10] sm:$0xff]
        %v1273 = vld [vmem:[%s1269 + $0x18] sm:$0xff]
        %v1274 = vld [vmem:[%s1269 + $0x20] sm:$0xff]
        %v1275 = vld [vmem:[%s1269 + $0x28] sm:$0xff]
        %v1276 = vld [vmem:[%s1269 + $0x30] sm:$0xff]
        %v1277 = vld [vmem:[%s1269 + $0x38] sm:$0xff]
        %v1278 = vld [vmem:[%s1269 + $0x40] sm:$0xff]
        %v1279 = vld [vmem:[%s1269 + $0x48] sm:$0xff]
        %v1280 = vld [vmem:[%s1269 + $0x50] sm:$0xff]
        %v1281 = vld [vmem:[%s1269 + $0x58] sm:$0xff]
        %v1282 = vld [vmem:[%s1269 + $0x60] sm:$0xff]
        %v1283 = vld [vmem:[%s1269 + $0x68] sm:$0xff]
        %v1284 = vld [vmem:[%s1269 + $0x70] sm:$0xff]
        %v1285 = vld [vmem:[%s1269 + $0x78] sm:$0xff]
        %1286 = vmatprep.subr.mxu0 0.0
        %1287 = vmatpush1.msra.mxu0 %v1285
        %1288 = vmatprep.subr.mxu0 0.0
        %1289 = vmatpush1.msra.mxu0 %v1284
        %1290 = vmatprep.subr.mxu0 0.0
        %1291 = vmatpush1.msra.mxu0 %v1283
        %1292 = vmatprep.subr.mxu0 0.0
        %1293 = vmatpush1.msra.mxu0 %v1282
        %1294 = vmatprep.subr.mxu0 0.0
        %1295 = vmatpush1.msra.mxu0 %v1281
        %1296 = vmatprep.subr.mxu0 0.0
        %1297 = vmatpush1.msra.mxu0 %v1280
        %1298 = vmatprep.subr.mxu0 0.0
        %1299 = vmatpush1.msra.mxu0 %v1279
        %1300 = vmatprep.subr.mxu0 0.0
        %1301 = vmatpush1.msra.mxu0 %v1278
        %1302 = vmatprep.subr.mxu0 0.0
        %1303 = vmatpush1.msra.mxu0 %v1277
        %1304 = vmatprep.subr.mxu0 0.0
        %1305 = vmatpush1.msra.mxu0 %v1276
        %1306 = vmatprep.subr.mxu0 0.0
        %1307 = vmatpush1.msra.mxu0 %v1275
        %1308 = vmatprep.subr.mxu0 0.0
        %1309 = vmatpush1.msra.mxu0 %v1274
        %1310 = vmatprep.subr.mxu0 0.0
        %1311 = vmatpush1.msra.mxu0 %v1273
        %1312 = vmatprep.subr.mxu0 0.0
        %1313 = vmatpush1.msra.mxu0 %v1272
        %1314 = vmatprep.subr.mxu0 0.0
        %1315 = vmatpush1.msra.mxu0 %v1271
        %1316 = vmatprep.subr.mxu0 0.0
        %1317 = vmatpush1.msra.mxu0 %v1270
        %1318 = vmatprep.subr.mxu0 0.0
        %1319 = vmatpush2.msra.mxu0 0.0
        %1320 = vmatprep.subr.mxu0 0.0
        %1321 = vmatpush2.msra.mxu0 0.0
        %1322 = vmatprep.subr.mxu0 0.0
        %1323 = vmatpush2.msra.mxu0 0.0
        %1324 = vmatprep.subr.mxu0 0.0
        %1325 = vmatpush2.msra.mxu0 0.0
        %1326 = vmatprep.subr.mxu0 0.0
        %1327 = vmatpush2.msra.mxu0 0.0
        %1328 = vmatprep.subr.mxu0 0.0
        %1329 = vmatpush2.msra.mxu0 0.0
        %1330 = vmatprep.subr.mxu0 0.0
        %1331 = vmatpush2.msra.mxu0 0.0
        %1332 = vmatprep.subr.mxu0 0.0
        %1333 = vmatpush2.msra.mxu0 0.0
        %1334 = vmatprep.subr.mxu0 0.0
        %1335 = vmatpush2.msra.mxu0 0.0
        %1336 = vmatprep.subr.mxu0 0.0
        %1337 = vmatpush2.msra.mxu0 0.0
        %1338 = vmatprep.subr.mxu0 0.0
        %1339 = vmatpush2.msra.mxu0 0.0
        %1340 = vmatprep.subr.mxu0 0.0
        %1341 = vmatpush2.msra.mxu0 0.0
        %1342 = vmatprep.subr.mxu0 0.0
        %1343 = vmatpush2.msra.mxu0 0.0
        %1344 = vmatprep.subr.mxu0 0.0
        %1345 = vmatpush2.msra.mxu0 0.0
        %1346 = vmatprep.subr.mxu0 0.0
        %1347 = vmatpush2.msra.mxu0 0.0
        %1348 = vmatprep.subr.mxu0 0.0
        %1349 = vmatpush2.msra.mxu0 0.0
        %1350 = vmatprep.mubr.f32.mxu0 0.0
        %1351 = vmatmul.mubr.f32.gmra.mxu0 %v1225
        %v1352 = vpop.f32.mrf.mxu0
        %v1353 = vadd.f32 0.0, %v1352
        %v1354 = vpop.f32.mrf.mxu0
        %1355 = vmatprep.mubr.f32.mxu0 0.0
        %1356 = vmatmul.mubr.f32.gmra.mxu0 %v1226
        %v1357 = vpop.f32.mrf.mxu0
        %v1358 = vadd.f32 0.0, %v1357
        %v1359 = vpop.f32.mrf.mxu0
        %1360 = vmatprep.mubr.f32.mxu0 0.0
        %1361 = vmatmul.mubr.f32.gmra.mxu0 %v1227
        %v1362 = vpop.f32.mrf.mxu0
        %v1363 = vadd.f32 0.0, %v1362
        %v1364 = vpop.f32.mrf.mxu0
        %1365 = vmatprep.mubr.f32.mxu0 0.0
        %1366 = vmatmul.mubr.f32.gmra.mxu0 %v1228
        %v1367 = vpop.f32.mrf.mxu0
        %v1368 = vadd.f32 0.0, %v1367
        %v1369 = vpop.f32.mrf.mxu0
        %1370 = vmatprep.mubr.f32.mxu0 0.0
        %1371 = vmatmul.mubr.f32.gmra.mxu0 %v1229
        %v1372 = vpop.f32.mrf.mxu0
        %v1373 = vadd.f32 0.0, %v1372
        %v1374 = vpop.f32.mrf.mxu0
        %1375 = vmatprep.mubr.f32.mxu0 0.0
        %1376 = vmatmul.mubr.f32.gmra.mxu0 %v1230
        %v1377 = vpop.f32.mrf.mxu0
        %v1378 = vadd.f32 0.0, %v1377
        %v1379 = vpop.f32.mrf.mxu0
        %1380 = vmatprep.mubr.f32.mxu0 0.0
        %1381 = vmatmul.mubr.f32.gmra.mxu0 %v1231
        %v1382 = vpop.f32.mrf.mxu0
        %v1383 = vadd.f32 0.0, %v1382
        %v1384 = vpop.f32.mrf.mxu0
        %1385 = vmatprep.mubr.f32.mxu0 0.0
        %1386 = vmatmul.mubr.f32.gmra.mxu0 %v1232
        %v1387 = vpop.f32.mrf.mxu0
        %v1388 = vadd.f32 0.0, %v1387
        %v1389 = vpop.f32.mrf.mxu0
        %1390 = vmatprep.mubr.f32.mxu0 0.0
        %1391 = vmatmul.mubr.f32.gmra.mxu0 %v1233
        %v1392 = vpop.f32.mrf.mxu0
        %v1393 = vadd.f32 0.0, %v1392
        %v1394 = vpop.f32.mrf.mxu0
        %1395 = vmatprep.mubr.f32.mxu0 0.0
        %1396 = vmatmul.mubr.f32.gmra.mxu0 %v1234
        %v1397 = vpop.f32.mrf.mxu0
        %v1398 = vadd.f32 0.0, %v1397
        %v1399 = vpop.f32.mrf.mxu0
        %1400 = vmatprep.mubr.f32.mxu0 0.0
        %1401 = vmatmul.mubr.f32.gmra.mxu0 %v1235
        %v1402 = vpop.f32.mrf.mxu0
        %v1403 = vadd.f32 0.0, %v1402
        %v1404 = vpop.f32.mrf.mxu0
        %1405 = vmatprep.mubr.f32.mxu0 0.0
        %1406 = vmatmul.mubr.f32.gmra.mxu0 %v1236
        %v1407 = vpop.f32.mrf.mxu0
        %v1408 = vadd.f32 0.0, %v1407
        %v1409 = vpop.f32.mrf.mxu0
        %1410 = vmatprep.mubr.f32.mxu0 0.0
        %1411 = vmatmul.mubr.f32.gmra.mxu0 %v1237
        %v1412 = vpop.f32.mrf.mxu0
        %v1413 = vadd.f32 0.0, %v1412
        %v1414 = vpop.f32.mrf.mxu0
        %1415 = vmatprep.mubr.f32.mxu0 0.0
        %1416 = vmatmul.mubr.f32.gmra.mxu0 %v1238
        %v1417 = vpop.f32.mrf.mxu0
        %v1418 = vadd.f32 0.0, %v1417
        %v1419 = vpop.f32.mrf.mxu0
        %1420 = vmatprep.mubr.f32.mxu0 0.0
        %1421 = vmatmul.mubr.f32.gmra.mxu0 %v1239
        %v1422 = vpop.f32.mrf.mxu0
        %v1423 = vadd.f32 0.0, %v1422
        %v1424 = vpop.f32.mrf.mxu0
        %1425 = vmatprep.mubr.f32.mxu0 0.0
        %1426 = vmatmul.mubr.f32.gmra.mxu0 %v1240
        %v1427 = vpop.f32.mrf.mxu0
        %v1428 = vadd.f32 0.0, %v1427
        %v1429 = vpop.f32.mrf.mxu0
        %1430 = vmatprep.mubr.f32.mxu0 0.0
        %1431 = vmatmul.mubr.f32.gmra.mxu0 %v1241
        %v1432 = vpop.f32.mrf.mxu0
        %v1433 = vadd.f32 0.0, %v1432
        %v1434 = vpop.f32.mrf.mxu0
        %1435 = vmatprep.mubr.f32.mxu0 0.0
        %1436 = vmatmul.mubr.f32.gmra.mxu0 %v1242
        %v1437 = vpop.f32.mrf.mxu0
        %v1438 = vadd.f32 0.0, %v1437
        %v1439 = vpop.f32.mrf.mxu0
        %1440 = vmatprep.mubr.f32.mxu0 0.0
        %1441 = vmatmul.mubr.f32.gmra.mxu0 %v1243
        %v1442 = vpop.f32.mrf.mxu0
        %v1443 = vadd.f32 0.0, %v1442
        %v1444 = vpop.f32.mrf.mxu0
        %1445 = vmatprep.mubr.f32.mxu0 0.0
        %1446 = vmatmul.mubr.f32.gmra.mxu0 %v1244
        %v1447 = vpop.f32.mrf.mxu0
        %v1448 = vadd.f32 0.0, %v1447
        %v1449 = vpop.f32.mrf.mxu0
        %1450 = vmatprep.mubr.f32.mxu0 0.0
        %1451 = vmatmul.mubr.f32.gmra.mxu0 %v1245
        %v1452 = vpop.f32.mrf.mxu0
        %v1453 = vadd.f32 0.0, %v1452
        %v1454 = vpop.f32.mrf.mxu0
        %1455 = vmatprep.mubr.f32.mxu0 0.0
        %1456 = vmatmul.mubr.f32.gmra.mxu0 %v1246
        %v1457 = vpop.f32.mrf.mxu0
        %v1458 = vadd.f32 0.0, %v1457
        %v1459 = vpop.f32.mrf.mxu0
        %1460 = vmatprep.mubr.f32.mxu0 0.0
        %1461 = vmatmul.mubr.f32.gmra.mxu0 %v1247
        %v1462 = vpop.f32.mrf.mxu0
        %v1463 = vadd.f32 0.0, %v1462
        %v1464 = vpop.f32.mrf.mxu0
        %1465 = vmatprep.mubr.f32.mxu0 0.0
        %1466 = vmatmul.mubr.f32.gmra.mxu0 %v1248
        %v1467 = vpop.f32.mrf.mxu0
        %v1468 = vadd.f32 0.0, %v1467
        %v1469 = vpop.f32.mrf.mxu0
        %1470 = vmatprep.mubr.f32.mxu0 0.0
        %1471 = vmatmul.mubr.f32.gmra.mxu0 %v1249
        %v1472 = vpop.f32.mrf.mxu0
        %v1473 = vadd.f32 0.0, %v1472
        %v1474 = vpop.f32.mrf.mxu0
        %1475 = vmatprep.mubr.f32.mxu0 0.0
        %1476 = vmatmul.mubr.f32.gmra.mxu0 %v1250
        %v1477 = vpop.f32.mrf.mxu0
        %v1478 = vadd.f32 0.0, %v1477
        %v1479 = vpop.f32.mrf.mxu0
        %1480 = vmatprep.mubr.f32.mxu0 0.0
        %1481 = vmatmul.mubr.f32.gmra.mxu0 %v1251
        %v1482 = vpop.f32.mrf.mxu0
        %v1483 = vadd.f32 0.0, %v1482
        %v1484 = vpop.f32.mrf.mxu0
        %1485 = vmatprep.mubr.f32.mxu0 0.0
        %1486 = vmatmul.mubr.f32.gmra.mxu0 %v1252
        %v1487 = vpop.f32.mrf.mxu0
        %v1488 = vadd.f32 0.0, %v1487
        %v1489 = vpop.f32.mrf.mxu0
        %1490 = vmatprep.mubr.f32.mxu0 0.0
        %1491 = vmatmul.mubr.f32.gmra.mxu0 %v1253
        %v1492 = vpop.f32.mrf.mxu0
        %v1493 = vadd.f32 0.0, %v1492
        %v1494 = vpop.f32.mrf.mxu0
        %1495 = vmatprep.mubr.f32.mxu0 0.0
        %1496 = vmatmul.mubr.f32.gmra.mxu0 %v1254
        %v1497 = vpop.f32.mrf.mxu0
        %v1498 = vadd.f32 0.0, %v1497
        %v1499 = vpop.f32.mrf.mxu0
        %1500 = vmatprep.mubr.f32.mxu0 0.0
        %1501 = vmatmul.mubr.f32.gmra.mxu0 %v1255
        %v1502 = vpop.f32.mrf.mxu0
        %v1503 = vadd.f32 0.0, %v1502
        %v1504 = vpop.f32.mrf.mxu0
        %1505 = vmatprep.mubr.f32.mxu0 0.0
        %1506 = vmatmul.mubr.f32.gmra.mxu0 %v1256
        %v1507 = vpop.f32.mrf.mxu0
        %v1508 = vadd.f32 0.0, %v1507
        %v1509 = vpop.f32.mrf.mxu0
        %1510 = vmatprep.mubr.f32.mxu0 0.0
        %1511 = vmatmul.mubr.f32.gmra.mxu0 %v1257
        %v1512 = vpop.f32.mrf.mxu0
        %v1513 = vadd.f32 0.0, %v1512
        %v1514 = vpop.f32.mrf.mxu0
        %1515 = vmatprep.mubr.f32.mxu0 0.0
        %1516 = vmatmul.mubr.f32.gmra.mxu0 %v1258
        %v1517 = vpop.f32.mrf.mxu0
        %v1518 = vadd.f32 0.0, %v1517
        %v1519 = vpop.f32.mrf.mxu0
        %1520 = vmatprep.mubr.f32.mxu0 0.0
        %1521 = vmatmul.mubr.f32.gmra.mxu0 %v1259
        %v1522 = vpop.f32.mrf.mxu0
        %v1523 = vadd.f32 0.0, %v1522
        %v1524 = vpop.f32.mrf.mxu0
        %1525 = vmatprep.mubr.f32.mxu0 0.0
        %1526 = vmatmul.mubr.f32.gmra.mxu0 %v1260
        %v1527 = vpop.f32.mrf.mxu0
        %v1528 = vadd.f32 0.0, %v1527
        %v1529 = vpop.f32.mrf.mxu0
        %1530 = vmatprep.mubr.f32.mxu0 0.0
        %1531 = vmatmul.mubr.f32.gmra.mxu0 %v1261
        %v1532 = vpop.f32.mrf.mxu0
        %v1533 = vadd.f32 0.0, %v1532
        %v1534 = vpop.f32.mrf.mxu0
        %1535 = vmatprep.mubr.f32.mxu0 0.0
        %1536 = vmatmul.mubr.f32.gmra.mxu0 %v1262
        %v1537 = vpop.f32.mrf.mxu0
        %v1538 = vadd.f32 0.0, %v1537
        %v1539 = vpop.f32.mrf.mxu0
        %1540 = vmatprep.mubr.f32.mxu0 0.0
        %1541 = vmatmul.mubr.f32.gmra.mxu0 %v1263
        %v1542 = vpop.f32.mrf.mxu0
        %v1543 = vadd.f32 0.0, %v1542
        %v1544 = vpop.f32.mrf.mxu0
        %1545 = vmatprep.mubr.f32.mxu0 0.0
        %1546 = vmatmul.mubr.f32.gmra.mxu0 %v1264
        %v1547 = vpop.f32.mrf.mxu0
        %v1548 = vadd.f32 0.0, %v1547
        %v1549 = vpop.f32.mrf.mxu0
        %1550 = vmatprep.mubr.f32.mxu0 0.0
        %1551 = vmatmul.mubr.f32.gmra.mxu0 %v1265
        %v1552 = vpop.f32.mrf.mxu0
        %v1553 = vadd.f32 0.0, %v1552
        %v1554 = vpop.f32.mrf.mxu0
        %1555 = vmatprep.mubr.f32.mxu0 0.0
        %1556 = vmatmul.mubr.f32.gmra.mxu0 %v1266
        %v1557 = vpop.f32.mrf.mxu0
        %v1558 = vadd.f32 0.0, %v1557
        %v1559 = vpop.f32.mrf.mxu0
        %1560 = vmatprep.mubr.f32.mxu0 0.0
        %1561 = vmatmul.mubr.f32.gmra.mxu0 %v1267
        %v1562 = vpop.f32.mrf.mxu0
        %v1563 = vadd.f32 0.0, %v1562
        %v1564 = vpop.f32.mrf.mxu0
        %1565 = vmatprep.mubr.f32.mxu0 0.0
        %1566 = vmatmul.mubr.f32.gmra.mxu0 %v1268
        %v1567 = vpop.f32.mrf.mxu0
        %v1568 = vadd.f32 0.0, %v1567
        %v1569 = vpop.f32.mrf.mxu0
        %1570 = vdwg.mxu0
        %v1571 = vlaneseq
        %v1572 = vshrl.u32 %v1571, 7
        %v1573 = vsub.s32 0, %v1572
        %v1574 = vrot.slane %v272, %v1573
        %1575 = vmatprep.subr.mxu0 0.0
        %1576 = vmatpush1.msra.mxu0 0.0
        %1577 = vmatprep.subr.mxu0 0.0
        %1578 = vmatpush1.msra.mxu0 0.0
        %1579 = vmatprep.subr.mxu0 0.0
        %1580 = vmatpush1.msra.mxu0 0.0
        %1581 = vmatprep.subr.mxu0 0.0
        %1582 = vmatpush1.msra.mxu0 0.0
        %1583 = vmatprep.subr.mxu0 0.0
        %1584 = vmatpush1.msra.mxu0 0.0
        %1585 = vmatprep.subr.mxu0 0.0
        %1586 = vmatpush1.msra.mxu0 %v1403
        %1587 = vmatprep.subr.mxu0 0.0
        %1588 = vmatpush1.msra.mxu0 %v1398
        %1589 = vmatprep.subr.mxu0 0.0
        %1590 = vmatpush1.msra.mxu0 %v1393
        %1591 = vmatprep.subr.mxu0 0.0
        %1592 = vmatpush1.msra.mxu0 %v1388
        %1593 = vmatprep.subr.mxu0 0.0
        %1594 = vmatpush1.msra.mxu0 %v1383
        %1595 = vmatprep.subr.mxu0 0.0
        %1596 = vmatpush1.msra.mxu0 %v1378
        %1597 = vmatprep.subr.mxu0 0.0
        %1598 = vmatpush1.msra.mxu0 %v1373
        %1599 = vmatprep.subr.mxu0 0.0
        %1600 = vmatpush1.msra.mxu0 %v1368
        %1601 = vmatprep.subr.mxu0 0.0
        %1602 = vmatpush1.msra.mxu0 %v1363
        %1603 = vmatprep.subr.mxu0 0.0
        %1604 = vmatpush1.msra.mxu0 %v1358
        %1605 = vmatprep.subr.mxu0 0.0
        %1606 = vmatpush1.msra.mxu0 %v1353
        %1607 = vmatprep.subr.mxu0 0.0
        %1608 = vmatpush2.msra.mxu0 0.0
        %1609 = vmatprep.subr.mxu0 0.0
        %1610 = vmatpush2.msra.mxu0 0.0
        %1611 = vmatprep.subr.mxu0 0.0
        %1612 = vmatpush2.msra.mxu0 0.0
        %1613 = vmatprep.subr.mxu0 0.0
        %1614 = vmatpush2.msra.mxu0 0.0
        %1615 = vmatprep.subr.mxu0 0.0
        %1616 = vmatpush2.msra.mxu0 0.0
        %1617 = vmatprep.subr.mxu0 0.0
        %1618 = vmatpush2.msra.mxu0 0.0
        %1619 = vmatprep.subr.mxu0 0.0
        %1620 = vmatpush2.msra.mxu0 0.0
        %1621 = vmatprep.subr.mxu0 0.0
        %1622 = vmatpush2.msra.mxu0 0.0
        %1623 = vmatprep.subr.mxu0 0.0
        %1624 = vmatpush2.msra.mxu0 0.0
        %1625 = vmatprep.subr.mxu0 0.0
        %1626 = vmatpush2.msra.mxu0 0.0
        %1627 = vmatprep.subr.mxu0 0.0
        %1628 = vmatpush2.msra.mxu0 0.0
        %1629 = vmatprep.subr.mxu0 0.0
        %1630 = vmatpush2.msra.mxu0 0.0
        %1631 = vmatprep.subr.mxu0 0.0
        %1632 = vmatpush2.msra.mxu0 0.0
        %1633 = vmatprep.subr.mxu0 0.0
        %1634 = vmatpush2.msra.mxu0 0.0
        %1635 = vmatprep.subr.mxu0 0.0
        %1636 = vmatpush2.msra.mxu0 0.0
        %1637 = vmatprep.subr.mxu0 0.0
        %1638 = vmatpush2.msra.mxu0 0.0
        %1639 = vmatprep.mubr.f32.mxu0 0.0
        %1640 = vmatmul.mubr.f32.gmra.mxu0 %v625
        %v1641 = vpop.f32.mrf.mxu0
        %v1642 = vadd.f32 %v1574, %v1641
        %v1643 = vpop.f32.mrf.mxu0
        %1644 = vmatprep.mubr.f32.mxu0 0.0
        %1645 = vmatmul.mubr.f32.gmra.mxu0 %v628
        %v1646 = vpop.f32.mrf.mxu0
        %v1647 = vadd.f32 %v1574, %v1646
        %v1648 = vpop.f32.mrf.mxu0
        %1649 = vmatprep.mubr.f32.mxu0 0.0
        %1650 = vmatmul.mubr.f32.gmra.mxu0 %v631
        %v1651 = vpop.f32.mrf.mxu0
        %v1652 = vadd.f32 %v1574, %v1651
        %v1653 = vpop.f32.mrf.mxu0
        %1654 = vmatprep.mubr.f32.mxu0 0.0
        %1655 = vmatmul.mubr.f32.gmra.mxu0 %v634
        %v1656 = vpop.f32.mrf.mxu0
        %v1657 = vadd.f32 %v1574, %v1656
        %v1658 = vpop.f32.mrf.mxu0
        %1659 = vmatprep.mubr.f32.mxu0 0.0
        %1660 = vmatmul.mubr.f32.gmra.mxu0 %v637
        %v1661 = vpop.f32.mrf.mxu0
        %v1662 = vadd.f32 %v1574, %v1661
        %v1663 = vpop.f32.mrf.mxu0
        %1664 = vmatprep.mubr.f32.mxu0 0.0
        %1665 = vmatmul.mubr.f32.gmra.mxu0 %v640
        %v1666 = vpop.f32.mrf.mxu0
        %v1667 = vadd.f32 %v1574, %v1666
        %v1668 = vpop.f32.mrf.mxu0
        %1669 = vmatprep.mubr.f32.mxu0 0.0
        %1670 = vmatmul.mubr.f32.gmra.mxu0 %v643
        %v1671 = vpop.f32.mrf.mxu0
        %v1672 = vadd.f32 %v1574, %v1671
        %v1673 = vpop.f32.mrf.mxu0
        %1674 = vmatprep.mubr.f32.mxu0 0.0
        %1675 = vmatmul.mubr.f32.gmra.mxu0 %v646
        %v1676 = vpop.f32.mrf.mxu0
        %v1677 = vadd.f32 %v1574, %v1676
        %v1678 = vpop.f32.mrf.mxu0
        %1679 = vmatprep.mubr.f32.mxu0 0.0
        %1680 = vmatmul.mubr.f32.gmra.mxu0 %v649
        %v1681 = vpop.f32.mrf.mxu0
        %v1682 = vadd.f32 %v1574, %v1681
        %v1683 = vpop.f32.mrf.mxu0
        %1684 = vmatprep.mubr.f32.mxu0 0.0
        %1685 = vmatmul.mubr.f32.gmra.mxu0 %v652
        %v1686 = vpop.f32.mrf.mxu0
        %v1687 = vadd.f32 %v1574, %v1686
        %v1688 = vpop.f32.mrf.mxu0
        %1689 = vmatprep.mubr.f32.mxu0 0.0
        %1690 = vmatmul.mubr.f32.gmra.mxu0 %v655
        %v1691 = vpop.f32.mrf.mxu0
        %v1692 = vadd.f32 %v1574, %v1691
        %v1693 = vpop.f32.mrf.mxu0
        %1694 = vdwg.mxu0
        %v1695 = vmax.f32 %v1642, 0.0
        %v1696 = vmax.f32 %v1647, 0.0
        %v1697 = vmax.f32 %v1652, 0.0
        %v1698 = vmax.f32 %v1657, 0.0
        %v1699 = vmax.f32 %v1662, 0.0
        %v1700 = vmax.f32 %v1667, 0.0
        %v1701 = vmax.f32 %v1672, 0.0
        %v1702 = vmax.f32 %v1677, 0.0
        %v1703 = vmax.f32 %v1682, 0.0
        %v1704 = vmax.f32 %v1687, 0.0
        %v1705 = vmax.f32 %v1692, 0.0
        %1706 = vst [vmem:[#allocation2] sm:$0xff] %v1695
        %1707 = vst [vmem:[#allocation2 + $0x8] sm:$0xff] %v1696
        %1708 = vst [vmem:[#allocation2 + $0x10] sm:$0xff] %v1697
        %1709 = vst [vmem:[#allocation2 + $0x18] sm:$0xff] %v1698
        %1710 = vst [vmem:[#allocation2 + $0x20] sm:$0xff] %v1699
        %1711 = vst [vmem:[#allocation2 + $0x28] sm:$0xff] %v1700
        %1712 = vst [vmem:[#allocation2 + $0x30] sm:$0xff] %v1701
        %1713 = vst [vmem:[#allocation2 + $0x38] sm:$0xff] %v1702
        %1714 = vst [vmem:[#allocation2 + $0x40] sm:$0xff] %v1703
        %1715 = vst [vmem:[#allocation2 + $0x48] sm:$0xff] %v1704
        %1716 = vst [vmem:[#allocation2 + $0x50] sm:$0xff] %v1705
        %1717 = vmatprep.subr.mxu0 0.0
        %1718 = vmatpush1.msra.mxu0 0.0
        %1719 = vmatprep.subr.mxu0 0.0
        %1720 = vmatpush1.msra.mxu0 0.0
        %1721 = vmatprep.subr.mxu0 0.0
        %1722 = vmatpush1.msra.mxu0 0.0
        %1723 = vmatprep.subr.mxu0 0.0
        %1724 = vmatpush1.msra.mxu0 0.0
        %1725 = vmatprep.subr.mxu0 0.0
        %1726 = vmatpush1.msra.mxu0 0.0
        %1727 = vmatprep.subr.mxu0 0.0
        %1728 = vmatpush1.msra.mxu0 %v1458
        %1729 = vmatprep.subr.mxu0 0.0
        %1730 = vmatpush1.msra.mxu0 %v1453
        %1731 = vmatprep.subr.mxu0 0.0
        %1732 = vmatpush1.msra.mxu0 %v1448
        %1733 = vmatprep.subr.mxu0 0.0
        %1734 = vmatpush1.msra.mxu0 %v1443
        %1735 = vmatprep.subr.mxu0 0.0
        %1736 = vmatpush1.msra.mxu0 %v1438
        %1737 = vmatprep.subr.mxu0 0.0
        %1738 = vmatpush1.msra.mxu0 %v1433
        %1739 = vmatprep.subr.mxu0 0.0
        %1740 = vmatpush1.msra.mxu0 %v1428
        %1741 = vmatprep.subr.mxu0 0.0
        %1742 = vmatpush1.msra.mxu0 %v1423
        %1743 = vmatprep.subr.mxu0 0.0
        %1744 = vmatpush1.msra.mxu0 %v1418
        %1745 = vmatprep.subr.mxu0 0.0
        %1746 = vmatpush1.msra.mxu0 %v1413
        %1747 = vmatprep.subr.mxu0 0.0
        %1748 = vmatpush1.msra.mxu0 %v1408
        %1749 = vmatprep.subr.mxu0 0.0
        %1750 = vmatpush2.msra.mxu0 0.0
        %1751 = vmatprep.subr.mxu0 0.0
        %1752 = vmatpush2.msra.mxu0 0.0
        %1753 = vmatprep.subr.mxu0 0.0
        %1754 = vmatpush2.msra.mxu0 0.0
        %1755 = vmatprep.subr.mxu0 0.0
        %1756 = vmatpush2.msra.mxu0 0.0
        %1757 = vmatprep.subr.mxu0 0.0
        %1758 = vmatpush2.msra.mxu0 0.0
        %1759 = vmatprep.subr.mxu0 0.0
        %1760 = vmatpush2.msra.mxu0 0.0
        %1761 = vmatprep.subr.mxu0 0.0
        %1762 = vmatpush2.msra.mxu0 0.0
        %1763 = vmatprep.subr.mxu0 0.0
        %1764 = vmatpush2.msra.mxu0 0.0
        %1765 = vmatprep.subr.mxu0 0.0
        %1766 = vmatpush2.msra.mxu0 0.0
        %1767 = vmatprep.subr.mxu0 0.0
        %1768 = vmatpush2.msra.mxu0 0.0
        %1769 = vmatprep.subr.mxu0 0.0
        %1770 = vmatpush2.msra.mxu0 0.0
        %1771 = vmatprep.subr.mxu0 0.0
        %1772 = vmatpush2.msra.mxu0 0.0
        %1773 = vmatprep.subr.mxu0 0.0
        %1774 = vmatpush2.msra.mxu0 0.0
        %1775 = vmatprep.subr.mxu0 0.0
        %1776 = vmatpush2.msra.mxu0 0.0
        %1777 = vmatprep.subr.mxu0 0.0
        %1778 = vmatpush2.msra.mxu0 0.0
        %1779 = vmatprep.subr.mxu0 0.0
        %1780 = vmatpush2.msra.mxu0 0.0
        %1781 = vmatprep.mubr.f32.mxu0 0.0
        %1782 = vmatmul.mubr.f32.gmra.mxu0 %v625
        %v1783 = vpop.f32.mrf.mxu0
        %v1784 = vadd.f32 %v1574, %v1783
        %v1785 = vpop.f32.mrf.mxu0
        %1786 = vmatprep.mubr.f32.mxu0 0.0
        %1787 = vmatmul.mubr.f32.gmra.mxu0 %v628
        %v1788 = vpop.f32.mrf.mxu0
        %v1789 = vadd.f32 %v1574, %v1788
        %v1790 = vpop.f32.mrf.mxu0
        %1791 = vmatprep.mubr.f32.mxu0 0.0
        %1792 = vmatmul.mubr.f32.gmra.mxu0 %v631
        %v1793 = vpop.f32.mrf.mxu0
        %v1794 = vadd.f32 %v1574, %v1793
        %v1795 = vpop.f32.mrf.mxu0
        %1796 = vmatprep.mubr.f32.mxu0 0.0
        %1797 = vmatmul.mubr.f32.gmra.mxu0 %v634
        %v1798 = vpop.f32.mrf.mxu0
        %v1799 = vadd.f32 %v1574, %v1798
        %v1800 = vpop.f32.mrf.mxu0
        %1801 = vmatprep.mubr.f32.mxu0 0.0
        %1802 = vmatmul.mubr.f32.gmra.mxu0 %v637
        %v1803 = vpop.f32.mrf.mxu0
        %v1804 = vadd.f32 %v1574, %v1803
        %v1805 = vpop.f32.mrf.mxu0
        %1806 = vmatprep.mubr.f32.mxu0 0.0
        %1807 = vmatmul.mubr.f32.gmra.mxu0 %v640
        %v1808 = vpop.f32.mrf.mxu0
        %v1809 = vadd.f32 %v1574, %v1808
        %v1810 = vpop.f32.mrf.mxu0
        %1811 = vmatprep.mubr.f32.mxu0 0.0
        %1812 = vmatmul.mubr.f32.gmra.mxu0 %v643
        %v1813 = vpop.f32.mrf.mxu0
        %v1814 = vadd.f32 %v1574, %v1813
        %v1815 = vpop.f32.mrf.mxu0
        %1816 = vmatprep.mubr.f32.mxu0 0.0
        %1817 = vmatmul.mubr.f32.gmra.mxu0 %v646
        %v1818 = vpop.f32.mrf.mxu0
        %v1819 = vadd.f32 %v1574, %v1818
        %v1820 = vpop.f32.mrf.mxu0
        %1821 = vmatprep.mubr.f32.mxu0 0.0
        %1822 = vmatmul.mubr.f32.gmra.mxu0 %v649
        %v1823 = vpop.f32.mrf.mxu0
        %v1824 = vadd.f32 %v1574, %v1823
        %v1825 = vpop.f32.mrf.mxu0
        %1826 = vmatprep.mubr.f32.mxu0 0.0
        %1827 = vmatmul.mubr.f32.gmra.mxu0 %v652
        %v1828 = vpop.f32.mrf.mxu0
        %v1829 = vadd.f32 %v1574, %v1828
        %v1830 = vpop.f32.mrf.mxu0
        %1831 = vmatprep.mubr.f32.mxu0 0.0
        %1832 = vmatmul.mubr.f32.gmra.mxu0 %v655
        %v1833 = vpop.f32.mrf.mxu0
        %v1834 = vadd.f32 %v1574, %v1833
        %v1835 = vpop.f32.mrf.mxu0
        %1836 = vdwg.mxu0
        %v1837 = vmax.f32 %v1784, 0.0
        %v1838 = vmax.f32 %v1789, 0.0
        %v1839 = vmax.f32 %v1794, 0.0
        %v1840 = vmax.f32 %v1799, 0.0
        %v1841 = vmax.f32 %v1804, 0.0
        %v1842 = vmax.f32 %v1809, 0.0
        %v1843 = vmax.f32 %v1814, 0.0
        %v1844 = vmax.f32 %v1819, 0.0
        %v1845 = vmax.f32 %v1824, 0.0
        %v1846 = vmax.f32 %v1829, 0.0
        %v1847 = vmax.f32 %v1834, 0.0
        %1848 = vst [vmem:[#allocation2 + $0x58] sm:$0xff] %v1837
        %1849 = vst [vmem:[#allocation2 + $0x60] sm:$0xff] %v1838
        %1850 = vst [vmem:[#allocation2 + $0x68] sm:$0xff] %v1839
        %1851 = vst [vmem:[#allocation2 + $0x70] sm:$0xff] %v1840
        %1852 = vst [vmem:[#allocation2 + $0x78] sm:$0xff] %v1841
        %1853 = vst [vmem:[#allocation2 + $0x80] sm:$0xff] %v1842
        %1854 = vst [vmem:[#allocation2 + $0x88] sm:$0xff] %v1843
        %1855 = vst [vmem:[#allocation2 + $0x90] sm:$0xff] %v1844
        %1856 = vst [vmem:[#allocation2 + $0x98] sm:$0xff] %v1845
        %1857 = vst [vmem:[#allocation2 + $0xa0] sm:$0xff] %v1846
        %1858 = vst [vmem:[#allocation2 + $0xa8] sm:$0xff] %v1847
        %1859 = vmatprep.subr.mxu0 0.0
        %1860 = vmatpush1.msra.mxu0 0.0
        %1861 = vmatprep.subr.mxu0 0.0
        %1862 = vmatpush1.msra.mxu0 0.0
        %1863 = vmatprep.subr.mxu0 0.0
        %1864 = vmatpush1.msra.mxu0 0.0
        %1865 = vmatprep.subr.mxu0 0.0
        %1866 = vmatpush1.msra.mxu0 0.0
        %1867 = vmatprep.subr.mxu0 0.0
        %1868 = vmatpush1.msra.mxu0 0.0
        %1869 = vmatprep.subr.mxu0 0.0
        %1870 = vmatpush1.msra.mxu0 %v1513
        %1871 = vmatprep.subr.mxu0 0.0
        %1872 = vmatpush1.msra.mxu0 %v1508
        %1873 = vmatprep.subr.mxu0 0.0
        %1874 = vmatpush1.msra.mxu0 %v1503
        %1875 = vmatprep.subr.mxu0 0.0
        %1876 = vmatpush1.msra.mxu0 %v1498
        %1877 = vmatprep.subr.mxu0 0.0
        %1878 = vmatpush1.msra.mxu0 %v1493
        %1879 = vmatprep.subr.mxu0 0.0
        %1880 = vmatpush1.msra.mxu0 %v1488
        %1881 = vmatprep.subr.mxu0 0.0
        %1882 = vmatpush1.msra.mxu0 %v1483
        %1883 = vmatprep.subr.mxu0 0.0
        %1884 = vmatpush1.msra.mxu0 %v1478
        %1885 = vmatprep.subr.mxu0 0.0
        %1886 = vmatpush1.msra.mxu0 %v1473
        %1887 = vmatprep.subr.mxu0 0.0
        %1888 = vmatpush1.msra.mxu0 %v1468
        %1889 = vmatprep.subr.mxu0 0.0
        %1890 = vmatpush1.msra.mxu0 %v1463
        %1891 = vmatprep.subr.mxu0 0.0
        %1892 = vmatpush2.msra.mxu0 0.0
        %1893 = vmatprep.subr.mxu0 0.0
        %1894 = vmatpush2.msra.mxu0 0.0
        %1895 = vmatprep.subr.mxu0 0.0
        %1896 = vmatpush2.msra.mxu0 0.0
        %1897 = vmatprep.subr.mxu0 0.0
        %1898 = vmatpush2.msra.mxu0 0.0
        %1899 = vmatprep.subr.mxu0 0.0
        %1900 = vmatpush2.msra.mxu0 0.0
        %1901 = vmatprep.subr.mxu0 0.0
        %1902 = vmatpush2.msra.mxu0 0.0
        %1903 = vmatprep.subr.mxu0 0.0
        %1904 = vmatpush2.msra.mxu0 0.0
        %1905 = vmatprep.subr.mxu0 0.0
        %1906 = vmatpush2.msra.mxu0 0.0
        %1907 = vmatprep.subr.mxu0 0.0
        %1908 = vmatpush2.msra.mxu0 0.0
        %1909 = vmatprep.subr.mxu0 0.0
        %1910 = vmatpush2.msra.mxu0 0.0
        %1911 = vmatprep.subr.mxu0 0.0
        %1912 = vmatpush2.msra.mxu0 0.0
        %1913 = vmatprep.subr.mxu0 0.0
        %1914 = vmatpush2.msra.mxu0 0.0
        %1915 = vmatprep.subr.mxu0 0.0
        %1916 = vmatpush2.msra.mxu0 0.0
        %1917 = vmatprep.subr.mxu0 0.0
        %1918 = vmatpush2.msra.mxu0 0.0
        %1919 = vmatprep.subr.mxu0 0.0
        %1920 = vmatpush2.msra.mxu0 0.0
        %1921 = vmatprep.subr.mxu0 0.0
        %1922 = vmatpush2.msra.mxu0 0.0
        %1923 = vmatprep.mubr.f32.mxu0 0.0
        %1924 = vmatmul.mubr.f32.gmra.mxu0 %v625
        %v1925 = vpop.f32.mrf.mxu0
        %v1926 = vadd.f32 %v1574, %v1925
        %v1927 = vpop.f32.mrf.mxu0
        %1928 = vmatprep.mubr.f32.mxu0 0.0
        %1929 = vmatmul.mubr.f32.gmra.mxu0 %v628
        %v1930 = vpop.f32.mrf.mxu0
        %v1931 = vadd.f32 %v1574, %v1930
        %v1932 = vpop.f32.mrf.mxu0
        %1933 = vmatprep.mubr.f32.mxu0 0.0
        %1934 = vmatmul.mubr.f32.gmra.mxu0 %v631
        %v1935 = vpop.f32.mrf.mxu0
        %v1936 = vadd.f32 %v1574, %v1935
        %v1937 = vpop.f32.mrf.mxu0
        %1938 = vmatprep.mubr.f32.mxu0 0.0
        %1939 = vmatmul.mubr.f32.gmra.mxu0 %v634
        %v1940 = vpop.f32.mrf.mxu0
        %v1941 = vadd.f32 %v1574, %v1940
        %v1942 = vpop.f32.mrf.mxu0
        %1943 = vmatprep.mubr.f32.mxu0 0.0
        %1944 = vmatmul.mubr.f32.gmra.mxu0 %v637
        %v1945 = vpop.f32.mrf.mxu0
        %v1946 = vadd.f32 %v1574, %v1945
        %v1947 = vpop.f32.mrf.mxu0
        %1948 = vmatprep.mubr.f32.mxu0 0.0
        %1949 = vmatmul.mubr.f32.gmra.mxu0 %v640
        %v1950 = vpop.f32.mrf.mxu0
        %v1951 = vadd.f32 %v1574, %v1950
        %v1952 = vpop.f32.mrf.mxu0
        %1953 = vmatprep.mubr.f32.mxu0 0.0
        %1954 = vmatmul.mubr.f32.gmra.mxu0 %v643
        %v1955 = vpop.f32.mrf.mxu0
        %v1956 = vadd.f32 %v1574, %v1955
        %v1957 = vpop.f32.mrf.mxu0
        %1958 = vmatprep.mubr.f32.mxu0 0.0
        %1959 = vmatmul.mubr.f32.gmra.mxu0 %v646
        %v1960 = vpop.f32.mrf.mxu0
        %v1961 = vadd.f32 %v1574, %v1960
        %v1962 = vpop.f32.mrf.mxu0
        %1963 = vmatprep.mubr.f32.mxu0 0.0
        %1964 = vmatmul.mubr.f32.gmra.mxu0 %v649
        %v1965 = vpop.f32.mrf.mxu0
        %v1966 = vadd.f32 %v1574, %v1965
        %v1967 = vpop.f32.mrf.mxu0
        %1968 = vmatprep.mubr.f32.mxu0 0.0
        %1969 = vmatmul.mubr.f32.gmra.mxu0 %v652
        %v1970 = vpop.f32.mrf.mxu0
        %v1971 = vadd.f32 %v1574, %v1970
        %v1972 = vpop.f32.mrf.mxu0
        %1973 = vmatprep.mubr.f32.mxu0 0.0
        %1974 = vmatmul.mubr.f32.gmra.mxu0 %v655
        %v1975 = vpop.f32.mrf.mxu0
        %v1976 = vadd.f32 %v1574, %v1975
        %v1977 = vpop.f32.mrf.mxu0
        %1978 = vdwg.mxu0
        %v1979 = vmax.f32 %v1926, 0.0
        %v1980 = vmax.f32 %v1931, 0.0
        %v1981 = vmax.f32 %v1936, 0.0
        %v1982 = vmax.f32 %v1941, 0.0
        %v1983 = vmax.f32 %v1946, 0.0
        %v1984 = vmax.f32 %v1951, 0.0
        %v1985 = vmax.f32 %v1956, 0.0
        %v1986 = vmax.f32 %v1961, 0.0
        %v1987 = vmax.f32 %v1966, 0.0
        %v1988 = vmax.f32 %v1971, 0.0
        %v1989 = vmax.f32 %v1976, 0.0
        %1990 = vst [vmem:[#allocation2 + $0xb0] sm:$0xff] %v1979
        %1991 = vst [vmem:[#allocation2 + $0xb8] sm:$0xff] %v1980
        %1992 = vst [vmem:[#allocation2 + $0xc0] sm:$0xff] %v1981
        %1993 = vst [vmem:[#allocation2 + $0xc8] sm:$0xff] %v1982
        %1994 = vst [vmem:[#allocation2 + $0xd0] sm:$0xff] %v1983
        %1995 = vst [vmem:[#allocation2 + $0xd8] sm:$0xff] %v1984
        %1996 = vst [vmem:[#allocation2 + $0xe0] sm:$0xff] %v1985
        %1997 = vst [vmem:[#allocation2 + $0xe8] sm:$0xff] %v1986
        %1998 = vst [vmem:[#allocation2 + $0xf0] sm:$0xff] %v1987
        %1999 = vst [vmem:[#allocation2 + $0xf8] sm:$0xff] %v1988
        %2000 = vst [vmem:[#allocation2 + $0x100] sm:$0xff] %v1989
        %2001 = vmatprep.subr.mxu0 0.0
        %2002 = vmatpush1.msra.mxu0 0.0
        %2003 = vmatprep.subr.mxu0 0.0
        %2004 = vmatpush1.msra.mxu0 0.0
        %2005 = vmatprep.subr.mxu0 0.0
        %2006 = vmatpush1.msra.mxu0 0.0
        %2007 = vmatprep.subr.mxu0 0.0
        %2008 = vmatpush1.msra.mxu0 0.0
        %2009 = vmatprep.subr.mxu0 0.0
        %2010 = vmatpush1.msra.mxu0 0.0
        %2011 = vmatprep.subr.mxu0 0.0
        %2012 = vmatpush1.msra.mxu0 %v1568
        %2013 = vmatprep.subr.mxu0 0.0
        %2014 = vmatpush1.msra.mxu0 %v1563
        %2015 = vmatprep.subr.mxu0 0.0
        %2016 = vmatpush1.msra.mxu0 %v1558
        %2017 = vmatprep.subr.mxu0 0.0
        %2018 = vmatpush1.msra.mxu0 %v1553
        %2019 = vmatprep.subr.mxu0 0.0
        %2020 = vmatpush1.msra.mxu0 %v1548
        %2021 = vmatprep.subr.mxu0 0.0
        %2022 = vmatpush1.msra.mxu0 %v1543
        %2023 = vmatprep.subr.mxu0 0.0
        %2024 = vmatpush1.msra.mxu0 %v1538
        %2025 = vmatprep.subr.mxu0 0.0
        %2026 = vmatpush1.msra.mxu0 %v1533
        %2027 = vmatprep.subr.mxu0 0.0
        %2028 = vmatpush1.msra.mxu0 %v1528
        %2029 = vmatprep.subr.mxu0 0.0
        %2030 = vmatpush1.msra.mxu0 %v1523
        %2031 = vmatprep.subr.mxu0 0.0
        %2032 = vmatpush1.msra.mxu0 %v1518
        %2033 = vmatprep.subr.mxu0 0.0
        %2034 = vmatpush2.msra.mxu0 0.0
        %2035 = vmatprep.subr.mxu0 0.0
        %2036 = vmatpush2.msra.mxu0 0.0
        %2037 = vmatprep.subr.mxu0 0.0
        %2038 = vmatpush2.msra.mxu0 0.0
        %2039 = vmatprep.subr.mxu0 0.0
        %2040 = vmatpush2.msra.mxu0 0.0
        %2041 = vmatprep.subr.mxu0 0.0
        %2042 = vmatpush2.msra.mxu0 0.0
        %2043 = vmatprep.subr.mxu0 0.0
        %2044 = vmatpush2.msra.mxu0 0.0
        %2045 = vmatprep.subr.mxu0 0.0
        %2046 = vmatpush2.msra.mxu0 0.0
        %2047 = vmatprep.subr.mxu0 0.0
        %2048 = vmatpush2.msra.mxu0 0.0
        %2049 = vmatprep.subr.mxu0 0.0
        %2050 = vmatpush2.msra.mxu0 0.0
        %2051 = vmatprep.subr.mxu0 0.0
        %2052 = vmatpush2.msra.mxu0 0.0
        %2053 = vmatprep.subr.mxu0 0.0
        %2054 = vmatpush2.msra.mxu0 0.0
        %2055 = vmatprep.subr.mxu0 0.0
        %2056 = vmatpush2.msra.mxu0 0.0
        %2057 = vmatprep.subr.mxu0 0.0
        %2058 = vmatpush2.msra.mxu0 0.0
        %2059 = vmatprep.subr.mxu0 0.0
        %2060 = vmatpush2.msra.mxu0 0.0
        %2061 = vmatprep.subr.mxu0 0.0
        %2062 = vmatpush2.msra.mxu0 0.0
        %2063 = vmatprep.subr.mxu0 0.0
        %2064 = vmatpush2.msra.mxu0 0.0
        %2065 = vmatprep.mubr.f32.mxu0 0.0
        %2066 = vmatmul.mubr.f32.gmra.mxu0 %v625
        %v2067 = vpop.f32.mrf.mxu0
        %v2068 = vadd.f32 %v1574, %v2067
        %v2069 = vpop.f32.mrf.mxu0
        %2070 = vmatprep.mubr.f32.mxu0 0.0
        %2071 = vmatmul.mubr.f32.gmra.mxu0 %v628
        %v2072 = vpop.f32.mrf.mxu0
        %v2073 = vadd.f32 %v1574, %v2072
        %v2074 = vpop.f32.mrf.mxu0
        %2075 = vmatprep.mubr.f32.mxu0 0.0
        %2076 = vmatmul.mubr.f32.gmra.mxu0 %v631
        %v2077 = vpop.f32.mrf.mxu0
        %v2078 = vadd.f32 %v1574, %v2077
        %v2079 = vpop.f32.mrf.mxu0
        %2080 = vmatprep.mubr.f32.mxu0 0.0
        %2081 = vmatmul.mubr.f32.gmra.mxu0 %v634
        %v2082 = vpop.f32.mrf.mxu0
        %v2083 = vadd.f32 %v1574, %v2082
        %v2084 = vpop.f32.mrf.mxu0
        %2085 = vmatprep.mubr.f32.mxu0 0.0
        %2086 = vmatmul.mubr.f32.gmra.mxu0 %v637
        %v2087 = vpop.f32.mrf.mxu0
        %v2088 = vadd.f32 %v1574, %v2087
        %v2089 = vpop.f32.mrf.mxu0
        %2090 = vmatprep.mubr.f32.mxu0 0.0
        %2091 = vmatmul.mubr.f32.gmra.mxu0 %v640
        %v2092 = vpop.f32.mrf.mxu0
        %v2093 = vadd.f32 %v1574, %v2092
        %v2094 = vpop.f32.mrf.mxu0
        %2095 = vmatprep.mubr.f32.mxu0 0.0
        %2096 = vmatmul.mubr.f32.gmra.mxu0 %v643
        %v2097 = vpop.f32.mrf.mxu0
        %v2098 = vadd.f32 %v1574, %v2097
        %v2099 = vpop.f32.mrf.mxu0
        %2100 = vmatprep.mubr.f32.mxu0 0.0
        %2101 = vmatmul.mubr.f32.gmra.mxu0 %v646
        %v2102 = vpop.f32.mrf.mxu0
        %v2103 = vadd.f32 %v1574, %v2102
        %v2104 = vpop.f32.mrf.mxu0
        %2105 = vmatprep.mubr.f32.mxu0 0.0
        %2106 = vmatmul.mubr.f32.gmra.mxu0 %v649
        %v2107 = vpop.f32.mrf.mxu0
        %v2108 = vadd.f32 %v1574, %v2107
        %v2109 = vpop.f32.mrf.mxu0
        %2110 = vmatprep.mubr.f32.mxu0 0.0
        %2111 = vmatmul.mubr.f32.gmra.mxu0 %v652
        %v2112 = vpop.f32.mrf.mxu0
        %v2113 = vadd.f32 %v1574, %v2112
        %v2114 = vpop.f32.mrf.mxu0
        %2115 = vmatprep.mubr.f32.mxu0 0.0
        %2116 = vmatmul.mubr.f32.gmra.mxu0 %v655
        %v2117 = vpop.f32.mrf.mxu0
        %v2118 = vadd.f32 %v1574, %v2117
        %v2119 = vpop.f32.mrf.mxu0
        %2120 = vdwg.mxu0
        %v2121 = vmax.f32 %v2068, 0.0
        %v2122 = vmax.f32 %v2073, 0.0
        %v2123 = vmax.f32 %v2078, 0.0
        %v2124 = vmax.f32 %v2083, 0.0
        %v2125 = vmax.f32 %v2088, 0.0
        %v2126 = vmax.f32 %v2093, 0.0
        %v2127 = vmax.f32 %v2098, 0.0
        %v2128 = vmax.f32 %v2103, 0.0
        %v2129 = vmax.f32 %v2108, 0.0
        %v2130 = vmax.f32 %v2113, 0.0
        %v2131 = vmax.f32 %v2118, 0.0
        %2132 = vst [vmem:[#allocation2 + $0x108] sm:$0xff] %v2121
        %2133 = vst [vmem:[#allocation2 + $0x110] sm:$0xff] %v2122
        %2134 = vst [vmem:[#allocation2 + $0x118] sm:$0xff] %v2123
        %2135 = vst [vmem:[#allocation2 + $0x120] sm:$0xff] %v2124
        %2136 = vst [vmem:[#allocation2 + $0x128] sm:$0xff] %v2125
        %2137 = vst [vmem:[#allocation2 + $0x130] sm:$0xff] %v2126
        %2138 = vst [vmem:[#allocation2 + $0x138] sm:$0xff] %v2127
        %2139 = vst [vmem:[#allocation2 + $0x140] sm:$0xff] %v2128
        %2140 = vst [vmem:[#allocation2 + $0x148] sm:$0xff] %v2129
        %2141 = vst [vmem:[#allocation2 + $0x150] sm:$0xff] %v2130
        %2142 = vst [vmem:[#allocation2 + $0x158] sm:$0xff] %v2131
        %v2143 = vld [vmem:[#allocation2] sm:$0xff]
        %v2144 = vld [vmem:[#allocation2 + $0x8] sm:$0xff]
        %v2145 = vld [vmem:[#allocation2 + $0x10] sm:$0xff]
        %v2146 = vld [vmem:[#allocation2 + $0x18] sm:$0xff]
        %v2147 = vld [vmem:[#allocation2 + $0x20] sm:$0xff]
        %v2148 = vld [vmem:[#allocation2 + $0x28] sm:$0xff]
        %v2149 = vld [vmem:[#allocation2 + $0x30] sm:$0xff]
        %v2150 = vld [vmem:[#allocation2 + $0x38] sm:$0xff]
        %v2151 = vld [vmem:[#allocation2 + $0x40] sm:$0xff]
        %v2152 = vld [vmem:[#allocation2 + $0x48] sm:$0xff]
        %v2153 = vld [vmem:[#allocation2 + $0x50] sm:$0xff]
        %v2154 = vld [vmem:[#allocation2 + $0x58] sm:$0xff]
        %v2155 = vld [vmem:[#allocation2 + $0x60] sm:$0xff]
        %v2156 = vld [vmem:[#allocation2 + $0x68] sm:$0xff]
        %v2157 = vld [vmem:[#allocation2 + $0x70] sm:$0xff]
        %v2158 = vld [vmem:[#allocation2 + $0x78] sm:$0xff]
        %v2159 = vld [vmem:[#allocation2 + $0x80] sm:$0xff]
        %v2160 = vld [vmem:[#allocation2 + $0x88] sm:$0xff]
        %v2161 = vld [vmem:[#allocation2 + $0x90] sm:$0xff]
        %v2162 = vld [vmem:[#allocation2 + $0x98] sm:$0xff]
        %v2163 = vld [vmem:[#allocation2 + $0xa0] sm:$0xff]
        %v2164 = vld [vmem:[#allocation2 + $0xa8] sm:$0xff]
        %v2165 = vld [vmem:[#allocation2 + $0xb0] sm:$0xff]
        %v2166 = vld [vmem:[#allocation2 + $0xb8] sm:$0xff]
        %v2167 = vld [vmem:[#allocation2 + $0xc0] sm:$0xff]
        %v2168 = vld [vmem:[#allocation2 + $0xc8] sm:$0xff]
        %v2169 = vld [vmem:[#allocation2 + $0xd0] sm:$0xff]
        %v2170 = vld [vmem:[#allocation2 + $0xd8] sm:$0xff]
        %v2171 = vld [vmem:[#allocation2 + $0xe0] sm:$0xff]
        %v2172 = vld [vmem:[#allocation2 + $0xe8] sm:$0xff]
        %v2173 = vld [vmem:[#allocation2 + $0xf0] sm:$0xff]
        %v2174 = vld [vmem:[#allocation2 + $0xf8] sm:$0xff]
        %v2175 = vld [vmem:[#allocation2 + $0x100] sm:$0xff]
        %v2176 = vld [vmem:[#allocation2 + $0x108] sm:$0xff]
        %v2177 = vld [vmem:[#allocation2 + $0x110] sm:$0xff]
        %v2178 = vld [vmem:[#allocation2 + $0x118] sm:$0xff]
        %v2179 = vld [vmem:[#allocation2 + $0x120] sm:$0xff]
        %v2180 = vld [vmem:[#allocation2 + $0x128] sm:$0xff]
        %v2181 = vld [vmem:[#allocation2 + $0x130] sm:$0xff]
        %v2182 = vld [vmem:[#allocation2 + $0x138] sm:$0xff]
        %v2183 = vld [vmem:[#allocation2 + $0x140] sm:$0xff]
        %v2184 = vld [vmem:[#allocation2 + $0x148] sm:$0xff]
        %v2185 = vld [vmem:[#allocation2 + $0x150] sm:$0xff]
        %v2186 = vld [vmem:[#allocation2 + $0x158] sm:$0xff]
        %s2187 = scalar_lea.vmem [#allocation6], 256
        %v2188 = vld [vmem:[%s2187] sm:$0xff]
        %v2189 = vld [vmem:[%s2187 + $0x8] sm:$0xff]
        %v2190 = vld [vmem:[%s2187 + $0x10] sm:$0xff]
        %v2191 = vld [vmem:[%s2187 + $0x18] sm:$0xff]
        %v2192 = vld [vmem:[%s2187 + $0x20] sm:$0xff]
        %v2193 = vld [vmem:[%s2187 + $0x28] sm:$0xff]
        %v2194 = vld [vmem:[%s2187 + $0x30] sm:$0xff]
        %v2195 = vld [vmem:[%s2187 + $0x38] sm:$0xff]
        %v2196 = vld [vmem:[%s2187 + $0x40] sm:$0xff]
        %v2197 = vld [vmem:[%s2187 + $0x48] sm:$0xff]
        %v2198 = vld [vmem:[%s2187 + $0x50] sm:$0xff]
        %v2199 = vld [vmem:[%s2187 + $0x58] sm:$0xff]
        %v2200 = vld [vmem:[%s2187 + $0x60] sm:$0xff]
        %v2201 = vld [vmem:[%s2187 + $0x68] sm:$0xff]
        %v2202 = vld [vmem:[%s2187 + $0x70] sm:$0xff]
        %v2203 = vld [vmem:[%s2187 + $0x78] sm:$0xff]
        %2204 = vmatprep.subr.mxu0 0.0
        %2205 = vmatpush1.msra.mxu0 %v2203
        %2206 = vmatprep.subr.mxu0 0.0
        %2207 = vmatpush1.msra.mxu0 %v2202
        %2208 = vmatprep.subr.mxu0 0.0
        %2209 = vmatpush1.msra.mxu0 %v2201
        %2210 = vmatprep.subr.mxu0 0.0
        %2211 = vmatpush1.msra.mxu0 %v2200
        %2212 = vmatprep.subr.mxu0 0.0
        %2213 = vmatpush1.msra.mxu0 %v2199
        %2214 = vmatprep.subr.mxu0 0.0
        %2215 = vmatpush1.msra.mxu0 %v2198
        %2216 = vmatprep.subr.mxu0 0.0
        %2217 = vmatpush1.msra.mxu0 %v2197
        %2218 = vmatprep.subr.mxu0 0.0
        %2219 = vmatpush1.msra.mxu0 %v2196
        %2220 = vmatprep.subr.mxu0 0.0
        %2221 = vmatpush1.msra.mxu0 %v2195
        %2222 = vmatprep.subr.mxu0 0.0
        %2223 = vmatpush1.msra.mxu0 %v2194
        %2224 = vmatprep.subr.mxu0 0.0
        %2225 = vmatpush1.msra.mxu0 %v2193
        %2226 = vmatprep.subr.mxu0 0.0
        %2227 = vmatpush1.msra.mxu0 %v2192
        %2228 = vmatprep.subr.mxu0 0.0
        %2229 = vmatpush1.msra.mxu0 %v2191
        %2230 = vmatprep.subr.mxu0 0.0
        %2231 = vmatpush1.msra.mxu0 %v2190
        %2232 = vmatprep.subr.mxu0 0.0
        %2233 = vmatpush1.msra.mxu0 %v2189
        %2234 = vmatprep.subr.mxu0 0.0
        %2235 = vmatpush1.msra.mxu0 %v2188
        %2236 = vmatprep.subr.mxu0 0.0
        %2237 = vmatpush2.msra.mxu0 0.0
        %2238 = vmatprep.subr.mxu0 0.0
        %2239 = vmatpush2.msra.mxu0 0.0
        %2240 = vmatprep.subr.mxu0 0.0
        %2241 = vmatpush2.msra.mxu0 0.0
        %2242 = vmatprep.subr.mxu0 0.0
        %2243 = vmatpush2.msra.mxu0 0.0
        %2244 = vmatprep.subr.mxu0 0.0
        %2245 = vmatpush2.msra.mxu0 0.0
        %2246 = vmatprep.subr.mxu0 0.0
        %2247 = vmatpush2.msra.mxu0 0.0
        %2248 = vmatprep.subr.mxu0 0.0
        %2249 = vmatpush2.msra.mxu0 0.0
        %2250 = vmatprep.subr.mxu0 0.0
        %2251 = vmatpush2.msra.mxu0 0.0
        %2252 = vmatprep.subr.mxu0 0.0
        %2253 = vmatpush2.msra.mxu0 0.0
        %2254 = vmatprep.subr.mxu0 0.0
        %2255 = vmatpush2.msra.mxu0 0.0
        %2256 = vmatprep.subr.mxu0 0.0
        %2257 = vmatpush2.msra.mxu0 0.0
        %2258 = vmatprep.subr.mxu0 0.0
        %2259 = vmatpush2.msra.mxu0 0.0
        %2260 = vmatprep.subr.mxu0 0.0
        %2261 = vmatpush2.msra.mxu0 0.0
        %2262 = vmatprep.subr.mxu0 0.0
        %2263 = vmatpush2.msra.mxu0 0.0
        %2264 = vmatprep.subr.mxu0 0.0
        %2265 = vmatpush2.msra.mxu0 0.0
        %2266 = vmatprep.subr.mxu0 0.0
        %2267 = vmatpush2.msra.mxu0 0.0
        %2268 = vmatprep.mubr.f32.mxu0 0.0
        %2269 = vmatmul.mubr.f32.gmra.mxu0 %v2143
        %v2270 = vpop.f32.mrf.mxu0
        %v2271 = vadd.f32 0.0, %v2270
        %v2272 = vpop.f32.mrf.mxu0
        %2273 = vmatprep.mubr.f32.mxu0 0.0
        %2274 = vmatmul.mubr.f32.gmra.mxu0 %v2144
        %v2275 = vpop.f32.mrf.mxu0
        %v2276 = vadd.f32 0.0, %v2275
        %v2277 = vpop.f32.mrf.mxu0
        %2278 = vmatprep.mubr.f32.mxu0 0.0
        %2279 = vmatmul.mubr.f32.gmra.mxu0 %v2145
        %v2280 = vpop.f32.mrf.mxu0
        %v2281 = vadd.f32 0.0, %v2280
        %v2282 = vpop.f32.mrf.mxu0
        %2283 = vmatprep.mubr.f32.mxu0 0.0
        %2284 = vmatmul.mubr.f32.gmra.mxu0 %v2146
        %v2285 = vpop.f32.mrf.mxu0
        %v2286 = vadd.f32 0.0, %v2285
        %v2287 = vpop.f32.mrf.mxu0
        %2288 = vmatprep.mubr.f32.mxu0 0.0
        %2289 = vmatmul.mubr.f32.gmra.mxu0 %v2147
        %v2290 = vpop.f32.mrf.mxu0
        %v2291 = vadd.f32 0.0, %v2290
        %v2292 = vpop.f32.mrf.mxu0
        %2293 = vmatprep.mubr.f32.mxu0 0.0
        %2294 = vmatmul.mubr.f32.gmra.mxu0 %v2148
        %v2295 = vpop.f32.mrf.mxu0
        %v2296 = vadd.f32 0.0, %v2295
        %v2297 = vpop.f32.mrf.mxu0
        %2298 = vmatprep.mubr.f32.mxu0 0.0
        %2299 = vmatmul.mubr.f32.gmra.mxu0 %v2149
        %v2300 = vpop.f32.mrf.mxu0
        %v2301 = vadd.f32 0.0, %v2300
        %v2302 = vpop.f32.mrf.mxu0
        %2303 = vmatprep.mubr.f32.mxu0 0.0
        %2304 = vmatmul.mubr.f32.gmra.mxu0 %v2150
        %v2305 = vpop.f32.mrf.mxu0
        %v2306 = vadd.f32 0.0, %v2305
        %v2307 = vpop.f32.mrf.mxu0
        %2308 = vmatprep.mubr.f32.mxu0 0.0
        %2309 = vmatmul.mubr.f32.gmra.mxu0 %v2151
        %v2310 = vpop.f32.mrf.mxu0
        %v2311 = vadd.f32 0.0, %v2310
        %v2312 = vpop.f32.mrf.mxu0
        %2313 = vmatprep.mubr.f32.mxu0 0.0
        %2314 = vmatmul.mubr.f32.gmra.mxu0 %v2152
        %v2315 = vpop.f32.mrf.mxu0
        %v2316 = vadd.f32 0.0, %v2315
        %v2317 = vpop.f32.mrf.mxu0
        %2318 = vmatprep.mubr.f32.mxu0 0.0
        %2319 = vmatmul.mubr.f32.gmra.mxu0 %v2153
        %v2320 = vpop.f32.mrf.mxu0
        %v2321 = vadd.f32 0.0, %v2320
        %v2322 = vpop.f32.mrf.mxu0
        %2323 = vmatprep.mubr.f32.mxu0 0.0
        %2324 = vmatmul.mubr.f32.gmra.mxu0 %v2154
        %v2325 = vpop.f32.mrf.mxu0
        %v2326 = vadd.f32 0.0, %v2325
        %v2327 = vpop.f32.mrf.mxu0
        %2328 = vmatprep.mubr.f32.mxu0 0.0
        %2329 = vmatmul.mubr.f32.gmra.mxu0 %v2155
        %v2330 = vpop.f32.mrf.mxu0
        %v2331 = vadd.f32 0.0, %v2330
        %v2332 = vpop.f32.mrf.mxu0
        %2333 = vmatprep.mubr.f32.mxu0 0.0
        %2334 = vmatmul.mubr.f32.gmra.mxu0 %v2156
        %v2335 = vpop.f32.mrf.mxu0
        %v2336 = vadd.f32 0.0, %v2335
        %v2337 = vpop.f32.mrf.mxu0
        %2338 = vmatprep.mubr.f32.mxu0 0.0
        %2339 = vmatmul.mubr.f32.gmra.mxu0 %v2157
        %v2340 = vpop.f32.mrf.mxu0
        %v2341 = vadd.f32 0.0, %v2340
        %v2342 = vpop.f32.mrf.mxu0
        %2343 = vmatprep.mubr.f32.mxu0 0.0
        %2344 = vmatmul.mubr.f32.gmra.mxu0 %v2158
        %v2345 = vpop.f32.mrf.mxu0
        %v2346 = vadd.f32 0.0, %v2345
        %v2347 = vpop.f32.mrf.mxu0
        %2348 = vmatprep.mubr.f32.mxu0 0.0
        %2349 = vmatmul.mubr.f32.gmra.mxu0 %v2159
        %v2350 = vpop.f32.mrf.mxu0
        %v2351 = vadd.f32 0.0, %v2350
        %v2352 = vpop.f32.mrf.mxu0
        %2353 = vmatprep.mubr.f32.mxu0 0.0
        %2354 = vmatmul.mubr.f32.gmra.mxu0 %v2160
        %v2355 = vpop.f32.mrf.mxu0
        %v2356 = vadd.f32 0.0, %v2355
        %v2357 = vpop.f32.mrf.mxu0
        %2358 = vmatprep.mubr.f32.mxu0 0.0
        %2359 = vmatmul.mubr.f32.gmra.mxu0 %v2161
        %v2360 = vpop.f32.mrf.mxu0
        %v2361 = vadd.f32 0.0, %v2360
        %v2362 = vpop.f32.mrf.mxu0
        %2363 = vmatprep.mubr.f32.mxu0 0.0
        %2364 = vmatmul.mubr.f32.gmra.mxu0 %v2162
        %v2365 = vpop.f32.mrf.mxu0
        %v2366 = vadd.f32 0.0, %v2365
        %v2367 = vpop.f32.mrf.mxu0
        %2368 = vmatprep.mubr.f32.mxu0 0.0
        %2369 = vmatmul.mubr.f32.gmra.mxu0 %v2163
        %v2370 = vpop.f32.mrf.mxu0
        %v2371 = vadd.f32 0.0, %v2370
        %v2372 = vpop.f32.mrf.mxu0
        %2373 = vmatprep.mubr.f32.mxu0 0.0
        %2374 = vmatmul.mubr.f32.gmra.mxu0 %v2164
        %v2375 = vpop.f32.mrf.mxu0
        %v2376 = vadd.f32 0.0, %v2375
        %v2377 = vpop.f32.mrf.mxu0
        %2378 = vmatprep.mubr.f32.mxu0 0.0
        %2379 = vmatmul.mubr.f32.gmra.mxu0 %v2165
        %v2380 = vpop.f32.mrf.mxu0
        %v2381 = vadd.f32 0.0, %v2380
        %v2382 = vpop.f32.mrf.mxu0
        %2383 = vmatprep.mubr.f32.mxu0 0.0
        %2384 = vmatmul.mubr.f32.gmra.mxu0 %v2166
        %v2385 = vpop.f32.mrf.mxu0
        %v2386 = vadd.f32 0.0, %v2385
        %v2387 = vpop.f32.mrf.mxu0
        %2388 = vmatprep.mubr.f32.mxu0 0.0
        %2389 = vmatmul.mubr.f32.gmra.mxu0 %v2167
        %v2390 = vpop.f32.mrf.mxu0
        %v2391 = vadd.f32 0.0, %v2390
        %v2392 = vpop.f32.mrf.mxu0
        %2393 = vmatprep.mubr.f32.mxu0 0.0
        %2394 = vmatmul.mubr.f32.gmra.mxu0 %v2168
        %v2395 = vpop.f32.mrf.mxu0
        %v2396 = vadd.f32 0.0, %v2395
        %v2397 = vpop.f32.mrf.mxu0
        %2398 = vmatprep.mubr.f32.mxu0 0.0
        %2399 = vmatmul.mubr.f32.gmra.mxu0 %v2169
        %v2400 = vpop.f32.mrf.mxu0
        %v2401 = vadd.f32 0.0, %v2400
        %v2402 = vpop.f32.mrf.mxu0
        %2403 = vmatprep.mubr.f32.mxu0 0.0
        %2404 = vmatmul.mubr.f32.gmra.mxu0 %v2170
        %v2405 = vpop.f32.mrf.mxu0
        %v2406 = vadd.f32 0.0, %v2405
        %v2407 = vpop.f32.mrf.mxu0
        %2408 = vmatprep.mubr.f32.mxu0 0.0
        %2409 = vmatmul.mubr.f32.gmra.mxu0 %v2171
        %v2410 = vpop.f32.mrf.mxu0
        %v2411 = vadd.f32 0.0, %v2410
        %v2412 = vpop.f32.mrf.mxu0
        %2413 = vmatprep.mubr.f32.mxu0 0.0
        %2414 = vmatmul.mubr.f32.gmra.mxu0 %v2172
        %v2415 = vpop.f32.mrf.mxu0
        %v2416 = vadd.f32 0.0, %v2415
        %v2417 = vpop.f32.mrf.mxu0
        %2418 = vmatprep.mubr.f32.mxu0 0.0
        %2419 = vmatmul.mubr.f32.gmra.mxu0 %v2173
        %v2420 = vpop.f32.mrf.mxu0
        %v2421 = vadd.f32 0.0, %v2420
        %v2422 = vpop.f32.mrf.mxu0
        %2423 = vmatprep.mubr.f32.mxu0 0.0
        %2424 = vmatmul.mubr.f32.gmra.mxu0 %v2174
        %v2425 = vpop.f32.mrf.mxu0
        %v2426 = vadd.f32 0.0, %v2425
        %v2427 = vpop.f32.mrf.mxu0
        %2428 = vmatprep.mubr.f32.mxu0 0.0
        %2429 = vmatmul.mubr.f32.gmra.mxu0 %v2175
        %v2430 = vpop.f32.mrf.mxu0
        %v2431 = vadd.f32 0.0, %v2430
        %v2432 = vpop.f32.mrf.mxu0
        %2433 = vmatprep.mubr.f32.mxu0 0.0
        %2434 = vmatmul.mubr.f32.gmra.mxu0 %v2176
        %v2435 = vpop.f32.mrf.mxu0
        %v2436 = vadd.f32 0.0, %v2435
        %v2437 = vpop.f32.mrf.mxu0
        %2438 = vmatprep.mubr.f32.mxu0 0.0
        %2439 = vmatmul.mubr.f32.gmra.mxu0 %v2177
        %v2440 = vpop.f32.mrf.mxu0
        %v2441 = vadd.f32 0.0, %v2440
        %v2442 = vpop.f32.mrf.mxu0
        %2443 = vmatprep.mubr.f32.mxu0 0.0
        %2444 = vmatmul.mubr.f32.gmra.mxu0 %v2178
        %v2445 = vpop.f32.mrf.mxu0
        %v2446 = vadd.f32 0.0, %v2445
        %v2447 = vpop.f32.mrf.mxu0
        %2448 = vmatprep.mubr.f32.mxu0 0.0
        %2449 = vmatmul.mubr.f32.gmra.mxu0 %v2179
        %v2450 = vpop.f32.mrf.mxu0
        %v2451 = vadd.f32 0.0, %v2450
        %v2452 = vpop.f32.mrf.mxu0
        %2453 = vmatprep.mubr.f32.mxu0 0.0
        %2454 = vmatmul.mubr.f32.gmra.mxu0 %v2180
        %v2455 = vpop.f32.mrf.mxu0
        %v2456 = vadd.f32 0.0, %v2455
        %v2457 = vpop.f32.mrf.mxu0
        %2458 = vmatprep.mubr.f32.mxu0 0.0
        %2459 = vmatmul.mubr.f32.gmra.mxu0 %v2181
        %v2460 = vpop.f32.mrf.mxu0
        %v2461 = vadd.f32 0.0, %v2460
        %v2462 = vpop.f32.mrf.mxu0
        %2463 = vmatprep.mubr.f32.mxu0 0.0
        %2464 = vmatmul.mubr.f32.gmra.mxu0 %v2182
        %v2465 = vpop.f32.mrf.mxu0
        %v2466 = vadd.f32 0.0, %v2465
        %v2467 = vpop.f32.mrf.mxu0
        %2468 = vmatprep.mubr.f32.mxu0 0.0
        %2469 = vmatmul.mubr.f32.gmra.mxu0 %v2183
        %v2470 = vpop.f32.mrf.mxu0
        %v2471 = vadd.f32 0.0, %v2470
        %v2472 = vpop.f32.mrf.mxu0
        %2473 = vmatprep.mubr.f32.mxu0 0.0
        %2474 = vmatmul.mubr.f32.gmra.mxu0 %v2184
        %v2475 = vpop.f32.mrf.mxu0
        %v2476 = vadd.f32 0.0, %v2475
        %v2477 = vpop.f32.mrf.mxu0
        %2478 = vmatprep.mubr.f32.mxu0 0.0
        %2479 = vmatmul.mubr.f32.gmra.mxu0 %v2185
        %v2480 = vpop.f32.mrf.mxu0
        %v2481 = vadd.f32 0.0, %v2480
        %v2482 = vpop.f32.mrf.mxu0
        %2483 = vmatprep.mubr.f32.mxu0 0.0
        %2484 = vmatmul.mubr.f32.gmra.mxu0 %v2186
        %v2485 = vpop.f32.mrf.mxu0
        %v2486 = vadd.f32 0.0, %v2485
        %v2487 = vpop.f32.mrf.mxu0
        %2488 = vdwg.mxu0
        %v2489 = vlaneseq
        %v2490 = vshrl.u32 %v2489, 7
        %v2491 = vsub.s32 0, %v2490
        %v2492 = vrot.slane %v273, %v2491
        %2493 = vmatprep.subr.mxu0 0.0
        %2494 = vmatpush1.msra.mxu0 0.0
        %2495 = vmatprep.subr.mxu0 0.0
        %2496 = vmatpush1.msra.mxu0 0.0
        %2497 = vmatprep.subr.mxu0 0.0
        %2498 = vmatpush1.msra.mxu0 0.0
        %2499 = vmatprep.subr.mxu0 0.0
        %2500 = vmatpush1.msra.mxu0 0.0
        %2501 = vmatprep.subr.mxu0 0.0
        %2502 = vmatpush1.msra.mxu0 0.0
        %2503 = vmatprep.subr.mxu0 0.0
        %2504 = vmatpush1.msra.mxu0 %v2321
        %2505 = vmatprep.subr.mxu0 0.0
        %2506 = vmatpush1.msra.mxu0 %v2316
        %2507 = vmatprep.subr.mxu0 0.0
        %2508 = vmatpush1.msra.mxu0 %v2311
        %2509 = vmatprep.subr.mxu0 0.0
        %2510 = vmatpush1.msra.mxu0 %v2306
        %2511 = vmatprep.subr.mxu0 0.0
        %2512 = vmatpush1.msra.mxu0 %v2301
        %2513 = vmatprep.subr.mxu0 0.0
        %2514 = vmatpush1.msra.mxu0 %v2296
        %2515 = vmatprep.subr.mxu0 0.0
        %2516 = vmatpush1.msra.mxu0 %v2291
        %2517 = vmatprep.subr.mxu0 0.0
        %2518 = vmatpush1.msra.mxu0 %v2286
        %2519 = vmatprep.subr.mxu0 0.0
        %2520 = vmatpush1.msra.mxu0 %v2281
        %2521 = vmatprep.subr.mxu0 0.0
        %2522 = vmatpush1.msra.mxu0 %v2276
        %2523 = vmatprep.subr.mxu0 0.0
        %2524 = vmatpush1.msra.mxu0 %v2271
        %2525 = vmatprep.subr.mxu0 0.0
        %2526 = vmatpush2.msra.mxu0 0.0
        %2527 = vmatprep.subr.mxu0 0.0
        %2528 = vmatpush2.msra.mxu0 0.0
        %2529 = vmatprep.subr.mxu0 0.0
        %2530 = vmatpush2.msra.mxu0 0.0
        %2531 = vmatprep.subr.mxu0 0.0
        %2532 = vmatpush2.msra.mxu0 0.0
        %2533 = vmatprep.subr.mxu0 0.0
        %2534 = vmatpush2.msra.mxu0 0.0
        %2535 = vmatprep.subr.mxu0 0.0
        %2536 = vmatpush2.msra.mxu0 0.0
        %2537 = vmatprep.subr.mxu0 0.0
        %2538 = vmatpush2.msra.mxu0 0.0
        %2539 = vmatprep.subr.mxu0 0.0
        %2540 = vmatpush2.msra.mxu0 0.0
        %2541 = vmatprep.subr.mxu0 0.0
        %2542 = vmatpush2.msra.mxu0 0.0
        %2543 = vmatprep.subr.mxu0 0.0
        %2544 = vmatpush2.msra.mxu0 0.0
        %2545 = vmatprep.subr.mxu0 0.0
        %2546 = vmatpush2.msra.mxu0 0.0
        %2547 = vmatprep.subr.mxu0 0.0
        %2548 = vmatpush2.msra.mxu0 0.0
        %2549 = vmatprep.subr.mxu0 0.0
        %2550 = vmatpush2.msra.mxu0 0.0
        %2551 = vmatprep.subr.mxu0 0.0
        %2552 = vmatpush2.msra.mxu0 0.0
        %2553 = vmatprep.subr.mxu0 0.0
        %2554 = vmatpush2.msra.mxu0 0.0
        %2555 = vmatprep.subr.mxu0 0.0
        %2556 = vmatpush2.msra.mxu0 0.0
        %2557 = vmatprep.mubr.f32.mxu0 0.0
        %2558 = vmatmul.mubr.f32.gmra.mxu0 %v625
        %v2559 = vpop.f32.mrf.mxu0
        %v2560 = vadd.f32 %v2492, %v2559
        %v2561 = vpop.f32.mrf.mxu0
        %2562 = vmatprep.mubr.f32.mxu0 0.0
        %2563 = vmatmul.mubr.f32.gmra.mxu0 %v628
        %v2564 = vpop.f32.mrf.mxu0
        %v2565 = vadd.f32 %v2492, %v2564
        %v2566 = vpop.f32.mrf.mxu0
        %2567 = vmatprep.mubr.f32.mxu0 0.0
        %2568 = vmatmul.mubr.f32.gmra.mxu0 %v631
        %v2569 = vpop.f32.mrf.mxu0
        %v2570 = vadd.f32 %v2492, %v2569
        %v2571 = vpop.f32.mrf.mxu0
        %2572 = vmatprep.mubr.f32.mxu0 0.0
        %2573 = vmatmul.mubr.f32.gmra.mxu0 %v634
        %v2574 = vpop.f32.mrf.mxu0
        %v2575 = vadd.f32 %v2492, %v2574
        %v2576 = vpop.f32.mrf.mxu0
        %2577 = vmatprep.mubr.f32.mxu0 0.0
        %2578 = vmatmul.mubr.f32.gmra.mxu0 %v637
        %v2579 = vpop.f32.mrf.mxu0
        %v2580 = vadd.f32 %v2492, %v2579
        %v2581 = vpop.f32.mrf.mxu0
        %2582 = vmatprep.mubr.f32.mxu0 0.0
        %2583 = vmatmul.mubr.f32.gmra.mxu0 %v640
        %v2584 = vpop.f32.mrf.mxu0
        %v2585 = vadd.f32 %v2492, %v2584
        %v2586 = vpop.f32.mrf.mxu0
        %2587 = vmatprep.mubr.f32.mxu0 0.0
        %2588 = vmatmul.mubr.f32.gmra.mxu0 %v643
        %v2589 = vpop.f32.mrf.mxu0
        %v2590 = vadd.f32 %v2492, %v2589
        %v2591 = vpop.f32.mrf.mxu0
        %2592 = vmatprep.mubr.f32.mxu0 0.0
        %2593 = vmatmul.mubr.f32.gmra.mxu0 %v646
        %v2594 = vpop.f32.mrf.mxu0
        %v2595 = vadd.f32 %v2492, %v2594
        %v2596 = vpop.f32.mrf.mxu0
        %2597 = vmatprep.mubr.f32.mxu0 0.0
        %2598 = vmatmul.mubr.f32.gmra.mxu0 %v649
        %v2599 = vpop.f32.mrf.mxu0
        %v2600 = vadd.f32 %v2492, %v2599
        %v2601 = vpop.f32.mrf.mxu0
        %2602 = vmatprep.mubr.f32.mxu0 0.0
        %2603 = vmatmul.mubr.f32.gmra.mxu0 %v652
        %v2604 = vpop.f32.mrf.mxu0
        %v2605 = vadd.f32 %v2492, %v2604
        %v2606 = vpop.f32.mrf.mxu0
        %2607 = vmatprep.mubr.f32.mxu0 0.0
        %2608 = vmatmul.mubr.f32.gmra.mxu0 %v655
        %v2609 = vpop.f32.mrf.mxu0
        %v2610 = vadd.f32 %v2492, %v2609
        %v2611 = vpop.f32.mrf.mxu0
        %2612 = vdwg.mxu0
        %2613 = vst [vmem:[#allocation2] sm:$0xff] %v2560
        %2614 = vst [vmem:[#allocation2 + $0x8] sm:$0xff] %v2565
        %2615 = vst [vmem:[#allocation2 + $0x10] sm:$0xff] %v2570
        %2616 = vst [vmem:[#allocation2 + $0x18] sm:$0xff] %v2575
        %2617 = vst [vmem:[#allocation2 + $0x20] sm:$0xff] %v2580
        %2618 = vst [vmem:[#allocation2 + $0x28] sm:$0xff] %v2585
        %2619 = vst [vmem:[#allocation2 + $0x30] sm:$0xff] %v2590
        %2620 = vst [vmem:[#allocation2 + $0x38] sm:$0xff] %v2595
        %2621 = vst [vmem:[#allocation2 + $0x40] sm:$0xff] %v2600
        %2622 = vst [vmem:[#allocation2 + $0x48] sm:$0xff] %v2605
        %2623 = vst [vmem:[#allocation2 + $0x50] sm:$0xff] %v2610
        %2624 = vmatprep.subr.mxu0 0.0
        %2625 = vmatpush1.msra.mxu0 0.0
        %2626 = vmatprep.subr.mxu0 0.0
        %2627 = vmatpush1.msra.mxu0 0.0
        %2628 = vmatprep.subr.mxu0 0.0
        %2629 = vmatpush1.msra.mxu0 0.0
        %2630 = vmatprep.subr.mxu0 0.0
        %2631 = vmatpush1.msra.mxu0 0.0
        %2632 = vmatprep.subr.mxu0 0.0
        %2633 = vmatpush1.msra.mxu0 0.0
        %2634 = vmatprep.subr.mxu0 0.0
        %2635 = vmatpush1.msra.mxu0 %v2376
        %2636 = vmatprep.subr.mxu0 0.0
        %2637 = vmatpush1.msra.mxu0 %v2371
        %2638 = vmatprep.subr.mxu0 0.0
        %2639 = vmatpush1.msra.mxu0 %v2366
        %2640 = vmatprep.subr.mxu0 0.0
        %2641 = vmatpush1.msra.mxu0 %v2361
        %2642 = vmatprep.subr.mxu0 0.0
        %2643 = vmatpush1.msra.mxu0 %v2356
        %2644 = vmatprep.subr.mxu0 0.0
        %2645 = vmatpush1.msra.mxu0 %v2351
        %2646 = vmatprep.subr.mxu0 0.0
        %2647 = vmatpush1.msra.mxu0 %v2346
        %2648 = vmatprep.subr.mxu0 0.0
        %2649 = vmatpush1.msra.mxu0 %v2341
        %2650 = vmatprep.subr.mxu0 0.0
        %2651 = vmatpush1.msra.mxu0 %v2336
        %2652 = vmatprep.subr.mxu0 0.0
        %2653 = vmatpush1.msra.mxu0 %v2331
        %2654 = vmatprep.subr.mxu0 0.0
        %2655 = vmatpush1.msra.mxu0 %v2326
        %2656 = vmatprep.subr.mxu0 0.0
        %2657 = vmatpush2.msra.mxu0 0.0
        %2658 = vmatprep.subr.mxu0 0.0
        %2659 = vmatpush2.msra.mxu0 0.0
        %2660 = vmatprep.subr.mxu0 0.0
        %2661 = vmatpush2.msra.mxu0 0.0
        %2662 = vmatprep.subr.mxu0 0.0
        %2663 = vmatpush2.msra.mxu0 0.0
        %2664 = vmatprep.subr.mxu0 0.0
        %2665 = vmatpush2.msra.mxu0 0.0
        %2666 = vmatprep.subr.mxu0 0.0
        %2667 = vmatpush2.msra.mxu0 0.0
        %2668 = vmatprep.subr.mxu0 0.0
        %2669 = vmatpush2.msra.mxu0 0.0
        %2670 = vmatprep.subr.mxu0 0.0
        %2671 = vmatpush2.msra.mxu0 0.0
        %2672 = vmatprep.subr.mxu0 0.0
        %2673 = vmatpush2.msra.mxu0 0.0
        %2674 = vmatprep.subr.mxu0 0.0
        %2675 = vmatpush2.msra.mxu0 0.0
        %2676 = vmatprep.subr.mxu0 0.0
        %2677 = vmatpush2.msra.mxu0 0.0
        %2678 = vmatprep.subr.mxu0 0.0
        %2679 = vmatpush2.msra.mxu0 0.0
        %2680 = vmatprep.subr.mxu0 0.0
        %2681 = vmatpush2.msra.mxu0 0.0
        %2682 = vmatprep.subr.mxu0 0.0
        %2683 = vmatpush2.msra.mxu0 0.0
        %2684 = vmatprep.subr.mxu0 0.0
        %2685 = vmatpush2.msra.mxu0 0.0
        %2686 = vmatprep.subr.mxu0 0.0
        %2687 = vmatpush2.msra.mxu0 0.0
        %2688 = vmatprep.mubr.f32.mxu0 0.0
        %2689 = vmatmul.mubr.f32.gmra.mxu0 %v625
        %v2690 = vpop.f32.mrf.mxu0
        %v2691 = vadd.f32 %v2492, %v2690
        %v2692 = vpop.f32.mrf.mxu0
        %2693 = vmatprep.mubr.f32.mxu0 0.0
        %2694 = vmatmul.mubr.f32.gmra.mxu0 %v628
        %v2695 = vpop.f32.mrf.mxu0
        %v2696 = vadd.f32 %v2492, %v2695
        %v2697 = vpop.f32.mrf.mxu0
        %2698 = vmatprep.mubr.f32.mxu0 0.0
        %2699 = vmatmul.mubr.f32.gmra.mxu0 %v631
        %v2700 = vpop.f32.mrf.mxu0
        %v2701 = vadd.f32 %v2492, %v2700
        %v2702 = vpop.f32.mrf.mxu0
        %2703 = vmatprep.mubr.f32.mxu0 0.0
        %2704 = vmatmul.mubr.f32.gmra.mxu0 %v634
        %v2705 = vpop.f32.mrf.mxu0
        %v2706 = vadd.f32 %v2492, %v2705
        %v2707 = vpop.f32.mrf.mxu0
        %2708 = vmatprep.mubr.f32.mxu0 0.0
        %2709 = vmatmul.mubr.f32.gmra.mxu0 %v637
        %v2710 = vpop.f32.mrf.mxu0
        %v2711 = vadd.f32 %v2492, %v2710
        %v2712 = vpop.f32.mrf.mxu0
        %2713 = vmatprep.mubr.f32.mxu0 0.0
        %2714 = vmatmul.mubr.f32.gmra.mxu0 %v640
        %v2715 = vpop.f32.mrf.mxu0
        %v2716 = vadd.f32 %v2492, %v2715
        %v2717 = vpop.f32.mrf.mxu0
        %2718 = vmatprep.mubr.f32.mxu0 0.0
        %2719 = vmatmul.mubr.f32.gmra.mxu0 %v643
        %v2720 = vpop.f32.mrf.mxu0
        %v2721 = vadd.f32 %v2492, %v2720
        %v2722 = vpop.f32.mrf.mxu0
        %2723 = vmatprep.mubr.f32.mxu0 0.0
        %2724 = vmatmul.mubr.f32.gmra.mxu0 %v646
        %v2725 = vpop.f32.mrf.mxu0
        %v2726 = vadd.f32 %v2492, %v2725
        %v2727 = vpop.f32.mrf.mxu0
        %2728 = vmatprep.mubr.f32.mxu0 0.0
        %2729 = vmatmul.mubr.f32.gmra.mxu0 %v649
        %v2730 = vpop.f32.mrf.mxu0
        %v2731 = vadd.f32 %v2492, %v2730
        %v2732 = vpop.f32.mrf.mxu0
        %2733 = vmatprep.mubr.f32.mxu0 0.0
        %2734 = vmatmul.mubr.f32.gmra.mxu0 %v652
        %v2735 = vpop.f32.mrf.mxu0
        %v2736 = vadd.f32 %v2492, %v2735
        %v2737 = vpop.f32.mrf.mxu0
        %2738 = vmatprep.mubr.f32.mxu0 0.0
        %2739 = vmatmul.mubr.f32.gmra.mxu0 %v655
        %v2740 = vpop.f32.mrf.mxu0
        %v2741 = vadd.f32 %v2492, %v2740
        %v2742 = vpop.f32.mrf.mxu0
        %2743 = vdwg.mxu0
        %2744 = vst [vmem:[#allocation2 + $0x58] sm:$0xff] %v2691
        %2745 = vst [vmem:[#allocation2 + $0x60] sm:$0xff] %v2696
        %2746 = vst [vmem:[#allocation2 + $0x68] sm:$0xff] %v2701
        %2747 = vst [vmem:[#allocation2 + $0x70] sm:$0xff] %v2706
        %2748 = vst [vmem:[#allocation2 + $0x78] sm:$0xff] %v2711
        %2749 = vst [vmem:[#allocation2 + $0x80] sm:$0xff] %v2716
        %2750 = vst [vmem:[#allocation2 + $0x88] sm:$0xff] %v2721
        %2751 = vst [vmem:[#allocation2 + $0x90] sm:$0xff] %v2726
        %2752 = vst [vmem:[#allocation2 + $0x98] sm:$0xff] %v2731
        %2753 = vst [vmem:[#allocation2 + $0xa0] sm:$0xff] %v2736
        %2754 = vst [vmem:[#allocation2 + $0xa8] sm:$0xff] %v2741
        %2755 = vmatprep.subr.mxu0 0.0
        %2756 = vmatpush1.msra.mxu0 0.0
        %2757 = vmatprep.subr.mxu0 0.0
        %2758 = vmatpush1.msra.mxu0 0.0
        %2759 = vmatprep.subr.mxu0 0.0
        %2760 = vmatpush1.msra.mxu0 0.0
        %2761 = vmatprep.subr.mxu0 0.0
        %2762 = vmatpush1.msra.mxu0 0.0
        %2763 = vmatprep.subr.mxu0 0.0
        %2764 = vmatpush1.msra.mxu0 0.0
        %2765 = vmatprep.subr.mxu0 0.0
        %2766 = vmatpush1.msra.mxu0 %v2431
        %2767 = vmatprep.subr.mxu0 0.0
        %2768 = vmatpush1.msra.mxu0 %v2426
        %2769 = vmatprep.subr.mxu0 0.0
        %2770 = vmatpush1.msra.mxu0 %v2421
        %2771 = vmatprep.subr.mxu0 0.0
        %2772 = vmatpush1.msra.mxu0 %v2416
        %2773 = vmatprep.subr.mxu0 0.0
        %2774 = vmatpush1.msra.mxu0 %v2411
        %2775 = vmatprep.subr.mxu0 0.0
        %2776 = vmatpush1.msra.mxu0 %v2406
        %2777 = vmatprep.subr.mxu0 0.0
        %2778 = vmatpush1.msra.mxu0 %v2401
        %2779 = vmatprep.subr.mxu0 0.0
        %2780 = vmatpush1.msra.mxu0 %v2396
        %2781 = vmatprep.subr.mxu0 0.0
        %2782 = vmatpush1.msra.mxu0 %v2391
        %2783 = vmatprep.subr.mxu0 0.0
        %2784 = vmatpush1.msra.mxu0 %v2386
        %2785 = vmatprep.subr.mxu0 0.0
        %2786 = vmatpush1.msra.mxu0 %v2381
        %2787 = vmatprep.subr.mxu0 0.0
        %2788 = vmatpush2.msra.mxu0 0.0
        %2789 = vmatprep.subr.mxu0 0.0
        %2790 = vmatpush2.msra.mxu0 0.0
        %2791 = vmatprep.subr.mxu0 0.0
        %2792 = vmatpush2.msra.mxu0 0.0
        %2793 = vmatprep.subr.mxu0 0.0
        %2794 = vmatpush2.msra.mxu0 0.0
        %2795 = vmatprep.subr.mxu0 0.0
        %2796 = vmatpush2.msra.mxu0 0.0
        %2797 = vmatprep.subr.mxu0 0.0
        %2798 = vmatpush2.msra.mxu0 0.0
        %2799 = vmatprep.subr.mxu0 0.0
        %2800 = vmatpush2.msra.mxu0 0.0
        %2801 = vmatprep.subr.mxu0 0.0
        %2802 = vmatpush2.msra.mxu0 0.0
        %2803 = vmatprep.subr.mxu0 0.0
        %2804 = vmatpush2.msra.mxu0 0.0
        %2805 = vmatprep.subr.mxu0 0.0
        %2806 = vmatpush2.msra.mxu0 0.0
        %2807 = vmatprep.subr.mxu0 0.0
        %2808 = vmatpush2.msra.mxu0 0.0
        %2809 = vmatprep.subr.mxu0 0.0
        %2810 = vmatpush2.msra.mxu0 0.0
        %2811 = vmatprep.subr.mxu0 0.0
        %2812 = vmatpush2.msra.mxu0 0.0
        %2813 = vmatprep.subr.mxu0 0.0
        %2814 = vmatpush2.msra.mxu0 0.0
        %2815 = vmatprep.subr.mxu0 0.0
        %2816 = vmatpush2.msra.mxu0 0.0
        %2817 = vmatprep.subr.mxu0 0.0
        %2818 = vmatpush2.msra.mxu0 0.0
        %2819 = vmatprep.mubr.f32.mxu0 0.0
        %2820 = vmatmul.mubr.f32.gmra.mxu0 %v625
        %v2821 = vpop.f32.mrf.mxu0
        %v2822 = vadd.f32 %v2492, %v2821
        %v2823 = vpop.f32.mrf.mxu0
        %2824 = vmatprep.mubr.f32.mxu0 0.0
        %2825 = vmatmul.mubr.f32.gmra.mxu0 %v628
        %v2826 = vpop.f32.mrf.mxu0
        %v2827 = vadd.f32 %v2492, %v2826
        %v2828 = vpop.f32.mrf.mxu0
        %2829 = vmatprep.mubr.f32.mxu0 0.0
        %2830 = vmatmul.mubr.f32.gmra.mxu0 %v631
        %v2831 = vpop.f32.mrf.mxu0
        %v2832 = vadd.f32 %v2492, %v2831
        %v2833 = vpop.f32.mrf.mxu0
        %2834 = vmatprep.mubr.f32.mxu0 0.0
        %2835 = vmatmul.mubr.f32.gmra.mxu0 %v634
        %v2836 = vpop.f32.mrf.mxu0
        %v2837 = vadd.f32 %v2492, %v2836
        %v2838 = vpop.f32.mrf.mxu0
        %2839 = vmatprep.mubr.f32.mxu0 0.0
        %2840 = vmatmul.mubr.f32.gmra.mxu0 %v637
        %v2841 = vpop.f32.mrf.mxu0
        %v2842 = vadd.f32 %v2492, %v2841
        %v2843 = vpop.f32.mrf.mxu0
        %2844 = vmatprep.mubr.f32.mxu0 0.0
        %2845 = vmatmul.mubr.f32.gmra.mxu0 %v640
        %v2846 = vpop.f32.mrf.mxu0
        %v2847 = vadd.f32 %v2492, %v2846
        %v2848 = vpop.f32.mrf.mxu0
        %2849 = vmatprep.mubr.f32.mxu0 0.0
        %2850 = vmatmul.mubr.f32.gmra.mxu0 %v643
        %v2851 = vpop.f32.mrf.mxu0
        %v2852 = vadd.f32 %v2492, %v2851
        %v2853 = vpop.f32.mrf.mxu0
        %2854 = vmatprep.mubr.f32.mxu0 0.0
        %2855 = vmatmul.mubr.f32.gmra.mxu0 %v646
        %v2856 = vpop.f32.mrf.mxu0
        %v2857 = vadd.f32 %v2492, %v2856
        %v2858 = vpop.f32.mrf.mxu0
        %2859 = vmatprep.mubr.f32.mxu0 0.0
        %2860 = vmatmul.mubr.f32.gmra.mxu0 %v649
        %v2861 = vpop.f32.mrf.mxu0
        %v2862 = vadd.f32 %v2492, %v2861
        %v2863 = vpop.f32.mrf.mxu0
        %2864 = vmatprep.mubr.f32.mxu0 0.0
        %2865 = vmatmul.mubr.f32.gmra.mxu0 %v652
        %v2866 = vpop.f32.mrf.mxu0
        %v2867 = vadd.f32 %v2492, %v2866
        %v2868 = vpop.f32.mrf.mxu0
        %2869 = vmatprep.mubr.f32.mxu0 0.0
        %2870 = vmatmul.mubr.f32.gmra.mxu0 %v655
        %v2871 = vpop.f32.mrf.mxu0
        %v2872 = vadd.f32 %v2492, %v2871
        %v2873 = vpop.f32.mrf.mxu0
        %2874 = vdwg.mxu0
        %2875 = vst [vmem:[#allocation2 + $0xb0] sm:$0xff] %v2822
        %2876 = vst [vmem:[#allocation2 + $0xb8] sm:$0xff] %v2827
        %2877 = vst [vmem:[#allocation2 + $0xc0] sm:$0xff] %v2832
        %2878 = vst [vmem:[#allocation2 + $0xc8] sm:$0xff] %v2837
        %2879 = vst [vmem:[#allocation2 + $0xd0] sm:$0xff] %v2842
        %2880 = vst [vmem:[#allocation2 + $0xd8] sm:$0xff] %v2847
        %2881 = vst [vmem:[#allocation2 + $0xe0] sm:$0xff] %v2852
        %2882 = vst [vmem:[#allocation2 + $0xe8] sm:$0xff] %v2857
        %2883 = vst [vmem:[#allocation2 + $0xf0] sm:$0xff] %v2862
        %2884 = vst [vmem:[#allocation2 + $0xf8] sm:$0xff] %v2867
        %2885 = vst [vmem:[#allocation2 + $0x100] sm:$0xff] %v2872
        %2886 = vmatprep.subr.mxu0 0.0
        %2887 = vmatpush1.msra.mxu0 0.0
        %2888 = vmatprep.subr.mxu0 0.0
        %2889 = vmatpush1.msra.mxu0 0.0
        %2890 = vmatprep.subr.mxu0 0.0
        %2891 = vmatpush1.msra.mxu0 0.0
        %2892 = vmatprep.subr.mxu0 0.0
        %2893 = vmatpush1.msra.mxu0 0.0
        %2894 = vmatprep.subr.mxu0 0.0
        %2895 = vmatpush1.msra.mxu0 0.0
        %2896 = vmatprep.subr.mxu0 0.0
        %2897 = vmatpush1.msra.mxu0 %v2486
        %2898 = vmatprep.subr.mxu0 0.0
        %2899 = vmatpush1.msra.mxu0 %v2481
        %2900 = vmatprep.subr.mxu0 0.0
        %2901 = vmatpush1.msra.mxu0 %v2476
        %2902 = vmatprep.subr.mxu0 0.0
        %2903 = vmatpush1.msra.mxu0 %v2471
        %2904 = vmatprep.subr.mxu0 0.0
        %2905 = vmatpush1.msra.mxu0 %v2466
        %2906 = vmatprep.subr.mxu0 0.0
        %2907 = vmatpush1.msra.mxu0 %v2461
        %2908 = vmatprep.subr.mxu0 0.0
        %2909 = vmatpush1.msra.mxu0 %v2456
        %2910 = vmatprep.subr.mxu0 0.0
        %2911 = vmatpush1.msra.mxu0 %v2451
        %2912 = vmatprep.subr.mxu0 0.0
        %2913 = vmatpush1.msra.mxu0 %v2446
        %2914 = vmatprep.subr.mxu0 0.0
        %2915 = vmatpush1.msra.mxu0 %v2441
        %2916 = vmatprep.subr.mxu0 0.0
        %2917 = vmatpush1.msra.mxu0 %v2436
        %2918 = vmatprep.subr.mxu0 0.0
        %2919 = vmatpush2.msra.mxu0 0.0
        %2920 = vmatprep.subr.mxu0 0.0
        %2921 = vmatpush2.msra.mxu0 0.0
        %2922 = vmatprep.subr.mxu0 0.0
        %2923 = vmatpush2.msra.mxu0 0.0
        %2924 = vmatprep.subr.mxu0 0.0
        %2925 = vmatpush2.msra.mxu0 0.0
        %2926 = vmatprep.subr.mxu0 0.0
        %2927 = vmatpush2.msra.mxu0 0.0
        %2928 = vmatprep.subr.mxu0 0.0
        %2929 = vmatpush2.msra.mxu0 0.0
        %2930 = vmatprep.subr.mxu0 0.0
        %2931 = vmatpush2.msra.mxu0 0.0
        %2932 = vmatprep.subr.mxu0 0.0
        %2933 = vmatpush2.msra.mxu0 0.0
        %2934 = vmatprep.subr.mxu0 0.0
        %2935 = vmatpush2.msra.mxu0 0.0
        %2936 = vmatprep.subr.mxu0 0.0
        %2937 = vmatpush2.msra.mxu0 0.0
        %2938 = vmatprep.subr.mxu0 0.0
        %2939 = vmatpush2.msra.mxu0 0.0
        %2940 = vmatprep.subr.mxu0 0.0
        %2941 = vmatpush2.msra.mxu0 0.0
        %2942 = vmatprep.subr.mxu0 0.0
        %2943 = vmatpush2.msra.mxu0 0.0
        %2944 = vmatprep.subr.mxu0 0.0
        %2945 = vmatpush2.msra.mxu0 0.0
        %2946 = vmatprep.subr.mxu0 0.0
        %2947 = vmatpush2.msra.mxu0 0.0
        %2948 = vmatprep.subr.mxu0 0.0
        %2949 = vmatpush2.msra.mxu0 0.0
        %2950 = vmatprep.mubr.f32.mxu0 0.0
        %2951 = vmatmul.mubr.f32.gmra.mxu0 %v625
        %v2952 = vpop.f32.mrf.mxu0
        %v2953 = vadd.f32 %v2492, %v2952
        %v2954 = vpop.f32.mrf.mxu0
        %2955 = vmatprep.mubr.f32.mxu0 0.0
        %2956 = vmatmul.mubr.f32.gmra.mxu0 %v628
        %v2957 = vpop.f32.mrf.mxu0
        %v2958 = vadd.f32 %v2492, %v2957
        %v2959 = vpop.f32.mrf.mxu0
        %2960 = vmatprep.mubr.f32.mxu0 0.0
        %2961 = vmatmul.mubr.f32.gmra.mxu0 %v631
        %v2962 = vpop.f32.mrf.mxu0
        %v2963 = vadd.f32 %v2492, %v2962
        %v2964 = vpop.f32.mrf.mxu0
        %2965 = vmatprep.mubr.f32.mxu0 0.0
        %2966 = vmatmul.mubr.f32.gmra.mxu0 %v634
        %v2967 = vpop.f32.mrf.mxu0
        %v2968 = vadd.f32 %v2492, %v2967
        %v2969 = vpop.f32.mrf.mxu0
        %2970 = vmatprep.mubr.f32.mxu0 0.0
        %2971 = vmatmul.mubr.f32.gmra.mxu0 %v637
        %v2972 = vpop.f32.mrf.mxu0
        %v2973 = vadd.f32 %v2492, %v2972
        %v2974 = vpop.f32.mrf.mxu0
        %2975 = vmatprep.mubr.f32.mxu0 0.0
        %2976 = vmatmul.mubr.f32.gmra.mxu0 %v640
        %v2977 = vpop.f32.mrf.mxu0
        %v2978 = vadd.f32 %v2492, %v2977
        %v2979 = vpop.f32.mrf.mxu0
        %2980 = vmatprep.mubr.f32.mxu0 0.0
        %2981 = vmatmul.mubr.f32.gmra.mxu0 %v643
        %v2982 = vpop.f32.mrf.mxu0
        %v2983 = vadd.f32 %v2492, %v2982
        %v2984 = vpop.f32.mrf.mxu0
        %2985 = vmatprep.mubr.f32.mxu0 0.0
        %2986 = vmatmul.mubr.f32.gmra.mxu0 %v646
        %v2987 = vpop.f32.mrf.mxu0
        %v2988 = vadd.f32 %v2492, %v2987
        %v2989 = vpop.f32.mrf.mxu0
        %2990 = vmatprep.mubr.f32.mxu0 0.0
        %2991 = vmatmul.mubr.f32.gmra.mxu0 %v649
        %v2992 = vpop.f32.mrf.mxu0
        %v2993 = vadd.f32 %v2492, %v2992
        %v2994 = vpop.f32.mrf.mxu0
        %2995 = vmatprep.mubr.f32.mxu0 0.0
        %2996 = vmatmul.mubr.f32.gmra.mxu0 %v652
        %v2997 = vpop.f32.mrf.mxu0
        %v2998 = vadd.f32 %v2492, %v2997
        %v2999 = vpop.f32.mrf.mxu0
        %3000 = vmatprep.mubr.f32.mxu0 0.0
        %3001 = vmatmul.mubr.f32.gmra.mxu0 %v655
        %v3002 = vpop.f32.mrf.mxu0
        %v3003 = vadd.f32 %v2492, %v3002
        %v3004 = vpop.f32.mrf.mxu0
        %3005 = vdwg.mxu0
        %3006 = vst [vmem:[#allocation2 + $0x108] sm:$0xff] %v2953
        %3007 = vst [vmem:[#allocation2 + $0x110] sm:$0xff] %v2958
        %3008 = vst [vmem:[#allocation2 + $0x118] sm:$0xff] %v2963
        %3009 = vst [vmem:[#allocation2 + $0x120] sm:$0xff] %v2968
        %3010 = vst [vmem:[#allocation2 + $0x128] sm:$0xff] %v2973
        %3011 = vst [vmem:[#allocation2 + $0x130] sm:$0xff] %v2978
        %3012 = vst [vmem:[#allocation2 + $0x138] sm:$0xff] %v2983
        %3013 = vst [vmem:[#allocation2 + $0x140] sm:$0xff] %v2988
        %3014 = vst [vmem:[#allocation2 + $0x148] sm:$0xff] %v2993
        %3015 = vst [vmem:[#allocation2 + $0x150] sm:$0xff] %v2998
        %3016 = vst [vmem:[#allocation2 + $0x158] sm:$0xff] %v3003
        %v3017 = vld [vmem:[#allocation2] sm:$0xff]
        %v3018 = vld [vmem:[#allocation2 + $0x8] sm:$0xff]
        %v3019 = vld [vmem:[#allocation2 + $0x10] sm:$0xff]
        %v3020 = vld [vmem:[#allocation2 + $0x18] sm:$0xff]
        %v3021 = vld [vmem:[#allocation2 + $0x20] sm:$0xff]
        %v3022 = vld [vmem:[#allocation2 + $0x28] sm:$0xff]
        %v3023 = vld [vmem:[#allocation2 + $0x30] sm:$0xff]
        %v3024 = vld [vmem:[#allocation2 + $0x38] sm:$0xff]
        %v3025 = vld [vmem:[#allocation2 + $0x40] sm:$0xff]
        %v3026 = vld [vmem:[#allocation2 + $0x48] sm:$0xff]
        %v3027 = vld [vmem:[#allocation2 + $0x50] sm:$0xff]
        %v3028 = vld [vmem:[#allocation2 + $0x58] sm:$0xff]
        %v3029 = vld [vmem:[#allocation2 + $0x60] sm:$0xff]
        %v3030 = vld [vmem:[#allocation2 + $0x68] sm:$0xff]
        %v3031 = vld [vmem:[#allocation2 + $0x70] sm:$0xff]
        %v3032 = vld [vmem:[#allocation2 + $0x78] sm:$0xff]
        %v3033 = vld [vmem:[#allocation2 + $0x80] sm:$0xff]
        %v3034 = vld [vmem:[#allocation2 + $0x88] sm:$0xff]
        %v3035 = vld [vmem:[#allocation2 + $0x90] sm:$0xff]
        %v3036 = vld [vmem:[#allocation2 + $0x98] sm:$0xff]
        %v3037 = vld [vmem:[#allocation2 + $0xa0] sm:$0xff]
        %v3038 = vld [vmem:[#allocation2 + $0xa8] sm:$0xff]
        %v3039 = vld [vmem:[#allocation2 + $0xb0] sm:$0xff]
        %v3040 = vld [vmem:[#allocation2 + $0xb8] sm:$0xff]
        %v3041 = vld [vmem:[#allocation2 + $0xc0] sm:$0xff]
        %v3042 = vld [vmem:[#allocation2 + $0xc8] sm:$0xff]
        %v3043 = vld [vmem:[#allocation2 + $0xd0] sm:$0xff]
        %v3044 = vld [vmem:[#allocation2 + $0xd8] sm:$0xff]
        %v3045 = vld [vmem:[#allocation2 + $0xe0] sm:$0xff]
        %v3046 = vld [vmem:[#allocation2 + $0xe8] sm:$0xff]
        %v3047 = vld [vmem:[#allocation2 + $0xf0] sm:$0xff]
        %v3048 = vld [vmem:[#allocation2 + $0xf8] sm:$0xff]
        %v3049 = vld [vmem:[#allocation2 + $0x100] sm:$0xff]
        %v3050 = vld [vmem:[#allocation2 + $0x108] sm:$0xff]
        %v3051 = vld [vmem:[#allocation2 + $0x110] sm:$0xff]
        %v3052 = vld [vmem:[#allocation2 + $0x118] sm:$0xff]
        %v3053 = vld [vmem:[#allocation2 + $0x120] sm:$0xff]
        %v3054 = vld [vmem:[#allocation2 + $0x128] sm:$0xff]
        %v3055 = vld [vmem:[#allocation2 + $0x130] sm:$0xff]
        %v3056 = vld [vmem:[#allocation2 + $0x138] sm:$0xff]
        %v3057 = vld [vmem:[#allocation2 + $0x140] sm:$0xff]
        %v3058 = vld [vmem:[#allocation2 + $0x148] sm:$0xff]
        %v3059 = vld [vmem:[#allocation2 + $0x150] sm:$0xff]
        %v3060 = vld [vmem:[#allocation2 + $0x158] sm:$0xff]
        %3061 = vmax.xlane.f32.xlu0 %v3017
        %v3062 = vpop.xlane.xlu0 %3061
        %3063 = vmax.xlane.f32.xlu0 %v3018
        %v3064 = vpop.xlane.xlu0 %3063
        %3065 = vmax.xlane.f32.xlu0 %v3019
        %v3066 = vpop.xlane.xlu0 %3065
        %3067 = vmax.xlane.f32.xlu0 %v3020
        %v3068 = vpop.xlane.xlu0 %3067
        %3069 = vmax.xlane.f32.xlu0 %v3021
        %v3070 = vpop.xlane.xlu0 %3069
        %3071 = vmax.xlane.f32.xlu0 %v3022
        %v3072 = vpop.xlane.xlu0 %3071
        %3073 = vmax.xlane.f32.xlu0 %v3023
        %v3074 = vpop.xlane.xlu0 %3073
        %3075 = vmax.xlane.f32.xlu0 %v3024
        %v3076 = vpop.xlane.xlu0 %3075
        %3077 = vmax.xlane.f32.xlu0 %v3025
        %v3078 = vpop.xlane.xlu0 %3077
        %3079 = vmax.xlane.f32.xlu0 %v3026
        %v3080 = vpop.xlane.xlu0 %3079
        %3081 = vmax.xlane.f32.xlu0 %v3027
        %v3082 = vpop.xlane.xlu0 %3081
        %3083 = vmax.xlane.f32.xlu0 %v3028
        %v3084 = vpop.xlane.xlu0 %3083
        %3085 = vmax.xlane.f32.xlu0 %v3029
        %v3086 = vpop.xlane.xlu0 %3085
        %3087 = vmax.xlane.f32.xlu0 %v3030
        %v3088 = vpop.xlane.xlu0 %3087
        %3089 = vmax.xlane.f32.xlu0 %v3031
        %v3090 = vpop.xlane.xlu0 %3089
        %3091 = vmax.xlane.f32.xlu0 %v3032
        %v3092 = vpop.xlane.xlu0 %3091
        %3093 = vmax.xlane.f32.xlu0 %v3033
        %v3094 = vpop.xlane.xlu0 %3093
        %3095 = vmax.xlane.f32.xlu0 %v3034
        %v3096 = vpop.xlane.xlu0 %3095
        %3097 = vmax.xlane.f32.xlu0 %v3035
        %v3098 = vpop.xlane.xlu0 %3097
        %3099 = vmax.xlane.f32.xlu0 %v3036
        %v3100 = vpop.xlane.xlu0 %3099
        %3101 = vmax.xlane.f32.xlu0 %v3037
        %v3102 = vpop.xlane.xlu0 %3101
        %3103 = vmax.xlane.f32.xlu0 %v3038
        %v3104 = vpop.xlane.xlu0 %3103
        %3105 = vmax.xlane.f32.xlu0 %v3039
        %v3106 = vpop.xlane.xlu0 %3105
        %3107 = vmax.xlane.f32.xlu0 %v3040
        %v3108 = vpop.xlane.xlu0 %3107
        %3109 = vmax.xlane.f32.xlu0 %v3041
        %v3110 = vpop.xlane.xlu0 %3109
        %3111 = vmax.xlane.f32.xlu0 %v3042
        %v3112 = vpop.xlane.xlu0 %3111
        %3113 = vmax.xlane.f32.xlu0 %v3043
        %v3114 = vpop.xlane.xlu0 %3113
        %3115 = vmax.xlane.f32.xlu0 %v3044
        %v3116 = vpop.xlane.xlu0 %3115
        %3117 = vmax.xlane.f32.xlu0 %v3045
        %v3118 = vpop.xlane.xlu0 %3117
        %3119 = vmax.xlane.f32.xlu0 %v3046
        %v3120 = vpop.xlane.xlu0 %3119
        %3121 = vmax.xlane.f32.xlu0 %v3047
        %v3122 = vpop.xlane.xlu0 %3121
        %3123 = vmax.xlane.f32.xlu0 %v3048
        %v3124 = vpop.xlane.xlu0 %3123
        %3125 = vmax.xlane.f32.xlu0 %v3049
        %v3126 = vpop.xlane.xlu0 %3125
        %3127 = vmax.xlane.f32.xlu0 %v3050
        %v3128 = vpop.xlane.xlu0 %3127
        %3129 = vmax.xlane.f32.xlu0 %v3051
        %v3130 = vpop.xlane.xlu0 %3129
        %3131 = vmax.xlane.f32.xlu0 %v3052
        %v3132 = vpop.xlane.xlu0 %3131
        %3133 = vmax.xlane.f32.xlu0 %v3053
        %v3134 = vpop.xlane.xlu0 %3133
        %3135 = vmax.xlane.f32.xlu0 %v3054
        %v3136 = vpop.xlane.xlu0 %3135
        %3137 = vmax.xlane.f32.xlu0 %v3055
        %v3138 = vpop.xlane.xlu0 %3137
        %3139 = vmax.xlane.f32.xlu0 %v3056
        %v3140 = vpop.xlane.xlu0 %3139
        %3141 = vmax.xlane.f32.xlu0 %v3057
        %v3142 = vpop.xlane.xlu0 %3141
        %3143 = vmax.xlane.f32.xlu0 %v3058
        %v3144 = vpop.xlane.xlu0 %3143
        %3145 = vmax.xlane.f32.xlu0 %v3059
        %v3146 = vpop.xlane.xlu0 %3145
        %3147 = vmax.xlane.f32.xlu0 %v3060
        %v3148 = vpop.xlane.xlu0 %3147
        %v3149 = vsub.f32 %v3017, %v3062
        %v3150 = vsub.f32 %v3018, %v3064
        %v3151 = vsub.f32 %v3019, %v3066
        %v3152 = vsub.f32 %v3020, %v3068
        %v3153 = vsub.f32 %v3021, %v3070
        %v3154 = vsub.f32 %v3022, %v3072
        %v3155 = vsub.f32 %v3023, %v3074
        %v3156 = vsub.f32 %v3024, %v3076
        %v3157 = vsub.f32 %v3025, %v3078
        %v3158 = vsub.f32 %v3026, %v3080
        %v3159 = vsub.f32 %v3027, %v3082
        %v3160 = vsub.f32 %v3028, %v3084
        %v3161 = vsub.f32 %v3029, %v3086
        %v3162 = vsub.f32 %v3030, %v3088
        %v3163 = vsub.f32 %v3031, %v3090
        %v3164 = vsub.f32 %v3032, %v3092
        %v3165 = vsub.f32 %v3033, %v3094
        %v3166 = vsub.f32 %v3034, %v3096
        %v3167 = vsub.f32 %v3035, %v3098
        %v3168 = vsub.f32 %v3036, %v3100
        %v3169 = vsub.f32 %v3037, %v3102
        %v3170 = vsub.f32 %v3038, %v3104
        %v3171 = vsub.f32 %v3039, %v3106
        %v3172 = vsub.f32 %v3040, %v3108
        %v3173 = vsub.f32 %v3041, %v3110
        %v3174 = vsub.f32 %v3042, %v3112
        %v3175 = vsub.f32 %v3043, %v3114
        %v3176 = vsub.f32 %v3044, %v3116
        %v3177 = vsub.f32 %v3045, %v3118
        %v3178 = vsub.f32 %v3046, %v3120
        %v3179 = vsub.f32 %v3047, %v3122
        %v3180 = vsub.f32 %v3048, %v3124
        %v3181 = vsub.f32 %v3049, %v3126
        %v3182 = vsub.f32 %v3050, %v3128
        %v3183 = vsub.f32 %v3051, %v3130
        %v3184 = vsub.f32 %v3052, %v3132
        %v3185 = vsub.f32 %v3053, %v3134
        %v3186 = vsub.f32 %v3054, %v3136
        %v3187 = vsub.f32 %v3055, %v3138
        %v3188 = vsub.f32 %v3056, %v3140
        %v3189 = vsub.f32 %v3057, %v3142
        %v3190 = vsub.f32 %v3058, %v3144
        %v3191 = vsub.f32 %v3059, %v3146
        %v3192 = vsub.f32 %v3060, %v3148
        %v3193 = vmul.f32 %v3149, 1.442695
        %v3194 = vpow.pop %v3193
        %v3195 = vmul.f32 %v3150, 1.442695
        %v3196 = vpow.pop %v3195
        %v3197 = vmul.f32 %v3151, 1.442695
        %v3198 = vpow.pop %v3197
        %v3199 = vmul.f32 %v3152, 1.442695
        %v3200 = vpow.pop %v3199
        %v3201 = vmul.f32 %v3153, 1.442695
        %v3202 = vpow.pop %v3201
        %v3203 = vmul.f32 %v3154, 1.442695
        %v3204 = vpow.pop %v3203
        %v3205 = vmul.f32 %v3155, 1.442695
        %v3206 = vpow.pop %v3205
        %v3207 = vmul.f32 %v3156, 1.442695
        %v3208 = vpow.pop %v3207
        %v3209 = vmul.f32 %v3157, 1.442695
        %v3210 = vpow.pop %v3209
        %v3211 = vmul.f32 %v3158, 1.442695
        %v3212 = vpow.pop %v3211
        %v3213 = vmul.f32 %v3159, 1.442695
        %v3214 = vpow.pop %v3213
        %v3215 = vmul.f32 %v3160, 1.442695
        %v3216 = vpow.pop %v3215
        %v3217 = vmul.f32 %v3161, 1.442695
        %v3218 = vpow.pop %v3217
        %v3219 = vmul.f32 %v3162, 1.442695
        %v3220 = vpow.pop %v3219
        %v3221 = vmul.f32 %v3163, 1.442695
        %v3222 = vpow.pop %v3221
        %v3223 = vmul.f32 %v3164, 1.442695
        %v3224 = vpow.pop %v3223
        %v3225 = vmul.f32 %v3165, 1.442695
        %v3226 = vpow.pop %v3225
        %v3227 = vmul.f32 %v3166, 1.442695
        %v3228 = vpow.pop %v3227
        %v3229 = vmul.f32 %v3167, 1.442695
        %v3230 = vpow.pop %v3229
        %v3231 = vmul.f32 %v3168, 1.442695
        %v3232 = vpow.pop %v3231
        %v3233 = vmul.f32 %v3169, 1.442695
        %v3234 = vpow.pop %v3233
        %v3235 = vmul.f32 %v3170, 1.442695
        %v3236 = vpow.pop %v3235
        %v3237 = vmul.f32 %v3171, 1.442695
        %v3238 = vpow.pop %v3237
        %v3239 = vmul.f32 %v3172, 1.442695
        %v3240 = vpow.pop %v3239
        %v3241 = vmul.f32 %v3173, 1.442695
        %v3242 = vpow.pop %v3241
        %v3243 = vmul.f32 %v3174, 1.442695
        %v3244 = vpow.pop %v3243
        %v3245 = vmul.f32 %v3175, 1.442695
        %v3246 = vpow.pop %v3245
        %v3247 = vmul.f32 %v3176, 1.442695
        %v3248 = vpow.pop %v3247
        %v3249 = vmul.f32 %v3177, 1.442695
        %v3250 = vpow.pop %v3249
        %v3251 = vmul.f32 %v3178, 1.442695
        %v3252 = vpow.pop %v3251
        %v3253 = vmul.f32 %v3179, 1.442695
        %v3254 = vpow.pop %v3253
        %v3255 = vmul.f32 %v3180, 1.442695
        %v3256 = vpow.pop %v3255
        %v3257 = vmul.f32 %v3181, 1.442695
        %v3258 = vpow.pop %v3257
        %v3259 = vmul.f32 %v3182, 1.442695
        %v3260 = vpow.pop %v3259
        %v3261 = vmul.f32 %v3183, 1.442695
        %v3262 = vpow.pop %v3261
        %v3263 = vmul.f32 %v3184, 1.442695
        %v3264 = vpow.pop %v3263
        %v3265 = vmul.f32 %v3185, 1.442695
        %v3266 = vpow.pop %v3265
        %v3267 = vmul.f32 %v3186, 1.442695
        %v3268 = vpow.pop %v3267
        %v3269 = vmul.f32 %v3187, 1.442695
        %v3270 = vpow.pop %v3269
        %v3271 = vmul.f32 %v3188, 1.442695
        %v3272 = vpow.pop %v3271
        %v3273 = vmul.f32 %v3189, 1.442695
        %v3274 = vpow.pop %v3273
        %v3275 = vmul.f32 %v3190, 1.442695
        %v3276 = vpow.pop %v3275
        %v3277 = vmul.f32 %v3191, 1.442695
        %v3278 = vpow.pop %v3277
        %v3279 = vmul.f32 %v3192, 1.442695
        %v3280 = vpow.pop %v3279
        %3281 = vadd.xlane.f32.xlu0 %v3194
        %v3282 = vpop.xlane.xlu0 %3281
        %3283 = vadd.xlane.f32.xlu0 %v3196
        %v3284 = vpop.xlane.xlu0 %3283
        %3285 = vadd.xlane.f32.xlu0 %v3198
        %v3286 = vpop.xlane.xlu0 %3285
        %3287 = vadd.xlane.f32.xlu0 %v3200
        %v3288 = vpop.xlane.xlu0 %3287
        %3289 = vadd.xlane.f32.xlu0 %v3202
        %v3290 = vpop.xlane.xlu0 %3289
        %3291 = vadd.xlane.f32.xlu0 %v3204
        %v3292 = vpop.xlane.xlu0 %3291
        %3293 = vadd.xlane.f32.xlu0 %v3206
        %v3294 = vpop.xlane.xlu0 %3293
        %3295 = vadd.xlane.f32.xlu0 %v3208
        %v3296 = vpop.xlane.xlu0 %3295
        %3297 = vadd.xlane.f32.xlu0 %v3210
        %v3298 = vpop.xlane.xlu0 %3297
        %3299 = vadd.xlane.f32.xlu0 %v3212
        %v3300 = vpop.xlane.xlu0 %3299
        %3301 = vadd.xlane.f32.xlu0 %v3214
        %v3302 = vpop.xlane.xlu0 %3301
        %3303 = vadd.xlane.f32.xlu0 %v3216
        %v3304 = vpop.xlane.xlu0 %3303
        %3305 = vadd.xlane.f32.xlu0 %v3218
        %v3306 = vpop.xlane.xlu0 %3305
        %3307 = vadd.xlane.f32.xlu0 %v3220
        %v3308 = vpop.xlane.xlu0 %3307
        %3309 = vadd.xlane.f32.xlu0 %v3222
        %v3310 = vpop.xlane.xlu0 %3309
        %3311 = vadd.xlane.f32.xlu0 %v3224
        %v3312 = vpop.xlane.xlu0 %3311
        %3313 = vadd.xlane.f32.xlu0 %v3226
        %v3314 = vpop.xlane.xlu0 %3313
        %3315 = vadd.xlane.f32.xlu0 %v3228
        %v3316 = vpop.xlane.xlu0 %3315
        %3317 = vadd.xlane.f32.xlu0 %v3230
        %v3318 = vpop.xlane.xlu0 %3317
        %3319 = vadd.xlane.f32.xlu0 %v3232
        %v3320 = vpop.xlane.xlu0 %3319
        %3321 = vadd.xlane.f32.xlu0 %v3234
        %v3322 = vpop.xlane.xlu0 %3321
        %3323 = vadd.xlane.f32.xlu0 %v3236
        %v3324 = vpop.xlane.xlu0 %3323
        %3325 = vadd.xlane.f32.xlu0 %v3238
        %v3326 = vpop.xlane.xlu0 %3325
        %3327 = vadd.xlane.f32.xlu0 %v3240
        %v3328 = vpop.xlane.xlu0 %3327
        %3329 = vadd.xlane.f32.xlu0 %v3242
        %v3330 = vpop.xlane.xlu0 %3329
        %3331 = vadd.xlane.f32.xlu0 %v3244
        %v3332 = vpop.xlane.xlu0 %3331
        %3333 = vadd.xlane.f32.xlu0 %v3246
        %v3334 = vpop.xlane.xlu0 %3333
        %3335 = vadd.xlane.f32.xlu0 %v3248
        %v3336 = vpop.xlane.xlu0 %3335
        %3337 = vadd.xlane.f32.xlu0 %v3250
        %v3338 = vpop.xlane.xlu0 %3337
        %3339 = vadd.xlane.f32.xlu0 %v3252
        %v3340 = vpop.xlane.xlu0 %3339
        %3341 = vadd.xlane.f32.xlu0 %v3254
        %v3342 = vpop.xlane.xlu0 %3341
        %3343 = vadd.xlane.f32.xlu0 %v3256
        %v3344 = vpop.xlane.xlu0 %3343
        %3345 = vadd.xlane.f32.xlu0 %v3258
        %v3346 = vpop.xlane.xlu0 %3345
        %3347 = vadd.xlane.f32.xlu0 %v3260
        %v3348 = vpop.xlane.xlu0 %3347
        %3349 = vadd.xlane.f32.xlu0 %v3262
        %v3350 = vpop.xlane.xlu0 %3349
        %3351 = vadd.xlane.f32.xlu0 %v3264
        %v3352 = vpop.xlane.xlu0 %3351
        %3353 = vadd.xlane.f32.xlu0 %v3266
        %v3354 = vpop.xlane.xlu0 %3353
        %3355 = vadd.xlane.f32.xlu0 %v3268
        %v3356 = vpop.xlane.xlu0 %3355
        %3357 = vadd.xlane.f32.xlu0 %v3270
        %v3358 = vpop.xlane.xlu0 %3357
        %3359 = vadd.xlane.f32.xlu0 %v3272
        %v3360 = vpop.xlane.xlu0 %3359
        %3361 = vadd.xlane.f32.xlu0 %v3274
        %v3362 = vpop.xlane.xlu0 %3361
        %3363 = vadd.xlane.f32.xlu0 %v3276
        %v3364 = vpop.xlane.xlu0 %3363
        %3365 = vadd.xlane.f32.xlu0 %v3278
        %v3366 = vpop.xlane.xlu0 %3365
        %3367 = vadd.xlane.f32.xlu0 %v3280
        %v3368 = vpop.xlane.xlu0 %3367
        %v3369 = vlog2.pop %v3282
        %v3370 = vmul.f32 %v3369, 0.6931472
        %v3371 = vlog2.pop %v3284
        %v3372 = vmul.f32 %v3371, 0.6931472
        %v3373 = vlog2.pop %v3286
        %v3374 = vmul.f32 %v3373, 0.6931472
        %v3375 = vlog2.pop %v3288
        %v3376 = vmul.f32 %v3375, 0.6931472
        %v3377 = vlog2.pop %v3290
        %v3378 = vmul.f32 %v3377, 0.6931472
        %v3379 = vlog2.pop %v3292
        %v3380 = vmul.f32 %v3379, 0.6931472
        %v3381 = vlog2.pop %v3294
        %v3382 = vmul.f32 %v3381, 0.6931472
        %v3383 = vlog2.pop %v3296
        %v3384 = vmul.f32 %v3383, 0.6931472
        %v3385 = vlog2.pop %v3298
        %v3386 = vmul.f32 %v3385, 0.6931472
        %v3387 = vlog2.pop %v3300
        %v3388 = vmul.f32 %v3387, 0.6931472
        %v3389 = vlog2.pop %v3302
        %v3390 = vmul.f32 %v3389, 0.6931472
        %v3391 = vlog2.pop %v3304
        %v3392 = vmul.f32 %v3391, 0.6931472
        %v3393 = vlog2.pop %v3306
        %v3394 = vmul.f32 %v3393, 0.6931472
        %v3395 = vlog2.pop %v3308
        %v3396 = vmul.f32 %v3395, 0.6931472
        %v3397 = vlog2.pop %v3310
        %v3398 = vmul.f32 %v3397, 0.6931472
        %v3399 = vlog2.pop %v3312
        %v3400 = vmul.f32 %v3399, 0.6931472
        %v3401 = vlog2.pop %v3314
        %v3402 = vmul.f32 %v3401, 0.6931472
        %v3403 = vlog2.pop %v3316
        %v3404 = vmul.f32 %v3403, 0.6931472
        %v3405 = vlog2.pop %v3318
        %v3406 = vmul.f32 %v3405, 0.6931472
        %v3407 = vlog2.pop %v3320
        %v3408 = vmul.f32 %v3407, 0.6931472
        %v3409 = vlog2.pop %v3322
        %v3410 = vmul.f32 %v3409, 0.6931472
        %v3411 = vlog2.pop %v3324
        %v3412 = vmul.f32 %v3411, 0.6931472
        %v3413 = vlog2.pop %v3326
        %v3414 = vmul.f32 %v3413, 0.6931472
        %v3415 = vlog2.pop %v3328
        %v3416 = vmul.f32 %v3415, 0.6931472
        %v3417 = vlog2.pop %v3330
        %v3418 = vmul.f32 %v3417, 0.6931472
        %v3419 = vlog2.pop %v3332
        %v3420 = vmul.f32 %v3419, 0.6931472
        %v3421 = vlog2.pop %v3334
        %v3422 = vmul.f32 %v3421, 0.6931472
        %v3423 = vlog2.pop %v3336
        %v3424 = vmul.f32 %v3423, 0.6931472
        %v3425 = vlog2.pop %v3338
        %v3426 = vmul.f32 %v3425, 0.6931472
        %v3427 = vlog2.pop %v3340
        %v3428 = vmul.f32 %v3427, 0.6931472
        %v3429 = vlog2.pop %v3342
        %v3430 = vmul.f32 %v3429, 0.6931472
        %v3431 = vlog2.pop %v3344
        %v3432 = vmul.f32 %v3431, 0.6931472
        %v3433 = vlog2.pop %v3346
        %v3434 = vmul.f32 %v3433, 0.6931472
        %v3435 = vlog2.pop %v3348
        %v3436 = vmul.f32 %v3435, 0.6931472
        %v3437 = vlog2.pop %v3350
        %v3438 = vmul.f32 %v3437, 0.6931472
        %v3439 = vlog2.pop %v3352
        %v3440 = vmul.f32 %v3439, 0.6931472
        %v3441 = vlog2.pop %v3354
        %v3442 = vmul.f32 %v3441, 0.6931472
        %v3443 = vlog2.pop %v3356
        %v3444 = vmul.f32 %v3443, 0.6931472
        %v3445 = vlog2.pop %v3358
        %v3446 = vmul.f32 %v3445, 0.6931472
        %v3447 = vlog2.pop %v3360
        %v3448 = vmul.f32 %v3447, 0.6931472
        %v3449 = vlog2.pop %v3362
        %v3450 = vmul.f32 %v3449, 0.6931472
        %v3451 = vlog2.pop %v3364
        %v3452 = vmul.f32 %v3451, 0.6931472
        %v3453 = vlog2.pop %v3366
        %v3454 = vmul.f32 %v3453, 0.6931472
        %v3455 = vlog2.pop %v3368
        %v3456 = vmul.f32 %v3455, 0.6931472
        %v3457 = vadd.f32 %v3370, %v3062
        %v3458 = vadd.f32 %v3372, %v3064
        %v3459 = vadd.f32 %v3374, %v3066
        %v3460 = vadd.f32 %v3376, %v3068
        %v3461 = vadd.f32 %v3378, %v3070
        %v3462 = vadd.f32 %v3380, %v3072
        %v3463 = vadd.f32 %v3382, %v3074
        %v3464 = vadd.f32 %v3384, %v3076
        %v3465 = vadd.f32 %v3386, %v3078
        %v3466 = vadd.f32 %v3388, %v3080
        %v3467 = vadd.f32 %v3390, %v3082
        %v3468 = vadd.f32 %v3392, %v3084
        %v3469 = vadd.f32 %v3394, %v3086
        %v3470 = vadd.f32 %v3396, %v3088
        %v3471 = vadd.f32 %v3398, %v3090
        %v3472 = vadd.f32 %v3400, %v3092
        %v3473 = vadd.f32 %v3402, %v3094
        %v3474 = vadd.f32 %v3404, %v3096
        %v3475 = vadd.f32 %v3406, %v3098
        %v3476 = vadd.f32 %v3408, %v3100
        %v3477 = vadd.f32 %v3410, %v3102
        %v3478 = vadd.f32 %v3412, %v3104
        %v3479 = vadd.f32 %v3414, %v3106
        %v3480 = vadd.f32 %v3416, %v3108
        %v3481 = vadd.f32 %v3418, %v3110
        %v3482 = vadd.f32 %v3420, %v3112
        %v3483 = vadd.f32 %v3422, %v3114
        %v3484 = vadd.f32 %v3424, %v3116
        %v3485 = vadd.f32 %v3426, %v3118
        %v3486 = vadd.f32 %v3428, %v3120
        %v3487 = vadd.f32 %v3430, %v3122
        %v3488 = vadd.f32 %v3432, %v3124
        %v3489 = vadd.f32 %v3434, %v3126
        %v3490 = vadd.f32 %v3436, %v3128
        %v3491 = vadd.f32 %v3438, %v3130
        %v3492 = vadd.f32 %v3440, %v3132
        %v3493 = vadd.f32 %v3442, %v3134
        %v3494 = vadd.f32 %v3444, %v3136
        %v3495 = vadd.f32 %v3446, %v3138
        %v3496 = vadd.f32 %v3448, %v3140
        %v3497 = vadd.f32 %v3450, %v3142
        %v3498 = vadd.f32 %v3452, %v3144
        %v3499 = vadd.f32 %v3454, %v3146
        %v3500 = vadd.f32 %v3456, %v3148
        %v3501 = vsub.f32 %v3017, %v3457
        %v3502 = vsub.f32 %v3018, %v3458
        %v3503 = vsub.f32 %v3019, %v3459
        %v3504 = vsub.f32 %v3020, %v3460
        %v3505 = vsub.f32 %v3021, %v3461
        %v3506 = vsub.f32 %v3022, %v3462
        %v3507 = vsub.f32 %v3023, %v3463
        %v3508 = vsub.f32 %v3024, %v3464
        %v3509 = vsub.f32 %v3025, %v3465
        %v3510 = vsub.f32 %v3026, %v3466
        %v3511 = vsub.f32 %v3027, %v3467
        %v3512 = vsub.f32 %v3028, %v3468
        %v3513 = vsub.f32 %v3029, %v3469
        %v3514 = vsub.f32 %v3030, %v3470
        %v3515 = vsub.f32 %v3031, %v3471
        %v3516 = vsub.f32 %v3032, %v3472
        %v3517 = vsub.f32 %v3033, %v3473
        %v3518 = vsub.f32 %v3034, %v3474
        %v3519 = vsub.f32 %v3035, %v3475
        %v3520 = vsub.f32 %v3036, %v3476
        %v3521 = vsub.f32 %v3037, %v3477
        %v3522 = vsub.f32 %v3038, %v3478
        %v3523 = vsub.f32 %v3039, %v3479
        %v3524 = vsub.f32 %v3040, %v3480
        %v3525 = vsub.f32 %v3041, %v3481
        %v3526 = vsub.f32 %v3042, %v3482
        %v3527 = vsub.f32 %v3043, %v3483
        %v3528 = vsub.f32 %v3044, %v3484
        %v3529 = vsub.f32 %v3045, %v3485
        %v3530 = vsub.f32 %v3046, %v3486
        %v3531 = vsub.f32 %v3047, %v3487
        %v3532 = vsub.f32 %v3048, %v3488
        %v3533 = vsub.f32 %v3049, %v3489
        %v3534 = vsub.f32 %v3050, %v3490
        %v3535 = vsub.f32 %v3051, %v3491
        %v3536 = vsub.f32 %v3052, %v3492
        %v3537 = vsub.f32 %v3053, %v3493
        %v3538 = vsub.f32 %v3054, %v3494
        %v3539 = vsub.f32 %v3055, %v3495
        %v3540 = vsub.f32 %v3056, %v3496
        %v3541 = vsub.f32 %v3057, %v3497
        %v3542 = vsub.f32 %v3058, %v3498
        %v3543 = vsub.f32 %v3059, %v3499
        %v3544 = vsub.f32 %v3060, %v3500
        %3545 = vst [vmem:[%s257] sm:$0xff] %v3501
        %3546 = vst [vmem:[%s257 + $0x8] sm:$0xff] %v3502
        %3547 = vst [vmem:[%s257 + $0x10] sm:$0xff] %v3503
        %3548 = vst [vmem:[%s257 + $0x18] sm:$0xff] %v3504
        %3549 = vst [vmem:[%s257 + $0x20] sm:$0xff] %v3505
        %3550 = vst [vmem:[%s257 + $0x28] sm:$0xff] %v3506
        %3551 = vst [vmem:[%s257 + $0x30] sm:$0xff] %v3507
        %3552 = vst [vmem:[%s257 + $0x38] sm:$0xff] %v3508
        %3553 = vst [vmem:[%s257 + $0x40] sm:$0xff] %v3509
        %3554 = vst [vmem:[%s257 + $0x48] sm:$0xff] %v3510
        %3555 = vst [vmem:[%s257 + $0x50] sm:$0xff] %v3511
        %3556 = vst [vmem:[%s257 + $0x58] sm:$0xff] %v3512
        %3557 = vst [vmem:[%s257 + $0x60] sm:$0xff] %v3513
        %3558 = vst [vmem:[%s257 + $0x68] sm:$0xff] %v3514
        %3559 = vst [vmem:[%s257 + $0x70] sm:$0xff] %v3515
        %3560 = vst [vmem:[%s257 + $0x78] sm:$0xff] %v3516
        %3561 = vst [vmem:[%s257 + $0x80] sm:$0xff] %v3517
        %3562 = vst [vmem:[%s257 + $0x88] sm:$0xff] %v3518
        %3563 = vst [vmem:[%s257 + $0x90] sm:$0xff] %v3519
        %3564 = vst [vmem:[%s257 + $0x98] sm:$0xff] %v3520
        %3565 = vst [vmem:[%s257 + $0xa0] sm:$0xff] %v3521
        %3566 = vst [vmem:[%s257 + $0xa8] sm:$0xff] %v3522
        %3567 = vst [vmem:[%s257 + $0xb0] sm:$0xff] %v3523
        %3568 = vst [vmem:[%s257 + $0xb8] sm:$0xff] %v3524
        %3569 = vst [vmem:[%s257 + $0xc0] sm:$0xff] %v3525
        %3570 = vst [vmem:[%s257 + $0xc8] sm:$0xff] %v3526
        %3571 = vst [vmem:[%s257 + $0xd0] sm:$0xff] %v3527
        %3572 = vst [vmem:[%s257 + $0xd8] sm:$0xff] %v3528
        %3573 = vst [vmem:[%s257 + $0xe0] sm:$0xff] %v3529
        %3574 = vst [vmem:[%s257 + $0xe8] sm:$0xff] %v3530
        %3575 = vst [vmem:[%s257 + $0xf0] sm:$0xff] %v3531
        %3576 = vst [vmem:[%s257 + $0xf8] sm:$0xff] %v3532
        %3577 = vst [vmem:[%s257 + $0x100] sm:$0xff] %v3533
        %3578 = vst [vmem:[%s257 + $0x108] sm:$0xff] %v3534
        %3579 = vst [vmem:[%s257 + $0x110] sm:$0xff] %v3535
        %3580 = vst [vmem:[%s257 + $0x118] sm:$0xff] %v3536
        %3581 = vst [vmem:[%s257 + $0x120] sm:$0xff] %v3537
        %3582 = vst [vmem:[%s257 + $0x128] sm:$0xff] %v3538
        %3583 = vst [vmem:[%s257 + $0x130] sm:$0xff] %v3539
        %3584 = vst [vmem:[%s257 + $0x138] sm:$0xff] %v3540
        %3585 = vst [vmem:[%s257 + $0x140] sm:$0xff] %v3541
        %3586 = vst [vmem:[%s257 + $0x148] sm:$0xff] %v3542
        %3587 = vst [vmem:[%s257 + $0x150] sm:$0xff] %v3543
        %3588 = vst [vmem:[%s257 + $0x158] sm:$0xff] %v3544
        %s3589 = sand.u32 %s120, 1
        %s3590 = scalar_lea.sflag [#allocation5], %s3589
        %s3591 = sand.u32 %s120, 1
        %s3592 = smul.addr %s3591, 352
        %s3593 = scalar_lea.vmem [#allocation11], %s3592
        // Predicated region
        $region53: #{tpu_custom_call.1} parent=35 // pred_check
          %p3594 = pneg %p130
        $region54: #{tpu_custom_call.1} parent=35 // pred_check_branch
          %3596 = sbr.rel (%p3594) target = $region56
        $region55: #{tpu_custom_call.1} parent=35 // pred_region
          %s3597 = smul.u32 44, %s23
          %s3599 = ssub.s32 5632, 5632
          %3600 = vsyncadd %s3590, %s3599
          %s3601 = smul.addr %s3597, 128
          %s3602 = scalar_lea.hbm %s4, %s3601
          %s3603 = sshll.u32 %s3593, 4
          %s3604 = int_to_ptr.vmem [resolvable:$true] %s3603
          %3609 = dma.vmem_to_hbm [thread:$0]  %s3604, 5632, %s3602, %s3590, 128, 128, 8
        $region56: #{tpu_custom_call.1} parent=35 // pred_fallthru
          _
      $region36: #{tpu_custom_call.1} parent=5 // pred_fallthru
        _
      %p3610 = scmp.le.s32.totalorder 2, %s18
      // Predicated region
      $region57: #{tpu_custom_call.1} parent=5 // pred_check
        %p3611 = pneg %p3610
      $region58: #{tpu_custom_call.1} parent=5 // pred_check_branch
        %3613 = sbr.rel (%p3611) target = $region60
      $region59: #{tpu_custom_call.1} parent=5 // pred_region
        %s3614 = ssub.s32 %s18, 2
        // Predicated region
        $region61: #{tpu_custom_call.1} parent=59 // pred_check
          %p3615 = pneg %p136
        $region62: #{tpu_custom_call.1} parent=59 // pred_check_branch
          %3617 = sbr.rel (%p3615) target = $region64
        $region63: #{tpu_custom_call.1} parent=59 // pred_region
          %s3618 = sand.u32 %s121, 1
          %s3619 = scalar_lea.sflag [#allocation5], %s3618
          %s3620 = sand.u32 %s121, 1
          %s3621 = smul.addr %s3620, 352
          %s3622 = scalar_lea.vmem [#allocation11], %s3621
          %3623 = dma.done %s3619, 5632
        $region64: #{tpu_custom_call.1} parent=59 // pred_fallthru
          _
      $region60: #{tpu_custom_call.1} parent=5 // pred_fallthru
        _
    $region6: #{tpu_custom_call.1} parent=1 // loop_footer
      %s22 = sadd.s32 1, %s18
    $region7: #{tpu_custom_call.1} parent=1 // loop_footer_branch
      %17 = sbr.rel target = $region3
    $region8: #{tpu_custom_call.1} parent=1 // loop_exit
      _
    %3624 = vsyncpa [#allocation4], 1
    %s3625 = scalar_lea.sflag [#allocation4], 1
    %3626 = vsyncpa %s3625, 1
    %3627 = vsyncpa [#allocation7], 1
    %3628 = vsyncpa [#allocation10], 1
    %s3629 = scalar_lea.sflag [#allocation10], 1
    %3630 = vsyncpa %s3629, 1
    %3631 = vsyncpa [#allocation5], 1
    %s3632 = scalar_lea.sflag [#allocation5], 1
    %3633 = vsyncpa %s3632, 1

</llo_original>
